<compile_context>
chip_gen: v6e
topology: v6e:2x2x1
jax: 0.10.0
libtpu: 0.0.40
codegen_flags: <defaults>
</compile_context>

<pallas_src>
import functools

import jax
import jax.numpy as jnp
from jax.experimental import pallas as pl
from jax.experimental.pallas import tpu as pltpu


def odta_kernel(x_ref, w_ref, b_ref, gamma_ref, beta_ref, o_ref, attn_ref,
                *, n, t, heads, eps):
    NT, D = x_ref.shape                      # (N*T, D) slab for one b
    hd = D // heads
    scale = 1.0 / (hd ** 0.5)

    x = x_ref[...]                           # (NT, D), already f32 — no astype

    # Fused QKV projection: one MXU pass, 3*D output lanes, f32 accumulation.
    qkv = jnp.dot(x, w_ref[...], preferred_element_type=jnp.float32) + b_ref[...]
    # Static lane slices + sublane-split reshapes (T == 8 == sublane tile).
    q = qkv[:, 0 * D:1 * D].reshape(n, t, D)     # (N, T, D)
    k = qkv[:, 1 * D:2 * D].reshape(n, t, D)
    v = qkv[:, 2 * D:3 * D].reshape(n, t, D)

    # Per-head attention, batched over N (static unrolled loop over heads=4).
    for h in range(heads):
        lo = h * hd
        qh = q[:, :, lo:lo + hd]                 # (N, T, hd)
        kh = k[:, :, lo:lo + hd]
        vh = v[:, :, lo:lo + hd]
        s = jnp.einsum('nqd,nkd->nqk', qh, kh,
                       preferred_element_type=jnp.float32) * scale   # (N, T, T)
        p = jnp.exp(s - jnp.max(s, axis=-1, keepdims=True))
        p = p / jnp.sum(p, axis=-1, keepdims=True)   # exact divide (tolerance)
        oh = jnp.einsum('nqk,nkd->nqd', p, vh,
                        preferred_element_type=jnp.float32)          # (N, T, hd)
        # Write this head's output into its static lane slice of the 3-D scratch.
        attn_ref[:, :, lo:lo + hd] = oh

    # Dropout is identity at inference time.  Residual + LayerNorm over D.
    y = attn_ref[...].reshape(NT, D) + x
    mu = jnp.mean(y, axis=-1, keepdims=True)
    var = jnp.mean((y - mu) ** 2, axis=-1, keepdims=True)
    yn = (y - mu) * jax.lax.rsqrt(var + eps)
    o_ref[...] = (yn * gamma_ref[...] + beta_ref[...]).astype(o_ref.dtype)


def odta_forward(x, params, heads, eps=1e-5):
    B, N, T, D = x.shape
    wq, bq, wk, bk, wv, bv, gamma, beta = params

    # Fuse QKV weights/biases in the wrapper (one-time, outside the kernel).
    w_qkv = jnp.concatenate([wq, wk, wv], axis=1)    # (D, 3D)
    b_qkv = jnp.concatenate([bq, bk, bv], axis=1)    # (1, 3D)

    # Free row-major reshape so each grid step sees a single (N*T, D) slab.
    x2 = x.reshape(B, N * T, D)

    kernel = functools.partial(odta_kernel, n=N, t=T, heads=heads, eps=eps)
    rep = lambda shape: pl.BlockSpec(shape, lambda b: (0, 0))

    out = pl.pallas_call(
        kernel,
        out_shape=jax.ShapeDtypeStruct((B, N * T, D), x.dtype),
        grid=(B,),
        in_specs=[pl.BlockSpec((None, N * T, D), lambda b: (b, 0, 0)),
                  rep((D, 3 * D)),
                  rep((1, 3 * D)),
                  rep((1, D)),
                  rep((1, D))],
        out_specs=pl.BlockSpec((None, N * T, D), lambda b: (b, 0, 0)),
        scratch_shapes=[pltpu.VMEM((N, T, D), jnp.float32)],
        compiler_params=pltpu.CompilerParams(
            dimension_semantics=("parallel",)),
    )(x2, w_qkv, b_qkv, gamma, beta)
    return out.reshape(B, N, T, D)


def odta_reference(x, params, heads, eps=1e-5):
    """Pure-JAX reference mirroring the PyTorch forward (eval mode)."""
    wq, bq, wk, bk, wv, bv, gamma, beta = params
    B, N, T, D = x.shape
    hd = D // heads
    q = x @ wq + bq
    k = x @ wk + bk
    v = x @ wv + bv
    split = lambda t_: t_.reshape(B, N, T, heads, hd).transpose(0, 1, 3, 2, 4)
    q, k, v = split(q), split(k), split(v)
    a = jnp.einsum('bnhqd,bnhkd->bnhqk', q, k) / hd ** 0.5
    a = jax.nn.softmax(a, axis=-1)
    h = jnp.einsum('bnhqk,bnhkd->bnhqd', a, v)
    h = h.transpose(0, 1, 3, 2, 4).reshape(B, N, T, D)
    y = h + x
    mu = y.mean(-1, keepdims=True)
    var = ((y - mu) ** 2).mean(-1, keepdims=True)
    return (y - mu) / jnp.sqrt(var + eps) * gamma + beta


if __name__ == "__main__":
    # Small shapes consistent with the module: B=2, N=4, T=in_seq_len=8, D=d_model=32, heads=4.
    B, N, T, D, heads = 2, 4, 8, 32, 4

    key = jax.random.PRNGKey(0)
    kx, kq, kk, kv, kbq, kbk, kbv = jax.random.split(key, 7)
    x = jax.random.normal(kx, (B, N, T, D), dtype=jnp.float32)

    # Deterministic parameter init (weights stored as (in, out): y = x @ W + b,
    # equivalent to PyTorch's x @ weight.T with weight = W.T).
    s = 1.0 / (D ** 0.5)
    wq = jax.random.uniform(kq, (D, D), jnp.float32, -s, s)
    wk = jax.random.uniform(kk, (D, D), jnp.float32, -s, s)
    wv = jax.random.uniform(kv, (D, D), jnp.float32, -s, s)
    bq = jax.random.uniform(kbq, (1, D), jnp.float32, -s, s)
    bk = jax.random.uniform(kbk, (1, D), jnp.float32, -s, s)
    bv = jax.random.uniform(kbv, (1, D), jnp.float32, -s, s)
    gamma = jnp.ones((1, D), jnp.float32)   # LayerNorm weight
    beta = jnp.zeros((1, D), jnp.float32)   # LayerNorm bias
    params = (wq, bq, wk, bk, wv, bv, gamma, beta)

    out = odta_forward(x, params, heads)
    out = jax.block_until_ready(out)

    ref = odta_reference(x, params, heads)
    assert out.shape == (B, N, T, D)
    assert jnp.allclose(out, ref, atol=1e-4, rtol=1e-4), "mismatch vs JAX reference"

    print("KERNEL_OK")
</pallas_src>

<mosaic_0001>
module attributes {stable_mosaic.version = 11 : i64} {
  func.func @odta_kernel(%arg0: i32, %arg1: memref<1x32x32xf32, #tpu.memory_space<vmem>>, %arg2: memref<32x96xf32, #tpu.memory_space<vmem>>, %arg3: memref<1x96xf32, #tpu.memory_space<vmem>>, %arg4: memref<1x32xf32, #tpu.memory_space<vmem>>, %arg5: memref<1x32xf32, #tpu.memory_space<vmem>>, %arg6: memref<1x32x32xf32, #tpu.memory_space<vmem>>, %arg7: memref<4x8x32xf32, #tpu.memory_space<vmem>>) attributes {dimension_semantics = [#tpu.dimension_semantics<parallel>], iteration_bounds = array<i64: 2>, scalar_prefetch = 0 : i64, scratch_operands = 1 : i64, tpu.core_type = #tpu.core_type<tc>, window_params = [{transform_indices = @transform_0, window_bounds = array<i64: 1, 32, 32>}, {pipeline_mode = #tpu.pipeline_mode<synchronous>, transform_indices = @transform_1, window_bounds = array<i64: 32, 96>}, {pipeline_mode = #tpu.pipeline_mode<synchronous>, transform_indices = @transform_2, window_bounds = array<i64: 1, 96>}, {pipeline_mode = #tpu.pipeline_mode<synchronous>, transform_indices = @transform_3, window_bounds = array<i64: 1, 32>}, {pipeline_mode = #tpu.pipeline_mode<synchronous>, transform_indices = @transform_4, window_bounds = array<i64: 1, 32>}, {transform_indices = @transform_5, window_bounds = array<i64: 1, 32, 32>}]} {
    %c0 = arith.constant 0 : index
    %c0_0 = arith.constant 0 : index
    %c0_1 = arith.constant 0 : index
    %0 = vector.load %arg1[%c0, %c0_0, %c0_1] : memref<1x32x32xf32, #tpu.memory_space<vmem>>, vector<1x32x32xf32>
    %1 = vector.shape_cast %0 : vector<1x32x32xf32> to vector<32x32xf32>
    %c0_2 = arith.constant 0 : index
    %c0_3 = arith.constant 0 : index
    %2 = vector.load %arg2[%c0_2, %c0_3] : memref<32x96xf32, #tpu.memory_space<vmem>>, vector<32x96xf32>
    %cst = arith.constant dense<0.000000e+00> : vector<32x96xf32>
    %3 = tpu.matmul %1, %2, %cst {dimension_numbers = #tpu.dot_dimension_numbers<[1], [0], [0], [1], [0, 0, 1, 1], [], []>} : vector<32x32xf32>, vector<32x96xf32>, vector<32x96xf32> -> vector<32x96xf32>
    %c0_4 = arith.constant 0 : index
    %c0_5 = arith.constant 0 : index
    %4 = vector.load %arg3[%c0_4, %c0_5] : memref<1x96xf32, #tpu.memory_space<vmem>>, vector<1x96xf32>
    %5 = vector.broadcast %4 : vector<1x96xf32> to vector<32x96xf32>
    %6 = arith.addf %3, %5 : vector<32x96xf32>
    %7 = vector.extract_strided_slice %6 {offsets = [0, 0], sizes = [32, 32], strides = [1, 1]} : vector<32x96xf32> to vector<32x32xf32>
    %8 = vector.shape_cast %7 : vector<32x32xf32> to vector<4x8x32xf32>
    %9 = vector.extract_strided_slice %6 {offsets = [0, 32], sizes = [32, 32], strides = [1, 1]} : vector<32x96xf32> to vector<32x32xf32>
    %10 = vector.shape_cast %9 : vector<32x32xf32> to vector<4x8x32xf32>
    %11 = vector.extract_strided_slice %6 {offsets = [0, 64], sizes = [32, 32], strides = [1, 1]} : vector<32x96xf32> to vector<32x32xf32>
    %12 = vector.shape_cast %11 : vector<32x32xf32> to vector<4x8x32xf32>
    %13 = vector.extract_strided_slice %8 {offsets = [0, 0, 0], sizes = [4, 8, 8], strides = [1, 1, 1]} : vector<4x8x32xf32> to vector<4x8x8xf32>
    %14 = vector.extract_strided_slice %10 {offsets = [0, 0, 0], sizes = [4, 8, 8], strides = [1, 1, 1]} : vector<4x8x32xf32> to vector<4x8x8xf32>
    %15 = vector.extract_strided_slice %12 {offsets = [0, 0, 0], sizes = [4, 8, 8], strides = [1, 1, 1]} : vector<4x8x32xf32> to vector<4x8x8xf32>
    "tpu.trace_start"() <{level = 10 : i32, message = "nqd,nkd->nqk"}> : () -> ()
    %cst_6 = arith.constant dense<0.000000e+00> : vector<4x8x8xf32>
    %16 = tpu.matmul %13, %14, %cst_6 {dimension_numbers = #tpu.dot_dimension_numbers<[2], [2], [1], [1], [0, 0, 0, 1, 1, 1], [0], [0]>} : vector<4x8x8xf32>, vector<4x8x8xf32>, vector<4x8x8xf32> -> vector<4x8x8xf32>
    "tpu.trace_stop"() : () -> ()
    %cst_7 = arith.constant 0.353553385 : f32
    %17 = vector.broadcast %cst_7 : f32 to vector<4x8x8xf32>
    %18 = arith.mulf %16, %17 : vector<4x8x8xf32>
    %cst_8 = arith.constant dense<0xFF800000> : vector<4x8xf32>
    %19 = vector.multi_reduction <maximumf>, %18, %cst_8 [2] : vector<4x8x8xf32> to vector<4x8xf32>
    %20 = vector.shape_cast %19 : vector<4x8xf32> to vector<4x8x1xf32>
    %21 = vector.broadcast %20 : vector<4x8x1xf32> to vector<4x8x8xf32>
    %22 = arith.subf %18, %21 : vector<4x8x8xf32>
    %23 = math.exp %22 : vector<4x8x8xf32>
    %cst_9 = arith.constant dense<0.000000e+00> : vector<4x8xf32>
    %24 = vector.multi_reduction <add>, %23, %cst_9 [2] : vector<4x8x8xf32> to vector<4x8xf32>
    %25 = vector.shape_cast %24 : vector<4x8xf32> to vector<4x8x1xf32>
    %26 = vector.broadcast %25 : vector<4x8x1xf32> to vector<4x8x8xf32>
    %27 = arith.divf %23, %26 : vector<4x8x8xf32>
    "tpu.trace_start"() <{level = 10 : i32, message = "nqk,nkd->nqd"}> : () -> ()
    %cst_10 = arith.constant dense<0.000000e+00> : vector<4x8x8xf32>
    %28 = tpu.matmul %27, %15, %cst_10 {dimension_numbers = #tpu.dot_dimension_numbers<[2], [1], [1], [2], [0, 0, 0, 1, 1, 2], [0], [0]>} : vector<4x8x8xf32>, vector<4x8x8xf32>, vector<4x8x8xf32> -> vector<4x8x8xf32>
    "tpu.trace_stop"() : () -> ()
    %c0_11 = arith.constant 0 : index
    %c0_12 = arith.constant 0 : index
    %c0_13 = arith.constant 0 : index
    %29 = vector.load %arg7[%c0_11, %c0_12, %c0_13] : memref<4x8x32xf32, #tpu.memory_space<vmem>>, vector<4x8x8xf32>
    tpu.vector_store %arg7[%c0_11, %c0_12, %c0_13], %28 {strides = array<i32>} : memref<4x8x32xf32, #tpu.memory_space<vmem>>, vector<4x8x8xf32>,
    %30 = vector.extract_strided_slice %8 {offsets = [0, 0, 8], sizes = [4, 8, 8], strides = [1, 1, 1]} : vector<4x8x32xf32> to vector<4x8x8xf32>
    %31 = vector.extract_strided_slice %10 {offsets = [0, 0, 8], sizes = [4, 8, 8], strides = [1, 1, 1]} : vector<4x8x32xf32> to vector<4x8x8xf32>
    %32 = vector.extract_strided_slice %12 {offsets = [0, 0, 8], sizes = [4, 8, 8], strides = [1, 1, 1]} : vector<4x8x32xf32> to vector<4x8x8xf32>
    "tpu.trace_start"() <{level = 10 : i32, message = "nqd,nkd->nqk"}> : () -> ()
    %cst_14 = arith.constant dense<0.000000e+00> : vector<4x8x8xf32>
    %33 = tpu.matmul %30, %31, %cst_14 {dimension_numbers = #tpu.dot_dimension_numbers<[2], [2], [1], [1], [0, 0, 0, 1, 1, 1], [0], [0]>} : vector<4x8x8xf32>, vector<4x8x8xf32>, vector<4x8x8xf32> -> vector<4x8x8xf32>
    "tpu.trace_stop"() : () -> ()
    %cst_15 = arith.constant 0.353553385 : f32
    %34 = vector.broadcast %cst_15 : f32 to vector<4x8x8xf32>
    %35 = arith.mulf %33, %34 : vector<4x8x8xf32>
    %cst_16 = arith.constant dense<0xFF800000> : vector<4x8xf32>
    %36 = vector.multi_reduction <maximumf>, %35, %cst_16 [2] : vector<4x8x8xf32> to vector<4x8xf32>
    %37 = vector.shape_cast %36 : vector<4x8xf32> to vector<4x8x1xf32>
    %38 = vector.broadcast %37 : vector<4x8x1xf32> to vector<4x8x8xf32>
    %39 = arith.subf %35, %38 : vector<4x8x8xf32>
    %40 = math.exp %39 : vector<4x8x8xf32>
    %cst_17 = arith.constant dense<0.000000e+00> : vector<4x8xf32>
    %41 = vector.multi_reduction <add>, %40, %cst_17 [2] : vector<4x8x8xf32> to vector<4x8xf32>
    %42 = vector.shape_cast %41 : vector<4x8xf32> to vector<4x8x1xf32>
    %43 = vector.broadcast %42 : vector<4x8x1xf32> to vector<4x8x8xf32>
    %44 = arith.divf %40, %43 : vector<4x8x8xf32>
    "tpu.trace_start"() <{level = 10 : i32, message = "nqk,nkd->nqd"}> : () -> ()
    %cst_18 = arith.constant dense<0.000000e+00> : vector<4x8x8xf32>
    %45 = tpu.matmul %44, %32, %cst_18 {dimension_numbers = #tpu.dot_dimension_numbers<[2], [1], [1], [2], [0, 0, 0, 1, 1, 2], [0], [0]>} : vector<4x8x8xf32>, vector<4x8x8xf32>, vector<4x8x8xf32> -> vector<4x8x8xf32>
    "tpu.trace_stop"() : () -> ()
    %c0_19 = arith.constant 0 : index
    %c0_20 = arith.constant 0 : index
    %c8 = arith.constant 8 : index
    %46 = vector.load %arg7[%c0_19, %c0_20, %c8] : memref<4x8x32xf32, #tpu.memory_space<vmem>>, vector<4x8x8xf32>
    tpu.vector_store %arg7[%c0_19, %c0_20, %c8], %45 {strides = array<i32>} : memref<4x8x32xf32, #tpu.memory_space<vmem>>, vector<4x8x8xf32>,
    %47 = vector.extract_strided_slice %8 {offsets = [0, 0, 16], sizes = [4, 8, 8], strides = [1, 1, 1]} : vector<4x8x32xf32> to vector<4x8x8xf32>
    %48 = vector.extract_strided_slice %10 {offsets = [0, 0, 16], sizes = [4, 8, 8], strides = [1, 1, 1]} : vector<4x8x32xf32> to vector<4x8x8xf32>
    %49 = vector.extract_strided_slice %12 {offsets = [0, 0, 16], sizes = [4, 8, 8], strides = [1, 1, 1]} : vector<4x8x32xf32> to vector<4x8x8xf32>
    "tpu.trace_start"() <{level = 10 : i32, message = "nqd,nkd->nqk"}> : () -> ()
    %cst_21 = arith.constant dense<0.000000e+00> : vector<4x8x8xf32>
    %50 = tpu.matmul %47, %48, %cst_21 {dimension_numbers = #tpu.dot_dimension_numbers<[2], [2], [1], [1], [0, 0, 0, 1, 1, 1], [0], [0]>} : vector<4x8x8xf32>, vector<4x8x8xf32>, vector<4x8x8xf32> -> vector<4x8x8xf32>
    "tpu.trace_stop"() : () -> ()
    %cst_22 = arith.constant 0.353553385 : f32
    %51 = vector.broadcast %cst_22 : f32 to vector<4x8x8xf32>
    %52 = arith.mulf %50, %51 : vector<4x8x8xf32>
    %cst_23 = arith.constant dense<0xFF800000> : vector<4x8xf32>
    %53 = vector.multi_reduction <maximumf>, %52, %cst_23 [2] : vector<4x8x8xf32> to vector<4x8xf32>
    %54 = vector.shape_cast %53 : vector<4x8xf32> to vector<4x8x1xf32>
    %55 = vector.broadcast %54 : vector<4x8x1xf32> to vector<4x8x8xf32>
    %56 = arith.subf %52, %55 : vector<4x8x8xf32>
    %57 = math.exp %56 : vector<4x8x8xf32>
    %cst_24 = arith.constant dense<0.000000e+00> : vector<4x8xf32>
    %58 = vector.multi_reduction <add>, %57, %cst_24 [2] : vector<4x8x8xf32> to vector<4x8xf32>
    %59 = vector.shape_cast %58 : vector<4x8xf32> to vector<4x8x1xf32>
    %60 = vector.broadcast %59 : vector<4x8x1xf32> to vector<4x8x8xf32>
    %61 = arith.divf %57, %60 : vector<4x8x8xf32>
    "tpu.trace_start"() <{level = 10 : i32, message = "nqk,nkd->nqd"}> : () -> ()
    %cst_25 = arith.constant dense<0.000000e+00> : vector<4x8x8xf32>
    %62 = tpu.matmul %61, %49, %cst_25 {dimension_numbers = #tpu.dot_dimension_numbers<[2], [1], [1], [2], [0, 0, 0, 1, 1, 2], [0], [0]>} : vector<4x8x8xf32>, vector<4x8x8xf32>, vector<4x8x8xf32> -> vector<4x8x8xf32>
    "tpu.trace_stop"() : () -> ()
    %c0_26 = arith.constant 0 : index
    %c0_27 = arith.constant 0 : index
    %c16 = arith.constant 16 : index
    %63 = vector.load %arg7[%c0_26, %c0_27, %c16] : memref<4x8x32xf32, #tpu.memory_space<vmem>>, vector<4x8x8xf32>
    tpu.vector_store %arg7[%c0_26, %c0_27, %c16], %62 {strides = array<i32>} : memref<4x8x32xf32, #tpu.memory_space<vmem>>, vector<4x8x8xf32>,
    %64 = vector.extract_strided_slice %8 {offsets = [0, 0, 24], sizes = [4, 8, 8], strides = [1, 1, 1]} : vector<4x8x32xf32> to vector<4x8x8xf32>
    %65 = vector.extract_strided_slice %10 {offsets = [0, 0, 24], sizes = [4, 8, 8], strides = [1, 1, 1]} : vector<4x8x32xf32> to vector<4x8x8xf32>
    %66 = vector.extract_strided_slice %12 {offsets = [0, 0, 24], sizes = [4, 8, 8], strides = [1, 1, 1]} : vector<4x8x32xf32> to vector<4x8x8xf32>
    "tpu.trace_start"() <{level = 10 : i32, message = "nqd,nkd->nqk"}> : () -> ()
    %cst_28 = arith.constant dense<0.000000e+00> : vector<4x8x8xf32>
    %67 = tpu.matmul %64, %65, %cst_28 {dimension_numbers = #tpu.dot_dimension_numbers<[2], [2], [1], [1], [0, 0, 0, 1, 1, 1], [0], [0]>} : vector<4x8x8xf32>, vector<4x8x8xf32>, vector<4x8x8xf32> -> vector<4x8x8xf32>
    "tpu.trace_stop"() : () -> ()
    %cst_29 = arith.constant 0.353553385 : f32
    %68 = vector.broadcast %cst_29 : f32 to vector<4x8x8xf32>
    %69 = arith.mulf %67, %68 : vector<4x8x8xf32>
    %cst_30 = arith.constant dense<0xFF800000> : vector<4x8xf32>
    %70 = vector.multi_reduction <maximumf>, %69, %cst_30 [2] : vector<4x8x8xf32> to vector<4x8xf32>
    %71 = vector.shape_cast %70 : vector<4x8xf32> to vector<4x8x1xf32>
    %72 = vector.broadcast %71 : vector<4x8x1xf32> to vector<4x8x8xf32>
    %73 = arith.subf %69, %72 : vector<4x8x8xf32>
    %74 = math.exp %73 : vector<4x8x8xf32>
    %cst_31 = arith.constant dense<0.000000e+00> : vector<4x8xf32>
    %75 = vector.multi_reduction <add>, %74, %cst_31 [2] : vector<4x8x8xf32> to vector<4x8xf32>
    %76 = vector.shape_cast %75 : vector<4x8xf32> to vector<4x8x1xf32>
    %77 = vector.broadcast %76 : vector<4x8x1xf32> to vector<4x8x8xf32>
    %78 = arith.divf %74, %77 : vector<4x8x8xf32>
    "tpu.trace_start"() <{level = 10 : i32, message = "nqk,nkd->nqd"}> : () -> ()
    %cst_32 = arith.constant dense<0.000000e+00> : vector<4x8x8xf32>
    %79 = tpu.matmul %78, %66, %cst_32 {dimension_numbers = #tpu.dot_dimension_numbers<[2], [1], [1], [2], [0, 0, 0, 1, 1, 2], [0], [0]>} : vector<4x8x8xf32>, vector<4x8x8xf32>, vector<4x8x8xf32> -> vector<4x8x8xf32>
    "tpu.trace_stop"() : () -> ()
    %c0_33 = arith.constant 0 : index
    %c0_34 = arith.constant 0 : index
    %c24 = arith.constant 24 : index
    %80 = vector.load %arg7[%c0_33, %c0_34, %c24] : memref<4x8x32xf32, #tpu.memory_space<vmem>>, vector<4x8x8xf32>
    tpu.vector_store %arg7[%c0_33, %c0_34, %c24], %79 {strides = array<i32>} : memref<4x8x32xf32, #tpu.memory_space<vmem>>, vector<4x8x8xf32>,
    %c0_35 = arith.constant 0 : index
    %c0_36 = arith.constant 0 : index
    %c0_37 = arith.constant 0 : index
    %81 = vector.load %arg7[%c0_35, %c0_36, %c0_37] : memref<4x8x32xf32, #tpu.memory_space<vmem>>, vector<4x8x32xf32>
    %82 = vector.shape_cast %81 : vector<4x8x32xf32> to vector<32x32xf32>
    %83 = arith.addf %82, %1 : vector<32x32xf32>
    %cst_38 = arith.constant dense<0.000000e+00> : vector<32xf32>
    %84 = vector.multi_reduction <add>, %83, %cst_38 [1] : vector<32x32xf32> to vector<32xf32>
    %85 = vector.shape_cast %84 : vector<32xf32> to vector<32x1xf32>
    %cst_39 = arith.constant 3.200000e+01 : f32
    %86 = vector.broadcast %cst_39 : f32 to vector<32x1xf32>
    %87 = arith.divf %85, %86 : vector<32x1xf32>
    %88 = vector.broadcast %87 : vector<32x1xf32> to vector<32x32xf32>
    %89 = arith.subf %83, %88 : vector<32x32xf32>
    %90 = arith.mulf %89, %89 : vector<32x32xf32>
    %cst_40 = arith.constant dense<0.000000e+00> : vector<32xf32>
    %91 = vector.multi_reduction <add>, %90, %cst_40 [1] : vector<32x32xf32> to vector<32xf32>
    %92 = vector.shape_cast %91 : vector<32xf32> to vector<32x1xf32>
    %cst_41 = arith.constant 3.200000e+01 : f32
    %93 = vector.broadcast %cst_41 : f32 to vector<32x1xf32>
    %94 = arith.divf %92, %93 : vector<32x1xf32>
    %95 = vector.broadcast %87 : vector<32x1xf32> to vector<32x32xf32>
    %96 = arith.subf %83, %95 : vector<32x32xf32>
    %cst_42 = arith.constant 9.99999974E-6 : f32
    %97 = vector.broadcast %cst_42 : f32 to vector<32x1xf32>
    %98 = arith.addf %94, %97 : vector<32x1xf32>
    %99 = math.rsqrt %98 : vector<32x1xf32>
    %100 = vector.broadcast %99 : vector<32x1xf32> to vector<32x32xf32>
    %101 = arith.mulf %96, %100 : vector<32x32xf32>
    %c0_43 = arith.constant 0 : index
    %c0_44 = arith.constant 0 : index
    %102 = vector.load %arg4[%c0_43, %c0_44] : memref<1x32xf32, #tpu.memory_space<vmem>>, vector<1x32xf32>
    %103 = vector.broadcast %102 : vector<1x32xf32> to vector<32x32xf32>
    %104 = arith.mulf %101, %103 : vector<32x32xf32>
    %c0_45 = arith.constant 0 : index
    %c0_46 = arith.constant 0 : index
    %105 = vector.load %arg5[%c0_45, %c0_46] : memref<1x32xf32, #tpu.memory_space<vmem>>, vector<1x32xf32>
    %106 = vector.broadcast %105 : vector<1x32xf32> to vector<32x32xf32>
    %107 = arith.addf %104, %106 : vector<32x32xf32>
    %c0_47 = arith.constant 0 : index
    %c0_48 = arith.constant 0 : index
    %c0_49 = arith.constant 0 : index
    %108 = vector.load %arg6[%c0_47, %c0_48, %c0_49] : memref<1x32x32xf32, #tpu.memory_space<vmem>>, vector<1x32x32xf32>
    %109 = vector.shape_cast %108 : vector<1x32x32xf32> to vector<32x32xf32>
    %110 = vector.shape_cast %107 : vector<32x32xf32> to vector<1x32x32xf32>
    tpu.vector_store %arg6[%c0_47, %c0_48, %c0_49], %110 {strides = array<i32>} : memref<1x32x32xf32, #tpu.memory_space<vmem>>, vector<1x32x32xf32>,
    return
  }
  func.func @transform_0(%arg0: i32) -> (i32, i32, i32) {
    %c0_i32 = arith.constant 0 : i32
    %c0_i32_0 = arith.constant 0 : i32
    %c0_i32_1 = arith.constant 0 : i32
    return %arg0, %c0_i32, %c0_i32_0 : i32, i32, i32
  }
  func.func @transform_1(%arg0: i32) -> (i32, i32) {
    %c0_i32 = arith.constant 0 : i32
    %c0_i32_0 = arith.constant 0 : i32
    %c0_i32_1 = arith.constant 0 : i32
    return %c0_i32, %c0_i32_0 : i32, i32
  }
  func.func @transform_2(%arg0: i32) -> (i32, i32) {
    %c0_i32 = arith.constant 0 : i32
    %c0_i32_0 = arith.constant 0 : i32
    %c0_i32_1 = arith.constant 0 : i32
    return %c0_i32, %c0_i32_0 : i32, i32
  }
  func.func @transform_3(%arg0: i32) -> (i32, i32) {
    %c0_i32 = arith.constant 0 : i32
    %c0_i32_0 = arith.constant 0 : i32
    %c0_i32_1 = arith.constant 0 : i32
    return %c0_i32, %c0_i32_0 : i32, i32
  }
  func.func @transform_4(%arg0: i32) -> (i32, i32) {
    %c0_i32 = arith.constant 0 : i32
    %c0_i32_0 = arith.constant 0 : i32
    %c0_i32_1 = arith.constant 0 : i32
    return %c0_i32, %c0_i32_0 : i32, i32
  }
  func.func @transform_5(%arg0: i32) -> (i32, i32, i32) {
    %c0_i32 = arith.constant 0 : i32
    %c0_i32_0 = arith.constant 0 : i32
    %c0_i32_1 = arith.constant 0 : i32
    return %arg0, %c0_i32, %c0_i32_0 : i32, i32, i32
  }
}

</mosaic_0001>

<llo_original>
// kernel: tpu_custom_call.1
$region0: #{tpu_custom_call.1}
  #allocation0 [shape = 'u32[]', space=smem, size = 0x4, offset = 0x4, fixed_abs, tag = 'smem constant byte address 0x4 - core index']
  #allocation1 [shape = 'u32[144,128]{1,0:T(1,128)}', space=vmem, size = 0x12000, scoped, tag = 'internal scratch']
  #allocation2 [shape = 'f32[4,8,32]{2,1,0:T(8,128)}', space=vmem, size = 0x4000, scoped, tag = 'scratch operand']
  %s0 = inlined_call_operand.hbm [shape: f32[2,32,32], index: 0, kind: input, shape index: {}]
  %s1 = inlined_call_operand.hbm [shape: f32[32,96], index: 1, kind: input, shape index: {}]
  %s2 = inlined_call_operand.vmem [shape: f32[1,96], index: 2, kind: input, shape index: {}]
  %s3 = inlined_call_operand.vmem [shape: f32[1,32], index: 3, kind: input, shape index: {}]
  %s4 = inlined_call_operand.vmem [shape: f32[1,32], index: 4, kind: input, shape index: {}]
  %s5 = inlined_call_operand.hbm [shape: f32[2,32,32], index: 5, kind: output, shape index: {}]
  %s6 = sld [smem:[#allocation0]]
  $region61: #{tpu_custom_call.1} parent=0
    _
  %s8 = ssub.s32 1, %s6
  %s9 = scalar_select 0, %s8, %s6
  $region1: #{tpu_custom_call.1} parent=0
    #allocation3 [shape = 'u8[32768]{0}', space=vmem, size = 0x8000, scoped, tag = 'input window, operand 0']
    #allocation4 [shape = 's32[2]{0}', space=sflag, size = 0x8, scoped, tag = 'scoped memory for tpu_custom_call.1']
    #allocation5 [shape = 's32[2]{0}', space=sflag, size = 0x8, scoped, tag = 'scoped memory for tpu_custom_call.1']
    #allocation6 [shape = 'u8[16384]{0}', space=vmem, size = 0x4000, scoped, tag = 'input window, operand 1, single buffered']
    #allocation7 [shape = 's32[1]{0}', space=sflag, size = 0x4, scoped, tag = 'scoped memory for tpu_custom_call.1']
    #allocation8 [shape = 'u8[32768]{0}', space=vmem, size = 0x8000, scoped, tag = 'output window, operand 0']
    %10 = vsyncpa [#allocation4], 0
    %s11 = scalar_lea.sflag [#allocation4], 1
    %12 = vsyncpa %s11, 0
    %13 = vsyncpa [#allocation7], 0
    %14 = vsyncpa [#allocation5], 0
    %s15 = scalar_lea.sflag [#allocation5], 1
    %16 = vsyncpa %s15, 0
    loop: start=0, step=1, limit=4
    $region2: #{tpu_custom_call.1} parent=1 // loop_pre_header
      _
    $region3: #{tpu_custom_call.1} parent=1 // loop_header
      %s18 = sphi 0, %s22
      %p19 = scmp.ge.s32.totalorder %s18, 4
      %s28 = sphi 0, %s30
      %s31 = sphi 0, %s28
      %s32 = sphi 0, %s31
      %s48 = sphi 0, %s32
      %s52 = sphi 0, %s52
      %s54 = sphi 0, %s52
      %s55 = sphi 0, %s54
      %s69 = sphi 0, %s55
      %s73 = sphi 0, %s73
      %s75 = sphi 0, %s73
      %s76 = sphi 0, %s75
      %s90 = sphi 0, %s76
      %s94 = sphi 0, %s94
      %s96 = sphi 0, %s94
      %s97 = sphi 0, %s96
      %s111 = sphi 0, %s97
      %s115 = sphi 0, %s115
      %s117 = sphi 0, %s115
      %s118 = sphi 0, %s117
      %s132 = sphi 0, %s118
      %s138 = sphi 0, %s140
      %s141 = sphi 0, %s138
      %s142 = sphi 0, %s141
      %s158 = sphi 0, %s142
    $region4: #{tpu_custom_call.1} parent=1 // loop_header_branch
      %21 = sbr.rel (%p19) target = $region8
    $region5: #{tpu_custom_call.1} parent=1 // loop_body
      %s23 = ssub.s32 %s18, 1
      %s24 = ssub.s32 %s18, 2
      %s25 = sadd.s32 %s18, 1
      %s26 = ssub.s32 %s18, %s25
      %p27 = scmp.eq.s32.totalorder %s26, 0
      %s29 = sadd.s32 %s28, 1
      %s30 = scalar_select %p27, %s28, %s29
      %p33 = pneg %p27
      %p34 = scmp.eq.s32.totalorder %s18, 1
      %p35 = por %p33, %p34
      %p36 = scmp.ne.s32.totalorder %s28, %s31
      %p37 = scmp.eq.s32.totalorder %s18, 0
      %p38 = por %p36, %p37
      %p39 = scmp.ne.s32.totalorder %s28, %s31
      %p40 = scmp.eq.s32.totalorder %s23, 1
      %p41 = por %p39, %p40
      %p42 = scmp.ne.s32.totalorder %s31, %s32
      %p43 = scmp.eq.s32.totalorder %s23, 0
      %p44 = por %p42, %p43
      %p45 = scmp.ne.s32.totalorder %s31, %s32
      %p46 = scmp.eq.s32.totalorder %s24, 1
      %p47 = por %p45, %p46
      %p49 = scmp.ne.s32.totalorder %s32, %s48
      %p50 = scmp.eq.s32.totalorder %s24, 0
      %p51 = por %p49, %p50
      %s53 = sadd.s32 %s52, 1
      %p56 = scmp.eq.s32.totalorder %s18, 1
      %p57 = scmp.ne.s32.totalorder %s52, %s54
      %p58 = scmp.eq.s32.totalorder %s18, 0
      %p59 = por %p57, %p58
      %p60 = scmp.ne.s32.totalorder %s52, %s54
      %p61 = scmp.eq.s32.totalorder %s23, 1
      %p62 = por %p60, %p61
      %p63 = scmp.ne.s32.totalorder %s54, %s55
      %p64 = scmp.eq.s32.totalorder %s23, 0
      %p65 = por %p63, %p64
      %p66 = scmp.ne.s32.totalorder %s54, %s55
      %p67 = scmp.eq.s32.totalorder %s24, 1
      %p68 = por %p66, %p67
      %p70 = scmp.ne.s32.totalorder %s55, %s69
      %p71 = scmp.eq.s32.totalorder %s24, 0
      %p72 = por %p70, %p71
      %s74 = sadd.s32 %s73, 1
      %p77 = scmp.eq.s32.totalorder %s18, 1
      %p78 = scmp.ne.s32.totalorder %s73, %s75
      %p79 = scmp.eq.s32.totalorder %s18, 0
      %p80 = por %p78, %p79
      %p81 = scmp.ne.s32.totalorder %s73, %s75
      %p82 = scmp.eq.s32.totalorder %s23, 1
      %p83 = por %p81, %p82
      %p84 = scmp.ne.s32.totalorder %s75, %s76
      %p85 = scmp.eq.s32.totalorder %s23, 0
      %p86 = por %p84, %p85
      %p87 = scmp.ne.s32.totalorder %s75, %s76
      %p88 = scmp.eq.s32.totalorder %s24, 1
      %p89 = por %p87, %p88
      %p91 = scmp.ne.s32.totalorder %s76, %s90
      %p92 = scmp.eq.s32.totalorder %s24, 0
      %p93 = por %p91, %p92
      %s95 = sadd.s32 %s94, 1
      %p98 = scmp.eq.s32.totalorder %s18, 1
      %p99 = scmp.ne.s32.totalorder %s94, %s96
      %p100 = scmp.eq.s32.totalorder %s18, 0
      %p101 = por %p99, %p100
      %p102 = scmp.ne.s32.totalorder %s94, %s96
      %p103 = scmp.eq.s32.totalorder %s23, 1
      %p104 = por %p102, %p103
      %p105 = scmp.ne.s32.totalorder %s96, %s97
      %p106 = scmp.eq.s32.totalorder %s23, 0
      %p107 = por %p105, %p106
      %p108 = scmp.ne.s32.totalorder %s96, %s97
      %p109 = scmp.eq.s32.totalorder %s24, 1
      %p110 = por %p108, %p109
      %p112 = scmp.ne.s32.totalorder %s97, %s111
      %p113 = scmp.eq.s32.totalorder %s24, 0
      %p114 = por %p112, %p113
      %s116 = sadd.s32 %s115, 1
      %p119 = scmp.eq.s32.totalorder %s18, 1
      %p120 = scmp.ne.s32.totalorder %s115, %s117
      %p121 = scmp.eq.s32.totalorder %s18, 0
      %p122 = por %p120, %p121
      %p123 = scmp.ne.s32.totalorder %s115, %s117
      %p124 = scmp.eq.s32.totalorder %s23, 1
      %p125 = por %p123, %p124
      %p126 = scmp.ne.s32.totalorder %s117, %s118
      %p127 = scmp.eq.s32.totalorder %s23, 0
      %p128 = por %p126, %p127
      %p129 = scmp.ne.s32.totalorder %s117, %s118
      %p130 = scmp.eq.s32.totalorder %s24, 1
      %p131 = por %p129, %p130
      %p133 = scmp.ne.s32.totalorder %s118, %s132
      %p134 = scmp.eq.s32.totalorder %s24, 0
      %p135 = por %p133, %p134
      %s136 = ssub.s32 %s18, %s25
      %p137 = scmp.eq.s32.totalorder %s136, 0
      %s139 = sadd.s32 %s138, 1
      %s140 = scalar_select %p137, %s138, %s139
      %p143 = pneg %p137
      %p144 = scmp.eq.s32.totalorder %s18, 1
      %p145 = por %p143, %p144
      %p146 = scmp.ne.s32.totalorder %s138, %s141
      %p147 = scmp.eq.s32.totalorder %s18, 0
      %p148 = por %p146, %p147
      %p149 = scmp.ne.s32.totalorder %s138, %s141
      %p150 = scmp.eq.s32.totalorder %s23, 1
      %p151 = por %p149, %p150
      %p152 = scmp.ne.s32.totalorder %s141, %s142
      %p153 = scmp.eq.s32.totalorder %s23, 0
      %p154 = por %p152, %p153
      %p155 = scmp.ne.s32.totalorder %s141, %s142
      %p156 = scmp.eq.s32.totalorder %s24, 1
      %p157 = por %p155, %p156
      %p159 = scmp.ne.s32.totalorder %s142, %s158
      %p160 = scmp.eq.s32.totalorder %s24, 0
      %p161 = por %p159, %p160
      %p162 = scmp.le.s32.totalorder 1, %s18
      %p163 = scmp.lt.s32.totalorder %s18, 3
      %p164 = pnand %p162, %p163
      %p165 = pneg %p164
      // Predicated region
      $region9: #{tpu_custom_call.1} parent=5 // pred_check
        _
      $region10: #{tpu_custom_call.1} parent=5 // pred_check_branch
        %167 = sbr.rel (%p164) target = $region12
      $region11: #{tpu_custom_call.1} parent=5 // pred_region
        %s168 = ssub.s32 %s18, 1
        // Predicated region
        $region13: #{tpu_custom_call.1} parent=11 // pred_check
          %p169 = pneg %p65
        $region14: #{tpu_custom_call.1} parent=11 // pred_check_branch
          %171 = sbr.rel (%p169) target = $region16
        $region15: #{tpu_custom_call.1} parent=11 // pred_region
          %s173 = ssub.s32 512, 512
          %174 = vsyncadd [#allocation7], %s173
          %s175 = sshll.u32 [#allocation6], 4
          %s176 = int_to_ptr.vmem [resolvable:$true] %s175
          %181 = dma.hbm_to_vmem [thread:$0]  %s1, 512, %s176, [#allocation7], 128, 128, 8
        $region16: #{tpu_custom_call.1} parent=11 // pred_fallthru
          _
        // Predicated region
        $region17: #{tpu_custom_call.1} parent=11 // pred_check
          %p182 = pneg %p86
        $region18: #{tpu_custom_call.1} parent=11 // pred_check_branch
          %184 = sbr.rel (%p182) target = $region20
        $region19: #{tpu_custom_call.1} parent=11 // pred_region
          _
        $region20: #{tpu_custom_call.1} parent=11 // pred_fallthru
          _
        // Predicated region
        $region21: #{tpu_custom_call.1} parent=11 // pred_check
          %p185 = pneg %p107
        $region22: #{tpu_custom_call.1} parent=11 // pred_check_branch
          %187 = sbr.rel (%p185) target = $region24
        $region23: #{tpu_custom_call.1} parent=11 // pred_region
          _
        $region24: #{tpu_custom_call.1} parent=11 // pred_fallthru
          _
        // Predicated region
        $region25: #{tpu_custom_call.1} parent=11 // pred_check
          %p188 = pneg %p128
        $region26: #{tpu_custom_call.1} parent=11 // pred_check_branch
          %190 = sbr.rel (%p188) target = $region28
        $region27: #{tpu_custom_call.1} parent=11 // pred_region
          _
        $region28: #{tpu_custom_call.1} parent=11 // pred_fallthru
          _
      $region12: #{tpu_custom_call.1} parent=5 // pred_fallthru
        _
      %p191 = scmp.lt.s32.totalorder %s18, 2
      // Predicated region
      $region29: #{tpu_custom_call.1} parent=5 // pred_check
        %p192 = pneg %p191
      $region30: #{tpu_custom_call.1} parent=5 // pred_check_branch
        %194 = sbr.rel (%p192) target = $region32
      $region31: #{tpu_custom_call.1} parent=5 // pred_region
        // Predicated region
        $region33: #{tpu_custom_call.1} parent=31 // pred_check
          %p195 = pneg %p38
        $region34: #{tpu_custom_call.1} parent=31 // pred_check_branch
          %197 = sbr.rel (%p195) target = $region36
        $region35: #{tpu_custom_call.1} parent=31 // pred_region
          %s198 = sand.u32 %s28, 1
          %s199 = scalar_lea.sflag [#allocation4], %s198
          %s200 = sand.u32 %s28, 1
          %s201 = smul.addr %s200, 32
          %s202 = scalar_lea.vmem [#allocation3], %s201
          %s204 = ssub.s32 512, 512
          %205 = vsyncadd %s199, %s204
          %s206 = smul.addr %s18, 4
          %s207 = smul.addr %s206, 128
          %s208 = scalar_lea.hbm %s0, %s207
          %s209 = sshll.u32 %s202, 4
          %s210 = int_to_ptr.vmem [resolvable:$true] %s209
          %215 = dma.hbm_to_vmem [thread:$0]  %s208, 512, %s210, %s199, 128, 128, 8
        $region36: #{tpu_custom_call.1} parent=31 // pred_fallthru
          _
      $region32: #{tpu_custom_call.1} parent=5 // pred_fallthru
        _
      %p216 = scmp.le.s32.totalorder 1, %s18
      %p217 = scmp.lt.s32.totalorder %s18, 3
      %p218 = pnand %p216, %p217
      %p219 = pneg %p218
      // Predicated region
      $region37: #{tpu_custom_call.1} parent=5 // pred_check
        _
      $region38: #{tpu_custom_call.1} parent=5 // pred_check_branch
        %221 = sbr.rel (%p218) target = $region40
      $region39: #{tpu_custom_call.1} parent=5 // pred_region
        %s222 = ssub.s32 %s18, 1
        %s223 = sand.u32 %s31, 1
        %s224 = scalar_lea.sflag [#allocation4], %s223
        %s225 = sand.u32 %s31, 1
        %s226 = smul.addr %s225, 32
        %s227 = scalar_lea.vmem [#allocation3], %s226
        // Predicated region
        $region41: #{tpu_custom_call.1} parent=39 // pred_check
          %p228 = pneg %p44
        $region42: #{tpu_custom_call.1} parent=39 // pred_check_branch
          %230 = sbr.rel (%p228) target = $region44
        $region43: #{tpu_custom_call.1} parent=39 // pred_region
          %231 = dma.done %s224, 512
        $region44: #{tpu_custom_call.1} parent=39 // pred_fallthru
          _
        // Predicated region
        $region45: #{tpu_custom_call.1} parent=39 // pred_check
          %p232 = pneg %p65
        $region46: #{tpu_custom_call.1} parent=39 // pred_check_branch
          %234 = sbr.rel (%p232) target = $region48
        $region47: #{tpu_custom_call.1} parent=39 // pred_region
          %235 = dma.done [#allocation7], 512
        $region48: #{tpu_custom_call.1} parent=39 // pred_fallthru
          _
        %s236 = sand.u32 %s31, 1
        %s237 = scalar_lea.sflag [#allocation4], %s236
        %s238 = sand.u32 %s31, 1
        %s239 = smul.addr %s238, 32
        %s240 = scalar_lea.vmem [#allocation3], %s239
        %p241 = pneg %p44
        %p242 = pneg %p41
        %p243 = pneg %p65
        %p244 = pneg %p62
        %p245 = pneg %p86
        %p246 = pneg %p83
        %p247 = pneg %p107
        %p248 = pneg %p104
        %p249 = pneg %p128
        %p250 = pneg %p125
        %p251 = pneg %p154
        %p252 = pneg %p151
        %s253 = sand.u32 %s141, 1
        %s254 = scalar_lea.sflag [#allocation5], %s253
        %s255 = sand.u32 %s141, 1
        %s256 = smul.addr %s255, 32
        %s257 = scalar_lea.vmem [#allocation8], %s256
        %v258 = vld [vmem:[%s227] sm:$0xff]
        %v259 = vld [vmem:[%s227 + $0x8] sm:$0xff]
        %v260 = vld [vmem:[%s227 + $0x10] sm:$0xff]
        %v261 = vld [vmem:[%s227 + $0x18] sm:$0xff]
        %v262 = vld [vmem:[#allocation6] sm:$0xff]
        %v263 = vld [vmem:[#allocation6 + $0x8] sm:$0xff]
        %v264 = vld [vmem:[#allocation6 + $0x10] sm:$0xff]
        %v265 = vld [vmem:[#allocation6 + $0x18] sm:$0xff]
        %v266 = vld [vmem:[%s2] sm:$0x1]
        %v268 = vlaneseq
        %v269 = vshrl.u32 %v268, 7
        %v270 = vsub.s32 0, %v269
        %v271 = vrot.slane %v266, %v270
        %vm273 = vcmask 261120
        %v275 = vsel %vm273, %v258, 0
        %v278 = vsel %vm273, %v259, 0
        %v281 = vsel %vm273, %v260, 0
        %v284 = vsel %vm273, %v261, 0
        %286 = vmatprep.subr.mxu0 0.0
        %287 = vmatpush1.msra.mxu0 0.0
        %288 = vmatprep.subr.mxu0 0.0
        %289 = vmatpush1.msra.mxu0 0.0
        %290 = vmatprep.subr.mxu0 0.0
        %291 = vmatpush1.msra.mxu0 0.0
        %292 = vmatprep.subr.mxu0 0.0
        %293 = vmatpush1.msra.mxu0 0.0
        %294 = vmatprep.subr.mxu0 0.0
        %295 = vmatpush1.msra.mxu0 0.0
        %296 = vmatprep.subr.mxu0 0.0
        %297 = vmatpush1.msra.mxu0 0.0
        %298 = vmatprep.subr.mxu0 0.0
        %299 = vmatpush1.msra.mxu0 0.0
        %300 = vmatprep.subr.mxu0 0.0
        %301 = vmatpush1.msra.mxu0 0.0
        %302 = vmatprep.subr.mxu0 0.0
        %303 = vmatpush1.msra.mxu0 0.0
        %304 = vmatprep.subr.mxu0 0.0
        %305 = vmatpush1.msra.mxu0 0.0
        %306 = vmatprep.subr.mxu0 0.0
        %307 = vmatpush1.msra.mxu0 0.0
        %308 = vmatprep.subr.mxu0 0.0
        %309 = vmatpush1.msra.mxu0 0.0
        %310 = vmatprep.subr.mxu0 0.0
        %311 = vmatpush1.msra.mxu0 %v265
        %312 = vmatprep.subr.mxu0 0.0
        %313 = vmatpush1.msra.mxu0 %v264
        %314 = vmatprep.subr.mxu0 0.0
        %315 = vmatpush1.msra.mxu0 %v263
        %316 = vmatprep.subr.mxu0 0.0
        %317 = vmatpush1.msra.mxu0 %v262
        %318 = vmatprep.subr.mxu0 0.0
        %319 = vmatpush2.msra.mxu0 0.0
        %320 = vmatprep.subr.mxu0 0.0
        %321 = vmatpush2.msra.mxu0 0.0
        %322 = vmatprep.subr.mxu0 0.0
        %323 = vmatpush2.msra.mxu0 0.0
        %324 = vmatprep.subr.mxu0 0.0
        %325 = vmatpush2.msra.mxu0 0.0
        %326 = vmatprep.subr.mxu0 0.0
        %327 = vmatpush2.msra.mxu0 0.0
        %328 = vmatprep.subr.mxu0 0.0
        %329 = vmatpush2.msra.mxu0 0.0
        %330 = vmatprep.subr.mxu0 0.0
        %331 = vmatpush2.msra.mxu0 0.0
        %332 = vmatprep.subr.mxu0 0.0
        %333 = vmatpush2.msra.mxu0 0.0
        %334 = vmatprep.subr.mxu0 0.0
        %335 = vmatpush2.msra.mxu0 0.0
        %336 = vmatprep.subr.mxu0 0.0
        %337 = vmatpush2.msra.mxu0 0.0
        %338 = vmatprep.subr.mxu0 0.0
        %339 = vmatpush2.msra.mxu0 0.0
        %340 = vmatprep.subr.mxu0 0.0
        %341 = vmatpush2.msra.mxu0 0.0
        %342 = vmatprep.subr.mxu0 0.0
        %343 = vmatpush2.msra.mxu0 0.0
        %344 = vmatprep.subr.mxu0 0.0
        %345 = vmatpush2.msra.mxu0 0.0
        %346 = vmatprep.subr.mxu0 0.0
        %347 = vmatpush2.msra.mxu0 0.0
        %348 = vmatprep.subr.mxu0 0.0
        %349 = vmatpush2.msra.mxu0 0.0
        %350 = vmatprep.mubr.f32.mxu0 0.0
        %351 = vmatmul.mubr.f32.gmra.mxu0 %v275
        %v352 = vpop.f32.mrf.mxu0
        %v353 = vadd.f32 %v271, %v352
        %v354 = vpop.f32.mrf.mxu0
        %355 = vmatprep.mubr.f32.mxu0 0.0
        %356 = vmatmul.mubr.f32.gmra.mxu0 %v278
        %v357 = vpop.f32.mrf.mxu0
        %v358 = vadd.f32 %v271, %v357
        %v359 = vpop.f32.mrf.mxu0
        %360 = vmatprep.mubr.f32.mxu0 0.0
        %361 = vmatmul.mubr.f32.gmra.mxu0 %v281
        %v362 = vpop.f32.mrf.mxu0
        %v363 = vadd.f32 %v271, %v362
        %v364 = vpop.f32.mrf.mxu0
        %365 = vmatprep.mubr.f32.mxu0 0.0
        %366 = vmatmul.mubr.f32.gmra.mxu0 %v284
        %v367 = vpop.f32.mrf.mxu0
        %v368 = vadd.f32 %v271, %v367
        %v369 = vpop.f32.mrf.mxu0
        %370 = vdwg.mxu0
        %372 = vrot.lane.b32.xlu0 %v353, 96
        %v373 = vpop.permute.xlu0 %372
        %vm374 = vcmask 64512
        %v375 = vsel %vm374, %v353, 0
        %v377 = vsel %vm374, %v373, 0
        %379 = vmatprep.subr.mxu0 0.0
        %380 = vmatpush1.xpose.msra.mxu0 0.0
        %381 = vmatprep.subr.mxu0 0.0
        %382 = vmatpush1.xpose.msra.mxu0 0.0
        %383 = vmatprep.subr.mxu0 0.0
        %384 = vmatpush1.xpose.msra.mxu0 0.0
        %385 = vmatprep.subr.mxu0 0.0
        %386 = vmatpush1.xpose.msra.mxu0 0.0
        %387 = vmatprep.subr.mxu0 0.0
        %388 = vmatpush1.xpose.msra.mxu0 0.0
        %389 = vmatprep.subr.mxu0 0.0
        %390 = vmatpush1.xpose.msra.mxu0 0.0
        %391 = vmatprep.subr.mxu0 0.0
        %392 = vmatpush1.xpose.msra.mxu0 0.0
        %393 = vmatprep.subr.mxu0 0.0
        %394 = vmatpush1.xpose.msra.mxu0 0.0
        %395 = vmatprep.subr.mxu0 0.0
        %396 = vmatpush1.xpose.msra.mxu0 0.0
        %397 = vmatprep.subr.mxu0 0.0
        %398 = vmatpush1.xpose.msra.mxu0 0.0
        %399 = vmatprep.subr.mxu0 0.0
        %400 = vmatpush1.xpose.msra.mxu0 0.0
        %401 = vmatprep.subr.mxu0 0.0
        %402 = vmatpush1.xpose.msra.mxu0 0.0
        %403 = vmatprep.subr.mxu0 0.0
        %404 = vmatpush1.xpose.msra.mxu0 0.0
        %405 = vmatprep.subr.mxu0 0.0
        %406 = vmatpush1.xpose.msra.mxu0 0.0
        %407 = vmatprep.subr.mxu0 0.0
        %408 = vmatpush1.xpose.msra.mxu0 0.0
        %409 = vmatprep.subr.mxu0 0.0
        %410 = vmatpush1.xpose.msra.mxu0 %v377
        %411 = vmatprep.subr.mxu0 0.0
        %412 = vmatpush2.xpose.msra.mxu0 0.0
        %413 = vmatprep.subr.mxu0 0.0
        %414 = vmatpush2.xpose.msra.mxu0 0.0
        %415 = vmatprep.subr.mxu0 0.0
        %416 = vmatpush2.xpose.msra.mxu0 0.0
        %417 = vmatprep.subr.mxu0 0.0
        %418 = vmatpush2.xpose.msra.mxu0 0.0
        %419 = vmatprep.subr.mxu0 0.0
        %420 = vmatpush2.xpose.msra.mxu0 0.0
        %421 = vmatprep.subr.mxu0 0.0
        %422 = vmatpush2.xpose.msra.mxu0 0.0
        %423 = vmatprep.subr.mxu0 0.0
        %424 = vmatpush2.xpose.msra.mxu0 0.0
        %425 = vmatprep.subr.mxu0 0.0
        %426 = vmatpush2.xpose.msra.mxu0 0.0
        %427 = vmatprep.subr.mxu0 0.0
        %428 = vmatpush2.xpose.msra.mxu0 0.0
        %429 = vmatprep.subr.mxu0 0.0
        %430 = vmatpush2.xpose.msra.mxu0 0.0
        %431 = vmatprep.subr.mxu0 0.0
        %432 = vmatpush2.xpose.msra.mxu0 0.0
        %433 = vmatprep.subr.mxu0 0.0
        %434 = vmatpush2.xpose.msra.mxu0 0.0
        %435 = vmatprep.subr.mxu0 0.0
        %436 = vmatpush2.xpose.msra.mxu0 0.0
        %437 = vmatprep.subr.mxu0 0.0
        %438 = vmatpush2.xpose.msra.mxu0 0.0
        %439 = vmatprep.subr.mxu0 0.0
        %440 = vmatpush2.xpose.msra.mxu0 0.0
        %441 = vmatprep.subr.mxu0 0.0
        %442 = vmatpush2.xpose.msra.mxu0 0.0
        %443 = vmatprep.mubr.f32.mxu0 0.0
        %444 = vmatmul.mubr.f32.gmra.mxu0 %v375
        %v445 = vpop.f32.mrf.mxu0
        %v446 = vadd.f32 0.0, %v445
        %v447 = vpop.f32.mrf.mxu0
        %448 = vdwg.mxu0
        %450 = vrot.lane.b32.xlu0 %v358, 96
        %v451 = vpop.permute.xlu0 %450
        %v452 = vsel %vm374, %v358, 0
        %v454 = vsel %vm374, %v451, 0
        %456 = vmatprep.subr.mxu0 0.0
        %457 = vmatpush1.xpose.msra.mxu0 0.0
        %458 = vmatprep.subr.mxu0 0.0
        %459 = vmatpush1.xpose.msra.mxu0 0.0
        %460 = vmatprep.subr.mxu0 0.0
        %461 = vmatpush1.xpose.msra.mxu0 0.0
        %462 = vmatprep.subr.mxu0 0.0
        %463 = vmatpush1.xpose.msra.mxu0 0.0
        %464 = vmatprep.subr.mxu0 0.0
        %465 = vmatpush1.xpose.msra.mxu0 0.0
        %466 = vmatprep.subr.mxu0 0.0
        %467 = vmatpush1.xpose.msra.mxu0 0.0
        %468 = vmatprep.subr.mxu0 0.0
        %469 = vmatpush1.xpose.msra.mxu0 0.0
        %470 = vmatprep.subr.mxu0 0.0
        %471 = vmatpush1.xpose.msra.mxu0 0.0
        %472 = vmatprep.subr.mxu0 0.0
        %473 = vmatpush1.xpose.msra.mxu0 0.0
        %474 = vmatprep.subr.mxu0 0.0
        %475 = vmatpush1.xpose.msra.mxu0 0.0
        %476 = vmatprep.subr.mxu0 0.0
        %477 = vmatpush1.xpose.msra.mxu0 0.0
        %478 = vmatprep.subr.mxu0 0.0
        %479 = vmatpush1.xpose.msra.mxu0 0.0
        %480 = vmatprep.subr.mxu0 0.0
        %481 = vmatpush1.xpose.msra.mxu0 0.0
        %482 = vmatprep.subr.mxu0 0.0
        %483 = vmatpush1.xpose.msra.mxu0 0.0
        %484 = vmatprep.subr.mxu0 0.0
        %485 = vmatpush1.xpose.msra.mxu0 0.0
        %486 = vmatprep.subr.mxu0 0.0
        %487 = vmatpush1.xpose.msra.mxu0 %v454
        %488 = vmatprep.subr.mxu0 0.0
        %489 = vmatpush2.xpose.msra.mxu0 0.0
        %490 = vmatprep.subr.mxu0 0.0
        %491 = vmatpush2.xpose.msra.mxu0 0.0
        %492 = vmatprep.subr.mxu0 0.0
        %493 = vmatpush2.xpose.msra.mxu0 0.0
        %494 = vmatprep.subr.mxu0 0.0
        %495 = vmatpush2.xpose.msra.mxu0 0.0
        %496 = vmatprep.subr.mxu0 0.0
        %497 = vmatpush2.xpose.msra.mxu0 0.0
        %498 = vmatprep.subr.mxu0 0.0
        %499 = vmatpush2.xpose.msra.mxu0 0.0
        %500 = vmatprep.subr.mxu0 0.0
        %501 = vmatpush2.xpose.msra.mxu0 0.0
        %502 = vmatprep.subr.mxu0 0.0
        %503 = vmatpush2.xpose.msra.mxu0 0.0
        %504 = vmatprep.subr.mxu0 0.0
        %505 = vmatpush2.xpose.msra.mxu0 0.0
        %506 = vmatprep.subr.mxu0 0.0
        %507 = vmatpush2.xpose.msra.mxu0 0.0
        %508 = vmatprep.subr.mxu0 0.0
        %509 = vmatpush2.xpose.msra.mxu0 0.0
        %510 = vmatprep.subr.mxu0 0.0
        %511 = vmatpush2.xpose.msra.mxu0 0.0
        %512 = vmatprep.subr.mxu0 0.0
        %513 = vmatpush2.xpose.msra.mxu0 0.0
        %514 = vmatprep.subr.mxu0 0.0
        %515 = vmatpush2.xpose.msra.mxu0 0.0
        %516 = vmatprep.subr.mxu0 0.0
        %517 = vmatpush2.xpose.msra.mxu0 0.0
        %518 = vmatprep.subr.mxu0 0.0
        %519 = vmatpush2.xpose.msra.mxu0 0.0
        %520 = vmatprep.mubr.f32.mxu0 0.0
        %521 = vmatmul.mubr.f32.gmra.mxu0 %v452
        %v522 = vpop.f32.mrf.mxu0
        %v523 = vadd.f32 0.0, %v522
        %v524 = vpop.f32.mrf.mxu0
        %525 = vdwg.mxu0
        %527 = vrot.lane.b32.xlu0 %v363, 96
        %v528 = vpop.permute.xlu0 %527
        %v529 = vsel %vm374, %v363, 0
        %v531 = vsel %vm374, %v528, 0
        %533 = vmatprep.subr.mxu0 0.0
        %534 = vmatpush1.xpose.msra.mxu0 0.0
        %535 = vmatprep.subr.mxu0 0.0
        %536 = vmatpush1.xpose.msra.mxu0 0.0
        %537 = vmatprep.subr.mxu0 0.0
        %538 = vmatpush1.xpose.msra.mxu0 0.0
        %539 = vmatprep.subr.mxu0 0.0
        %540 = vmatpush1.xpose.msra.mxu0 0.0
        %541 = vmatprep.subr.mxu0 0.0
        %542 = vmatpush1.xpose.msra.mxu0 0.0
        %543 = vmatprep.subr.mxu0 0.0
        %544 = vmatpush1.xpose.msra.mxu0 0.0
        %545 = vmatprep.subr.mxu0 0.0
        %546 = vmatpush1.xpose.msra.mxu0 0.0
        %547 = vmatprep.subr.mxu0 0.0
        %548 = vmatpush1.xpose.msra.mxu0 0.0
        %549 = vmatprep.subr.mxu0 0.0
        %550 = vmatpush1.xpose.msra.mxu0 0.0
        %551 = vmatprep.subr.mxu0 0.0
        %552 = vmatpush1.xpose.msra.mxu0 0.0
        %553 = vmatprep.subr.mxu0 0.0
        %554 = vmatpush1.xpose.msra.mxu0 0.0
        %555 = vmatprep.subr.mxu0 0.0
        %556 = vmatpush1.xpose.msra.mxu0 0.0
        %557 = vmatprep.subr.mxu0 0.0
        %558 = vmatpush1.xpose.msra.mxu0 0.0
        %559 = vmatprep.subr.mxu0 0.0
        %560 = vmatpush1.xpose.msra.mxu0 0.0
        %561 = vmatprep.subr.mxu0 0.0
        %562 = vmatpush1.xpose.msra.mxu0 0.0
        %563 = vmatprep.subr.mxu0 0.0
        %564 = vmatpush1.xpose.msra.mxu0 %v531
        %565 = vmatprep.subr.mxu0 0.0
        %566 = vmatpush2.xpose.msra.mxu0 0.0
        %567 = vmatprep.subr.mxu0 0.0
        %568 = vmatpush2.xpose.msra.mxu0 0.0
        %569 = vmatprep.subr.mxu0 0.0
        %570 = vmatpush2.xpose.msra.mxu0 0.0
        %571 = vmatprep.subr.mxu0 0.0
        %572 = vmatpush2.xpose.msra.mxu0 0.0
        %573 = vmatprep.subr.mxu0 0.0
        %574 = vmatpush2.xpose.msra.mxu0 0.0
        %575 = vmatprep.subr.mxu0 0.0
        %576 = vmatpush2.xpose.msra.mxu0 0.0
        %577 = vmatprep.subr.mxu0 0.0
        %578 = vmatpush2.xpose.msra.mxu0 0.0
        %579 = vmatprep.subr.mxu0 0.0
        %580 = vmatpush2.xpose.msra.mxu0 0.0
        %581 = vmatprep.subr.mxu0 0.0
        %582 = vmatpush2.xpose.msra.mxu0 0.0
        %583 = vmatprep.subr.mxu0 0.0
        %584 = vmatpush2.xpose.msra.mxu0 0.0
        %585 = vmatprep.subr.mxu0 0.0
        %586 = vmatpush2.xpose.msra.mxu0 0.0
        %587 = vmatprep.subr.mxu0 0.0
        %588 = vmatpush2.xpose.msra.mxu0 0.0
        %589 = vmatprep.subr.mxu0 0.0
        %590 = vmatpush2.xpose.msra.mxu0 0.0
        %591 = vmatprep.subr.mxu0 0.0
        %592 = vmatpush2.xpose.msra.mxu0 0.0
        %593 = vmatprep.subr.mxu0 0.0
        %594 = vmatpush2.xpose.msra.mxu0 0.0
        %595 = vmatprep.subr.mxu0 0.0
        %596 = vmatpush2.xpose.msra.mxu0 0.0
        %597 = vmatprep.mubr.f32.mxu0 0.0
        %598 = vmatmul.mubr.f32.gmra.mxu0 %v529
        %v599 = vpop.f32.mrf.mxu0
        %v600 = vadd.f32 0.0, %v599
        %v601 = vpop.f32.mrf.mxu0
        %602 = vdwg.mxu0
        %604 = vrot.lane.b32.xlu0 %v368, 96
        %v605 = vpop.permute.xlu0 %604
        %v606 = vsel %vm374, %v368, 0
        %v608 = vsel %vm374, %v605, 0
        %610 = vmatprep.subr.mxu0 0.0
        %611 = vmatpush1.xpose.msra.mxu0 0.0
        %612 = vmatprep.subr.mxu0 0.0
        %613 = vmatpush1.xpose.msra.mxu0 0.0
        %614 = vmatprep.subr.mxu0 0.0
        %615 = vmatpush1.xpose.msra.mxu0 0.0
        %616 = vmatprep.subr.mxu0 0.0
        %617 = vmatpush1.xpose.msra.mxu0 0.0
        %618 = vmatprep.subr.mxu0 0.0
        %619 = vmatpush1.xpose.msra.mxu0 0.0
        %620 = vmatprep.subr.mxu0 0.0
        %621 = vmatpush1.xpose.msra.mxu0 0.0
        %622 = vmatprep.subr.mxu0 0.0
        %623 = vmatpush1.xpose.msra.mxu0 0.0
        %624 = vmatprep.subr.mxu0 0.0
        %625 = vmatpush1.xpose.msra.mxu0 0.0
        %626 = vmatprep.subr.mxu0 0.0
        %627 = vmatpush1.xpose.msra.mxu0 0.0
        %628 = vmatprep.subr.mxu0 0.0
        %629 = vmatpush1.xpose.msra.mxu0 0.0
        %630 = vmatprep.subr.mxu0 0.0
        %631 = vmatpush1.xpose.msra.mxu0 0.0
        %632 = vmatprep.subr.mxu0 0.0
        %633 = vmatpush1.xpose.msra.mxu0 0.0
        %634 = vmatprep.subr.mxu0 0.0
        %635 = vmatpush1.xpose.msra.mxu0 0.0
        %636 = vmatprep.subr.mxu0 0.0
        %637 = vmatpush1.xpose.msra.mxu0 0.0
        %638 = vmatprep.subr.mxu0 0.0
        %639 = vmatpush1.xpose.msra.mxu0 0.0
        %640 = vmatprep.subr.mxu0 0.0
        %641 = vmatpush1.xpose.msra.mxu0 %v608
        %642 = vmatprep.subr.mxu0 0.0
        %643 = vmatpush2.xpose.msra.mxu0 0.0
        %644 = vmatprep.subr.mxu0 0.0
        %645 = vmatpush2.xpose.msra.mxu0 0.0
        %646 = vmatprep.subr.mxu0 0.0
        %647 = vmatpush2.xpose.msra.mxu0 0.0
        %648 = vmatprep.subr.mxu0 0.0
        %649 = vmatpush2.xpose.msra.mxu0 0.0
        %650 = vmatprep.subr.mxu0 0.0
        %651 = vmatpush2.xpose.msra.mxu0 0.0
        %652 = vmatprep.subr.mxu0 0.0
        %653 = vmatpush2.xpose.msra.mxu0 0.0
        %654 = vmatprep.subr.mxu0 0.0
        %655 = vmatpush2.xpose.msra.mxu0 0.0
        %656 = vmatprep.subr.mxu0 0.0
        %657 = vmatpush2.xpose.msra.mxu0 0.0
        %658 = vmatprep.subr.mxu0 0.0
        %659 = vmatpush2.xpose.msra.mxu0 0.0
        %660 = vmatprep.subr.mxu0 0.0
        %661 = vmatpush2.xpose.msra.mxu0 0.0
        %662 = vmatprep.subr.mxu0 0.0
        %663 = vmatpush2.xpose.msra.mxu0 0.0
        %664 = vmatprep.subr.mxu0 0.0
        %665 = vmatpush2.xpose.msra.mxu0 0.0
        %666 = vmatprep.subr.mxu0 0.0
        %667 = vmatpush2.xpose.msra.mxu0 0.0
        %668 = vmatprep.subr.mxu0 0.0
        %669 = vmatpush2.xpose.msra.mxu0 0.0
        %670 = vmatprep.subr.mxu0 0.0
        %671 = vmatpush2.xpose.msra.mxu0 0.0
        %672 = vmatprep.subr.mxu0 0.0
        %673 = vmatpush2.xpose.msra.mxu0 0.0
        %674 = vmatprep.mubr.f32.mxu0 0.0
        %675 = vmatmul.mubr.f32.gmra.mxu0 %v606
        %v676 = vpop.f32.mrf.mxu0
        %v677 = vadd.f32 0.0, %v676
        %v678 = vpop.f32.mrf.mxu0
        %679 = vdwg.mxu0
        %v680 = vmul.f32 %v446, 0.35355338
        %v681 = vmul.f32 %v523, 0.35355338
        %v682 = vmul.f32 %v600, 0.35355338
        %v683 = vmul.f32 %v677, 0.35355338
        %v684 = vsel %vm374, %v680, -inf
        %685 = vmax.xlane.f32.xlu0 %v684
        %v686 = vpop.xlane.xlu0 %685
        %v687 = vsel %vm374, %v681, -inf
        %688 = vmax.xlane.f32.xlu0 %v687
        %v689 = vpop.xlane.xlu0 %688
        %v690 = vsel %vm374, %v682, -inf
        %691 = vmax.xlane.f32.xlu0 %v690
        %v692 = vpop.xlane.xlu0 %691
        %v693 = vsel %vm374, %v683, -inf
        %694 = vmax.xlane.f32.xlu0 %v693
        %v695 = vpop.xlane.xlu0 %694
        %v696 = vsub.f32 %v680, %v686
        %v697 = vsub.f32 %v681, %v689
        %v698 = vsub.f32 %v682, %v692
        %v699 = vsub.f32 %v683, %v695
        %v700 = vmul.f32 %v696, 1.442695
        %v701 = vpow.pop %v700
        %v702 = vmul.f32 %v697, 1.442695
        %v703 = vpow.pop %v702
        %v704 = vmul.f32 %v698, 1.442695
        %v705 = vpow.pop %v704
        %v706 = vmul.f32 %v699, 1.442695
        %v707 = vpow.pop %v706
        %v708 = vsel %vm374, %v701, 0.0
        %709 = vadd.xlane.f32.xlu0 %v708
        %v710 = vpop.xlane.xlu0 %709
        %v711 = vsel %vm374, %v703, 0.0
        %712 = vadd.xlane.f32.xlu0 %v711
        %v713 = vpop.xlane.xlu0 %712
        %v714 = vsel %vm374, %v705, 0.0
        %715 = vadd.xlane.f32.xlu0 %v714
        %v716 = vpop.xlane.xlu0 %715
        %v717 = vsel %vm374, %v707, 0.0
        %718 = vadd.xlane.f32.xlu0 %v717
        %v719 = vpop.xlane.xlu0 %718
        %v720 = vrcp.pop %v710
        %v721 = vmul.f32 %v701, %v720
        %v722 = vrcp.pop %v713
        %v723 = vmul.f32 %v703, %v722
        %v724 = vrcp.pop %v716
        %v725 = vmul.f32 %v705, %v724
        %v726 = vrcp.pop %v719
        %v727 = vmul.f32 %v707, %v726
        %728 = vrot.lane.b32.xlu0 %v353, 64
        %v729 = vpop.permute.xlu0 %728
        %v732 = vsel %vm374, %v721, 0
        %734 = vmatprep.subr.mxu0 0.0
        %735 = vmatpush1.msra.mxu0 0.0
        %736 = vmatprep.subr.mxu0 0.0
        %737 = vmatpush1.msra.mxu0 0.0
        %738 = vmatprep.subr.mxu0 0.0
        %739 = vmatpush1.msra.mxu0 0.0
        %740 = vmatprep.subr.mxu0 0.0
        %741 = vmatpush1.msra.mxu0 0.0
        %742 = vmatprep.subr.mxu0 0.0
        %743 = vmatpush1.msra.mxu0 0.0
        %744 = vmatprep.subr.mxu0 0.0
        %745 = vmatpush1.msra.mxu0 0.0
        %746 = vmatprep.subr.mxu0 0.0
        %747 = vmatpush1.msra.mxu0 0.0
        %748 = vmatprep.subr.mxu0 0.0
        %749 = vmatpush1.msra.mxu0 0.0
        %750 = vmatprep.subr.mxu0 0.0
        %751 = vmatpush1.msra.mxu0 0.0
        %752 = vmatprep.subr.mxu0 0.0
        %753 = vmatpush1.msra.mxu0 0.0
        %754 = vmatprep.subr.mxu0 0.0
        %755 = vmatpush1.msra.mxu0 0.0
        %756 = vmatprep.subr.mxu0 0.0
        %757 = vmatpush1.msra.mxu0 0.0
        %758 = vmatprep.subr.mxu0 0.0
        %759 = vmatpush1.msra.mxu0 0.0
        %760 = vmatprep.subr.mxu0 0.0
        %761 = vmatpush1.msra.mxu0 0.0
        %762 = vmatprep.subr.mxu0 0.0
        %763 = vmatpush1.msra.mxu0 0.0
        %764 = vmatprep.subr.mxu0 0.0
        %765 = vmatpush1.msra.mxu0 %v729
        %766 = vmatprep.subr.mxu0 0.0
        %767 = vmatpush2.msra.mxu0 0.0
        %768 = vmatprep.subr.mxu0 0.0
        %769 = vmatpush2.msra.mxu0 0.0
        %770 = vmatprep.subr.mxu0 0.0
        %771 = vmatpush2.msra.mxu0 0.0
        %772 = vmatprep.subr.mxu0 0.0
        %773 = vmatpush2.msra.mxu0 0.0
        %774 = vmatprep.subr.mxu0 0.0
        %775 = vmatpush2.msra.mxu0 0.0
        %776 = vmatprep.subr.mxu0 0.0
        %777 = vmatpush2.msra.mxu0 0.0
        %778 = vmatprep.subr.mxu0 0.0
        %779 = vmatpush2.msra.mxu0 0.0
        %780 = vmatprep.subr.mxu0 0.0
        %781 = vmatpush2.msra.mxu0 0.0
        %782 = vmatprep.subr.mxu0 0.0
        %783 = vmatpush2.msra.mxu0 0.0
        %784 = vmatprep.subr.mxu0 0.0
        %785 = vmatpush2.msra.mxu0 0.0
        %786 = vmatprep.subr.mxu0 0.0
        %787 = vmatpush2.msra.mxu0 0.0
        %788 = vmatprep.subr.mxu0 0.0
        %789 = vmatpush2.msra.mxu0 0.0
        %790 = vmatprep.subr.mxu0 0.0
        %791 = vmatpush2.msra.mxu0 0.0
        %792 = vmatprep.subr.mxu0 0.0
        %793 = vmatpush2.msra.mxu0 0.0
        %794 = vmatprep.subr.mxu0 0.0
        %795 = vmatpush2.msra.mxu0 0.0
        %796 = vmatprep.subr.mxu0 0.0
        %797 = vmatpush2.msra.mxu0 0.0
        %798 = vmatprep.mubr.f32.mxu0 0.0
        %799 = vmatmul.mubr.f32.gmra.mxu0 %v732
        %v800 = vpop.f32.mrf.mxu0
        %v801 = vadd.f32 0.0, %v800
        %v802 = vpop.f32.mrf.mxu0
        %803 = vdwg.mxu0
        %804 = vrot.lane.b32.xlu0 %v358, 64
        %v805 = vpop.permute.xlu0 %804
        %v808 = vsel %vm374, %v723, 0
        %810 = vmatprep.subr.mxu0 0.0
        %811 = vmatpush1.msra.mxu0 0.0
        %812 = vmatprep.subr.mxu0 0.0
        %813 = vmatpush1.msra.mxu0 0.0
        %814 = vmatprep.subr.mxu0 0.0
        %815 = vmatpush1.msra.mxu0 0.0
        %816 = vmatprep.subr.mxu0 0.0
        %817 = vmatpush1.msra.mxu0 0.0
        %818 = vmatprep.subr.mxu0 0.0
        %819 = vmatpush1.msra.mxu0 0.0
        %820 = vmatprep.subr.mxu0 0.0
        %821 = vmatpush1.msra.mxu0 0.0
        %822 = vmatprep.subr.mxu0 0.0
        %823 = vmatpush1.msra.mxu0 0.0
        %824 = vmatprep.subr.mxu0 0.0
        %825 = vmatpush1.msra.mxu0 0.0
        %826 = vmatprep.subr.mxu0 0.0
        %827 = vmatpush1.msra.mxu0 0.0
        %828 = vmatprep.subr.mxu0 0.0
        %829 = vmatpush1.msra.mxu0 0.0
        %830 = vmatprep.subr.mxu0 0.0
        %831 = vmatpush1.msra.mxu0 0.0
        %832 = vmatprep.subr.mxu0 0.0
        %833 = vmatpush1.msra.mxu0 0.0
        %834 = vmatprep.subr.mxu0 0.0
        %835 = vmatpush1.msra.mxu0 0.0
        %836 = vmatprep.subr.mxu0 0.0
        %837 = vmatpush1.msra.mxu0 0.0
        %838 = vmatprep.subr.mxu0 0.0
        %839 = vmatpush1.msra.mxu0 0.0
        %840 = vmatprep.subr.mxu0 0.0
        %841 = vmatpush1.msra.mxu0 %v805
        %842 = vmatprep.subr.mxu0 0.0
        %843 = vmatpush2.msra.mxu0 0.0
        %844 = vmatprep.subr.mxu0 0.0
        %845 = vmatpush2.msra.mxu0 0.0
        %846 = vmatprep.subr.mxu0 0.0
        %847 = vmatpush2.msra.mxu0 0.0
        %848 = vmatprep.subr.mxu0 0.0
        %849 = vmatpush2.msra.mxu0 0.0
        %850 = vmatprep.subr.mxu0 0.0
        %851 = vmatpush2.msra.mxu0 0.0
        %852 = vmatprep.subr.mxu0 0.0
        %853 = vmatpush2.msra.mxu0 0.0
        %854 = vmatprep.subr.mxu0 0.0
        %855 = vmatpush2.msra.mxu0 0.0
        %856 = vmatprep.subr.mxu0 0.0
        %857 = vmatpush2.msra.mxu0 0.0
        %858 = vmatprep.subr.mxu0 0.0
        %859 = vmatpush2.msra.mxu0 0.0
        %860 = vmatprep.subr.mxu0 0.0
        %861 = vmatpush2.msra.mxu0 0.0
        %862 = vmatprep.subr.mxu0 0.0
        %863 = vmatpush2.msra.mxu0 0.0
        %864 = vmatprep.subr.mxu0 0.0
        %865 = vmatpush2.msra.mxu0 0.0
        %866 = vmatprep.subr.mxu0 0.0
        %867 = vmatpush2.msra.mxu0 0.0
        %868 = vmatprep.subr.mxu0 0.0
        %869 = vmatpush2.msra.mxu0 0.0
        %870 = vmatprep.subr.mxu0 0.0
        %871 = vmatpush2.msra.mxu0 0.0
        %872 = vmatprep.subr.mxu0 0.0
        %873 = vmatpush2.msra.mxu0 0.0
        %874 = vmatprep.mubr.f32.mxu0 0.0
        %875 = vmatmul.mubr.f32.gmra.mxu0 %v808
        %v876 = vpop.f32.mrf.mxu0
        %v877 = vadd.f32 0.0, %v876
        %v878 = vpop.f32.mrf.mxu0
        %879 = vdwg.mxu0
        %880 = vrot.lane.b32.xlu0 %v363, 64
        %v881 = vpop.permute.xlu0 %880
        %v884 = vsel %vm374, %v725, 0
        %886 = vmatprep.subr.mxu0 0.0
        %887 = vmatpush1.msra.mxu0 0.0
        %888 = vmatprep.subr.mxu0 0.0
        %889 = vmatpush1.msra.mxu0 0.0
        %890 = vmatprep.subr.mxu0 0.0
        %891 = vmatpush1.msra.mxu0 0.0
        %892 = vmatprep.subr.mxu0 0.0
        %893 = vmatpush1.msra.mxu0 0.0
        %894 = vmatprep.subr.mxu0 0.0
        %895 = vmatpush1.msra.mxu0 0.0
        %896 = vmatprep.subr.mxu0 0.0
        %897 = vmatpush1.msra.mxu0 0.0
        %898 = vmatprep.subr.mxu0 0.0
        %899 = vmatpush1.msra.mxu0 0.0
        %900 = vmatprep.subr.mxu0 0.0
        %901 = vmatpush1.msra.mxu0 0.0
        %902 = vmatprep.subr.mxu0 0.0
        %903 = vmatpush1.msra.mxu0 0.0
        %904 = vmatprep.subr.mxu0 0.0
        %905 = vmatpush1.msra.mxu0 0.0
        %906 = vmatprep.subr.mxu0 0.0
        %907 = vmatpush1.msra.mxu0 0.0
        %908 = vmatprep.subr.mxu0 0.0
        %909 = vmatpush1.msra.mxu0 0.0
        %910 = vmatprep.subr.mxu0 0.0
        %911 = vmatpush1.msra.mxu0 0.0
        %912 = vmatprep.subr.mxu0 0.0
        %913 = vmatpush1.msra.mxu0 0.0
        %914 = vmatprep.subr.mxu0 0.0
        %915 = vmatpush1.msra.mxu0 0.0
        %916 = vmatprep.subr.mxu0 0.0
        %917 = vmatpush1.msra.mxu0 %v881
        %918 = vmatprep.subr.mxu0 0.0
        %919 = vmatpush2.msra.mxu0 0.0
        %920 = vmatprep.subr.mxu0 0.0
        %921 = vmatpush2.msra.mxu0 0.0
        %922 = vmatprep.subr.mxu0 0.0
        %923 = vmatpush2.msra.mxu0 0.0
        %924 = vmatprep.subr.mxu0 0.0
        %925 = vmatpush2.msra.mxu0 0.0
        %926 = vmatprep.subr.mxu0 0.0
        %927 = vmatpush2.msra.mxu0 0.0
        %928 = vmatprep.subr.mxu0 0.0
        %929 = vmatpush2.msra.mxu0 0.0
        %930 = vmatprep.subr.mxu0 0.0
        %931 = vmatpush2.msra.mxu0 0.0
        %932 = vmatprep.subr.mxu0 0.0
        %933 = vmatpush2.msra.mxu0 0.0
        %934 = vmatprep.subr.mxu0 0.0
        %935 = vmatpush2.msra.mxu0 0.0
        %936 = vmatprep.subr.mxu0 0.0
        %937 = vmatpush2.msra.mxu0 0.0
        %938 = vmatprep.subr.mxu0 0.0
        %939 = vmatpush2.msra.mxu0 0.0
        %940 = vmatprep.subr.mxu0 0.0
        %941 = vmatpush2.msra.mxu0 0.0
        %942 = vmatprep.subr.mxu0 0.0
        %943 = vmatpush2.msra.mxu0 0.0
        %944 = vmatprep.subr.mxu0 0.0
        %945 = vmatpush2.msra.mxu0 0.0
        %946 = vmatprep.subr.mxu0 0.0
        %947 = vmatpush2.msra.mxu0 0.0
        %948 = vmatprep.subr.mxu0 0.0
        %949 = vmatpush2.msra.mxu0 0.0
        %950 = vmatprep.mubr.f32.mxu0 0.0
        %951 = vmatmul.mubr.f32.gmra.mxu0 %v884
        %v952 = vpop.f32.mrf.mxu0
        %v953 = vadd.f32 0.0, %v952
        %v954 = vpop.f32.mrf.mxu0
        %955 = vdwg.mxu0
        %956 = vrot.lane.b32.xlu0 %v368, 64
        %v957 = vpop.permute.xlu0 %956
        %v960 = vsel %vm374, %v727, 0
        %962 = vmatprep.subr.mxu0 0.0
        %963 = vmatpush1.msra.mxu0 0.0
        %964 = vmatprep.subr.mxu0 0.0
        %965 = vmatpush1.msra.mxu0 0.0
        %966 = vmatprep.subr.mxu0 0.0
        %967 = vmatpush1.msra.mxu0 0.0
        %968 = vmatprep.subr.mxu0 0.0
        %969 = vmatpush1.msra.mxu0 0.0
        %970 = vmatprep.subr.mxu0 0.0
        %971 = vmatpush1.msra.mxu0 0.0
        %972 = vmatprep.subr.mxu0 0.0
        %973 = vmatpush1.msra.mxu0 0.0
        %974 = vmatprep.subr.mxu0 0.0
        %975 = vmatpush1.msra.mxu0 0.0
        %976 = vmatprep.subr.mxu0 0.0
        %977 = vmatpush1.msra.mxu0 0.0
        %978 = vmatprep.subr.mxu0 0.0
        %979 = vmatpush1.msra.mxu0 0.0
        %980 = vmatprep.subr.mxu0 0.0
        %981 = vmatpush1.msra.mxu0 0.0
        %982 = vmatprep.subr.mxu0 0.0
        %983 = vmatpush1.msra.mxu0 0.0
        %984 = vmatprep.subr.mxu0 0.0
        %985 = vmatpush1.msra.mxu0 0.0
        %986 = vmatprep.subr.mxu0 0.0
        %987 = vmatpush1.msra.mxu0 0.0
        %988 = vmatprep.subr.mxu0 0.0
        %989 = vmatpush1.msra.mxu0 0.0
        %990 = vmatprep.subr.mxu0 0.0
        %991 = vmatpush1.msra.mxu0 0.0
        %992 = vmatprep.subr.mxu0 0.0
        %993 = vmatpush1.msra.mxu0 %v957
        %994 = vmatprep.subr.mxu0 0.0
        %995 = vmatpush2.msra.mxu0 0.0
        %996 = vmatprep.subr.mxu0 0.0
        %997 = vmatpush2.msra.mxu0 0.0
        %998 = vmatprep.subr.mxu0 0.0
        %999 = vmatpush2.msra.mxu0 0.0
        %1000 = vmatprep.subr.mxu0 0.0
        %1001 = vmatpush2.msra.mxu0 0.0
        %1002 = vmatprep.subr.mxu0 0.0
        %1003 = vmatpush2.msra.mxu0 0.0
        %1004 = vmatprep.subr.mxu0 0.0
        %1005 = vmatpush2.msra.mxu0 0.0
        %1006 = vmatprep.subr.mxu0 0.0
        %1007 = vmatpush2.msra.mxu0 0.0
        %1008 = vmatprep.subr.mxu0 0.0
        %1009 = vmatpush2.msra.mxu0 0.0
        %1010 = vmatprep.subr.mxu0 0.0
        %1011 = vmatpush2.msra.mxu0 0.0
        %1012 = vmatprep.subr.mxu0 0.0
        %1013 = vmatpush2.msra.mxu0 0.0
        %1014 = vmatprep.subr.mxu0 0.0
        %1015 = vmatpush2.msra.mxu0 0.0
        %1016 = vmatprep.subr.mxu0 0.0
        %1017 = vmatpush2.msra.mxu0 0.0
        %1018 = vmatprep.subr.mxu0 0.0
        %1019 = vmatpush2.msra.mxu0 0.0
        %1020 = vmatprep.subr.mxu0 0.0
        %1021 = vmatpush2.msra.mxu0 0.0
        %1022 = vmatprep.subr.mxu0 0.0
        %1023 = vmatpush2.msra.mxu0 0.0
        %1024 = vmatprep.subr.mxu0 0.0
        %1025 = vmatpush2.msra.mxu0 0.0
        %1026 = vmatprep.mubr.f32.mxu0 0.0
        %1027 = vmatmul.mubr.f32.gmra.mxu0 %v960
        %v1028 = vpop.f32.mrf.mxu0
        %v1029 = vadd.f32 0.0, %v1028
        %v1030 = vpop.f32.mrf.mxu0
        %1031 = vdwg.mxu0
        %1032 = vst.msk [vmem:[#allocation2] sm:$0xff] %vm374, %v801
        %1033 = vst.msk [vmem:[#allocation2 + $0x8] sm:$0xff] %vm374, %v877
        %1034 = vst.msk [vmem:[#allocation2 + $0x10] sm:$0xff] %vm374, %v953
        %1035 = vst.msk [vmem:[#allocation2 + $0x18] sm:$0xff] %vm374, %v1029
        %1036 = vrot.lane.b32.xlu0 %v353, 120
        %v1037 = vpop.permute.xlu0 %1036
        %1038 = vrot.lane.b32.xlu0 %v353, 88
        %v1039 = vpop.permute.xlu0 %1038
        %v1040 = vsel %vm374, %v1037, 0
        %v1042 = vsel %vm374, %v1039, 0
        %1044 = vmatprep.subr.mxu0 0.0
        %1045 = vmatpush1.xpose.msra.mxu0 0.0
        %1046 = vmatprep.subr.mxu0 0.0
        %1047 = vmatpush1.xpose.msra.mxu0 0.0
        %1048 = vmatprep.subr.mxu0 0.0
        %1049 = vmatpush1.xpose.msra.mxu0 0.0
        %1050 = vmatprep.subr.mxu0 0.0
        %1051 = vmatpush1.xpose.msra.mxu0 0.0
        %1052 = vmatprep.subr.mxu0 0.0
        %1053 = vmatpush1.xpose.msra.mxu0 0.0
        %1054 = vmatprep.subr.mxu0 0.0
        %1055 = vmatpush1.xpose.msra.mxu0 0.0
        %1056 = vmatprep.subr.mxu0 0.0
        %1057 = vmatpush1.xpose.msra.mxu0 0.0
        %1058 = vmatprep.subr.mxu0 0.0
        %1059 = vmatpush1.xpose.msra.mxu0 0.0
        %1060 = vmatprep.subr.mxu0 0.0
        %1061 = vmatpush1.xpose.msra.mxu0 0.0
        %1062 = vmatprep.subr.mxu0 0.0
        %1063 = vmatpush1.xpose.msra.mxu0 0.0
        %1064 = vmatprep.subr.mxu0 0.0
        %1065 = vmatpush1.xpose.msra.mxu0 0.0
        %1066 = vmatprep.subr.mxu0 0.0
        %1067 = vmatpush1.xpose.msra.mxu0 0.0
        %1068 = vmatprep.subr.mxu0 0.0
        %1069 = vmatpush1.xpose.msra.mxu0 0.0
        %1070 = vmatprep.subr.mxu0 0.0
        %1071 = vmatpush1.xpose.msra.mxu0 0.0
        %1072 = vmatprep.subr.mxu0 0.0
        %1073 = vmatpush1.xpose.msra.mxu0 0.0
        %1074 = vmatprep.subr.mxu0 0.0
        %1075 = vmatpush1.xpose.msra.mxu0 %v1042
        %1076 = vmatprep.subr.mxu0 0.0
        %1077 = vmatpush2.xpose.msra.mxu0 0.0
        %1078 = vmatprep.subr.mxu0 0.0
        %1079 = vmatpush2.xpose.msra.mxu0 0.0
        %1080 = vmatprep.subr.mxu0 0.0
        %1081 = vmatpush2.xpose.msra.mxu0 0.0
        %1082 = vmatprep.subr.mxu0 0.0
        %1083 = vmatpush2.xpose.msra.mxu0 0.0
        %1084 = vmatprep.subr.mxu0 0.0
        %1085 = vmatpush2.xpose.msra.mxu0 0.0
        %1086 = vmatprep.subr.mxu0 0.0
        %1087 = vmatpush2.xpose.msra.mxu0 0.0
        %1088 = vmatprep.subr.mxu0 0.0
        %1089 = vmatpush2.xpose.msra.mxu0 0.0
        %1090 = vmatprep.subr.mxu0 0.0
        %1091 = vmatpush2.xpose.msra.mxu0 0.0
        %1092 = vmatprep.subr.mxu0 0.0
        %1093 = vmatpush2.xpose.msra.mxu0 0.0
        %1094 = vmatprep.subr.mxu0 0.0
        %1095 = vmatpush2.xpose.msra.mxu0 0.0
        %1096 = vmatprep.subr.mxu0 0.0
        %1097 = vmatpush2.xpose.msra.mxu0 0.0
        %1098 = vmatprep.subr.mxu0 0.0
        %1099 = vmatpush2.xpose.msra.mxu0 0.0
        %1100 = vmatprep.subr.mxu0 0.0
        %1101 = vmatpush2.xpose.msra.mxu0 0.0
        %1102 = vmatprep.subr.mxu0 0.0
        %1103 = vmatpush2.xpose.msra.mxu0 0.0
        %1104 = vmatprep.subr.mxu0 0.0
        %1105 = vmatpush2.xpose.msra.mxu0 0.0
        %1106 = vmatprep.subr.mxu0 0.0
        %1107 = vmatpush2.xpose.msra.mxu0 0.0
        %1108 = vmatprep.mubr.f32.mxu0 0.0
        %1109 = vmatmul.mubr.f32.gmra.mxu0 %v1040
        %v1110 = vpop.f32.mrf.mxu0
        %v1111 = vadd.f32 0.0, %v1110
        %v1112 = vpop.f32.mrf.mxu0
        %1113 = vdwg.mxu0
        %1114 = vrot.lane.b32.xlu0 %v358, 120
        %v1115 = vpop.permute.xlu0 %1114
        %1116 = vrot.lane.b32.xlu0 %v358, 88
        %v1117 = vpop.permute.xlu0 %1116
        %v1118 = vsel %vm374, %v1115, 0
        %v1120 = vsel %vm374, %v1117, 0
        %1122 = vmatprep.subr.mxu0 0.0
        %1123 = vmatpush1.xpose.msra.mxu0 0.0
        %1124 = vmatprep.subr.mxu0 0.0
        %1125 = vmatpush1.xpose.msra.mxu0 0.0
        %1126 = vmatprep.subr.mxu0 0.0
        %1127 = vmatpush1.xpose.msra.mxu0 0.0
        %1128 = vmatprep.subr.mxu0 0.0
        %1129 = vmatpush1.xpose.msra.mxu0 0.0
        %1130 = vmatprep.subr.mxu0 0.0
        %1131 = vmatpush1.xpose.msra.mxu0 0.0
        %1132 = vmatprep.subr.mxu0 0.0
        %1133 = vmatpush1.xpose.msra.mxu0 0.0
        %1134 = vmatprep.subr.mxu0 0.0
        %1135 = vmatpush1.xpose.msra.mxu0 0.0
        %1136 = vmatprep.subr.mxu0 0.0
        %1137 = vmatpush1.xpose.msra.mxu0 0.0
        %1138 = vmatprep.subr.mxu0 0.0
        %1139 = vmatpush1.xpose.msra.mxu0 0.0
        %1140 = vmatprep.subr.mxu0 0.0
        %1141 = vmatpush1.xpose.msra.mxu0 0.0
        %1142 = vmatprep.subr.mxu0 0.0
        %1143 = vmatpush1.xpose.msra.mxu0 0.0
        %1144 = vmatprep.subr.mxu0 0.0
        %1145 = vmatpush1.xpose.msra.mxu0 0.0
        %1146 = vmatprep.subr.mxu0 0.0
        %1147 = vmatpush1.xpose.msra.mxu0 0.0
        %1148 = vmatprep.subr.mxu0 0.0
        %1149 = vmatpush1.xpose.msra.mxu0 0.0
        %1150 = vmatprep.subr.mxu0 0.0
        %1151 = vmatpush1.xpose.msra.mxu0 0.0
        %1152 = vmatprep.subr.mxu0 0.0
        %1153 = vmatpush1.xpose.msra.mxu0 %v1120
        %1154 = vmatprep.subr.mxu0 0.0
        %1155 = vmatpush2.xpose.msra.mxu0 0.0
        %1156 = vmatprep.subr.mxu0 0.0
        %1157 = vmatpush2.xpose.msra.mxu0 0.0
        %1158 = vmatprep.subr.mxu0 0.0
        %1159 = vmatpush2.xpose.msra.mxu0 0.0
        %1160 = vmatprep.subr.mxu0 0.0
        %1161 = vmatpush2.xpose.msra.mxu0 0.0
        %1162 = vmatprep.subr.mxu0 0.0
        %1163 = vmatpush2.xpose.msra.mxu0 0.0
        %1164 = vmatprep.subr.mxu0 0.0
        %1165 = vmatpush2.xpose.msra.mxu0 0.0
        %1166 = vmatprep.subr.mxu0 0.0
        %1167 = vmatpush2.xpose.msra.mxu0 0.0
        %1168 = vmatprep.subr.mxu0 0.0
        %1169 = vmatpush2.xpose.msra.mxu0 0.0
        %1170 = vmatprep.subr.mxu0 0.0
        %1171 = vmatpush2.xpose.msra.mxu0 0.0
        %1172 = vmatprep.subr.mxu0 0.0
        %1173 = vmatpush2.xpose.msra.mxu0 0.0
        %1174 = vmatprep.subr.mxu0 0.0
        %1175 = vmatpush2.xpose.msra.mxu0 0.0
        %1176 = vmatprep.subr.mxu0 0.0
        %1177 = vmatpush2.xpose.msra.mxu0 0.0
        %1178 = vmatprep.subr.mxu0 0.0
        %1179 = vmatpush2.xpose.msra.mxu0 0.0
        %1180 = vmatprep.subr.mxu0 0.0
        %1181 = vmatpush2.xpose.msra.mxu0 0.0
        %1182 = vmatprep.subr.mxu0 0.0
        %1183 = vmatpush2.xpose.msra.mxu0 0.0
        %1184 = vmatprep.subr.mxu0 0.0
        %1185 = vmatpush2.xpose.msra.mxu0 0.0
        %1186 = vmatprep.mubr.f32.mxu0 0.0
        %1187 = vmatmul.mubr.f32.gmra.mxu0 %v1118
        %v1188 = vpop.f32.mrf.mxu0
        %v1189 = vadd.f32 0.0, %v1188
        %v1190 = vpop.f32.mrf.mxu0
        %1191 = vdwg.mxu0
        %1192 = vrot.lane.b32.xlu0 %v363, 120
        %v1193 = vpop.permute.xlu0 %1192
        %1194 = vrot.lane.b32.xlu0 %v363, 88
        %v1195 = vpop.permute.xlu0 %1194
        %v1196 = vsel %vm374, %v1193, 0
        %v1198 = vsel %vm374, %v1195, 0
        %1200 = vmatprep.subr.mxu0 0.0
        %1201 = vmatpush1.xpose.msra.mxu0 0.0
        %1202 = vmatprep.subr.mxu0 0.0
        %1203 = vmatpush1.xpose.msra.mxu0 0.0
        %1204 = vmatprep.subr.mxu0 0.0
        %1205 = vmatpush1.xpose.msra.mxu0 0.0
        %1206 = vmatprep.subr.mxu0 0.0
        %1207 = vmatpush1.xpose.msra.mxu0 0.0
        %1208 = vmatprep.subr.mxu0 0.0
        %1209 = vmatpush1.xpose.msra.mxu0 0.0
        %1210 = vmatprep.subr.mxu0 0.0
        %1211 = vmatpush1.xpose.msra.mxu0 0.0
        %1212 = vmatprep.subr.mxu0 0.0
        %1213 = vmatpush1.xpose.msra.mxu0 0.0
        %1214 = vmatprep.subr.mxu0 0.0
        %1215 = vmatpush1.xpose.msra.mxu0 0.0
        %1216 = vmatprep.subr.mxu0 0.0
        %1217 = vmatpush1.xpose.msra.mxu0 0.0
        %1218 = vmatprep.subr.mxu0 0.0
        %1219 = vmatpush1.xpose.msra.mxu0 0.0
        %1220 = vmatprep.subr.mxu0 0.0
        %1221 = vmatpush1.xpose.msra.mxu0 0.0
        %1222 = vmatprep.subr.mxu0 0.0
        %1223 = vmatpush1.xpose.msra.mxu0 0.0
        %1224 = vmatprep.subr.mxu0 0.0
        %1225 = vmatpush1.xpose.msra.mxu0 0.0
        %1226 = vmatprep.subr.mxu0 0.0
        %1227 = vmatpush1.xpose.msra.mxu0 0.0
        %1228 = vmatprep.subr.mxu0 0.0
        %1229 = vmatpush1.xpose.msra.mxu0 0.0
        %1230 = vmatprep.subr.mxu0 0.0
        %1231 = vmatpush1.xpose.msra.mxu0 %v1198
        %1232 = vmatprep.subr.mxu0 0.0
        %1233 = vmatpush2.xpose.msra.mxu0 0.0
        %1234 = vmatprep.subr.mxu0 0.0
        %1235 = vmatpush2.xpose.msra.mxu0 0.0
        %1236 = vmatprep.subr.mxu0 0.0
        %1237 = vmatpush2.xpose.msra.mxu0 0.0
        %1238 = vmatprep.subr.mxu0 0.0
        %1239 = vmatpush2.xpose.msra.mxu0 0.0
        %1240 = vmatprep.subr.mxu0 0.0
        %1241 = vmatpush2.xpose.msra.mxu0 0.0
        %1242 = vmatprep.subr.mxu0 0.0
        %1243 = vmatpush2.xpose.msra.mxu0 0.0
        %1244 = vmatprep.subr.mxu0 0.0
        %1245 = vmatpush2.xpose.msra.mxu0 0.0
        %1246 = vmatprep.subr.mxu0 0.0
        %1247 = vmatpush2.xpose.msra.mxu0 0.0
        %1248 = vmatprep.subr.mxu0 0.0
        %1249 = vmatpush2.xpose.msra.mxu0 0.0
        %1250 = vmatprep.subr.mxu0 0.0
        %1251 = vmatpush2.xpose.msra.mxu0 0.0
        %1252 = vmatprep.subr.mxu0 0.0
        %1253 = vmatpush2.xpose.msra.mxu0 0.0
        %1254 = vmatprep.subr.mxu0 0.0
        %1255 = vmatpush2.xpose.msra.mxu0 0.0
        %1256 = vmatprep.subr.mxu0 0.0
        %1257 = vmatpush2.xpose.msra.mxu0 0.0
        %1258 = vmatprep.subr.mxu0 0.0
        %1259 = vmatpush2.xpose.msra.mxu0 0.0
        %1260 = vmatprep.subr.mxu0 0.0
        %1261 = vmatpush2.xpose.msra.mxu0 0.0
        %1262 = vmatprep.subr.mxu0 0.0
        %1263 = vmatpush2.xpose.msra.mxu0 0.0
        %1264 = vmatprep.mubr.f32.mxu0 0.0
        %1265 = vmatmul.mubr.f32.gmra.mxu0 %v1196
        %v1266 = vpop.f32.mrf.mxu0
        %v1267 = vadd.f32 0.0, %v1266
        %v1268 = vpop.f32.mrf.mxu0
        %1269 = vdwg.mxu0
        %1270 = vrot.lane.b32.xlu0 %v368, 120
        %v1271 = vpop.permute.xlu0 %1270
        %1272 = vrot.lane.b32.xlu0 %v368, 88
        %v1273 = vpop.permute.xlu0 %1272
        %v1274 = vsel %vm374, %v1271, 0
        %v1276 = vsel %vm374, %v1273, 0
        %1278 = vmatprep.subr.mxu0 0.0
        %1279 = vmatpush1.xpose.msra.mxu0 0.0
        %1280 = vmatprep.subr.mxu0 0.0
        %1281 = vmatpush1.xpose.msra.mxu0 0.0
        %1282 = vmatprep.subr.mxu0 0.0
        %1283 = vmatpush1.xpose.msra.mxu0 0.0
        %1284 = vmatprep.subr.mxu0 0.0
        %1285 = vmatpush1.xpose.msra.mxu0 0.0
        %1286 = vmatprep.subr.mxu0 0.0
        %1287 = vmatpush1.xpose.msra.mxu0 0.0
        %1288 = vmatprep.subr.mxu0 0.0
        %1289 = vmatpush1.xpose.msra.mxu0 0.0
        %1290 = vmatprep.subr.mxu0 0.0
        %1291 = vmatpush1.xpose.msra.mxu0 0.0
        %1292 = vmatprep.subr.mxu0 0.0
        %1293 = vmatpush1.xpose.msra.mxu0 0.0
        %1294 = vmatprep.subr.mxu0 0.0
        %1295 = vmatpush1.xpose.msra.mxu0 0.0
        %1296 = vmatprep.subr.mxu0 0.0
        %1297 = vmatpush1.xpose.msra.mxu0 0.0
        %1298 = vmatprep.subr.mxu0 0.0
        %1299 = vmatpush1.xpose.msra.mxu0 0.0
        %1300 = vmatprep.subr.mxu0 0.0
        %1301 = vmatpush1.xpose.msra.mxu0 0.0
        %1302 = vmatprep.subr.mxu0 0.0
        %1303 = vmatpush1.xpose.msra.mxu0 0.0
        %1304 = vmatprep.subr.mxu0 0.0
        %1305 = vmatpush1.xpose.msra.mxu0 0.0
        %1306 = vmatprep.subr.mxu0 0.0
        %1307 = vmatpush1.xpose.msra.mxu0 0.0
        %1308 = vmatprep.subr.mxu0 0.0
        %1309 = vmatpush1.xpose.msra.mxu0 %v1276
        %1310 = vmatprep.subr.mxu0 0.0
        %1311 = vmatpush2.xpose.msra.mxu0 0.0
        %1312 = vmatprep.subr.mxu0 0.0
        %1313 = vmatpush2.xpose.msra.mxu0 0.0
        %1314 = vmatprep.subr.mxu0 0.0
        %1315 = vmatpush2.xpose.msra.mxu0 0.0
        %1316 = vmatprep.subr.mxu0 0.0
        %1317 = vmatpush2.xpose.msra.mxu0 0.0
        %1318 = vmatprep.subr.mxu0 0.0
        %1319 = vmatpush2.xpose.msra.mxu0 0.0
        %1320 = vmatprep.subr.mxu0 0.0
        %1321 = vmatpush2.xpose.msra.mxu0 0.0
        %1322 = vmatprep.subr.mxu0 0.0
        %1323 = vmatpush2.xpose.msra.mxu0 0.0
        %1324 = vmatprep.subr.mxu0 0.0
        %1325 = vmatpush2.xpose.msra.mxu0 0.0
        %1326 = vmatprep.subr.mxu0 0.0
        %1327 = vmatpush2.xpose.msra.mxu0 0.0
        %1328 = vmatprep.subr.mxu0 0.0
        %1329 = vmatpush2.xpose.msra.mxu0 0.0
        %1330 = vmatprep.subr.mxu0 0.0
        %1331 = vmatpush2.xpose.msra.mxu0 0.0
        %1332 = vmatprep.subr.mxu0 0.0
        %1333 = vmatpush2.xpose.msra.mxu0 0.0
        %1334 = vmatprep.subr.mxu0 0.0
        %1335 = vmatpush2.xpose.msra.mxu0 0.0
        %1336 = vmatprep.subr.mxu0 0.0
        %1337 = vmatpush2.xpose.msra.mxu0 0.0
        %1338 = vmatprep.subr.mxu0 0.0
        %1339 = vmatpush2.xpose.msra.mxu0 0.0
        %1340 = vmatprep.subr.mxu0 0.0
        %1341 = vmatpush2.xpose.msra.mxu0 0.0
        %1342 = vmatprep.mubr.f32.mxu0 0.0
        %1343 = vmatmul.mubr.f32.gmra.mxu0 %v1274
        %v1344 = vpop.f32.mrf.mxu0
        %v1345 = vadd.f32 0.0, %v1344
        %v1346 = vpop.f32.mrf.mxu0
        %1347 = vdwg.mxu0
        %v1348 = vmul.f32 %v1111, 0.35355338
        %v1349 = vmul.f32 %v1189, 0.35355338
        %v1350 = vmul.f32 %v1267, 0.35355338
        %v1351 = vmul.f32 %v1345, 0.35355338
        %v1352 = vsel %vm374, %v1348, -inf
        %1353 = vmax.xlane.f32.xlu0 %v1352
        %v1354 = vpop.xlane.xlu0 %1353
        %v1355 = vsel %vm374, %v1349, -inf
        %1356 = vmax.xlane.f32.xlu0 %v1355
        %v1357 = vpop.xlane.xlu0 %1356
        %v1358 = vsel %vm374, %v1350, -inf
        %1359 = vmax.xlane.f32.xlu0 %v1358
        %v1360 = vpop.xlane.xlu0 %1359
        %v1361 = vsel %vm374, %v1351, -inf
        %1362 = vmax.xlane.f32.xlu0 %v1361
        %v1363 = vpop.xlane.xlu0 %1362
        %v1364 = vsub.f32 %v1348, %v1354
        %v1365 = vsub.f32 %v1349, %v1357
        %v1366 = vsub.f32 %v1350, %v1360
        %v1367 = vsub.f32 %v1351, %v1363
        %v1368 = vmul.f32 %v1364, 1.442695
        %v1369 = vpow.pop %v1368
        %v1370 = vmul.f32 %v1365, 1.442695
        %v1371 = vpow.pop %v1370
        %v1372 = vmul.f32 %v1366, 1.442695
        %v1373 = vpow.pop %v1372
        %v1374 = vmul.f32 %v1367, 1.442695
        %v1375 = vpow.pop %v1374
        %v1376 = vsel %vm374, %v1369, 0.0
        %1377 = vadd.xlane.f32.xlu0 %v1376
        %v1378 = vpop.xlane.xlu0 %1377
        %v1379 = vsel %vm374, %v1371, 0.0
        %1380 = vadd.xlane.f32.xlu0 %v1379
        %v1381 = vpop.xlane.xlu0 %1380
        %v1382 = vsel %vm374, %v1373, 0.0
        %1383 = vadd.xlane.f32.xlu0 %v1382
        %v1384 = vpop.xlane.xlu0 %1383
        %v1385 = vsel %vm374, %v1375, 0.0
        %1386 = vadd.xlane.f32.xlu0 %v1385
        %v1387 = vpop.xlane.xlu0 %1386
        %v1388 = vrcp.pop %v1378
        %v1389 = vmul.f32 %v1369, %v1388
        %v1390 = vrcp.pop %v1381
        %v1391 = vmul.f32 %v1371, %v1390
        %v1392 = vrcp.pop %v1384
        %v1393 = vmul.f32 %v1373, %v1392
        %v1394 = vrcp.pop %v1387
        %v1395 = vmul.f32 %v1375, %v1394
        %1396 = vrot.lane.b32.xlu0 %v353, 56
        %v1397 = vpop.permute.xlu0 %1396
        %v1400 = vsel %vm374, %v1389, 0
        %1402 = vmatprep.subr.mxu0 0.0
        %1403 = vmatpush1.msra.mxu0 0.0
        %1404 = vmatprep.subr.mxu0 0.0
        %1405 = vmatpush1.msra.mxu0 0.0
        %1406 = vmatprep.subr.mxu0 0.0
        %1407 = vmatpush1.msra.mxu0 0.0
        %1408 = vmatprep.subr.mxu0 0.0
        %1409 = vmatpush1.msra.mxu0 0.0
        %1410 = vmatprep.subr.mxu0 0.0
        %1411 = vmatpush1.msra.mxu0 0.0
        %1412 = vmatprep.subr.mxu0 0.0
        %1413 = vmatpush1.msra.mxu0 0.0
        %1414 = vmatprep.subr.mxu0 0.0
        %1415 = vmatpush1.msra.mxu0 0.0
        %1416 = vmatprep.subr.mxu0 0.0
        %1417 = vmatpush1.msra.mxu0 0.0
        %1418 = vmatprep.subr.mxu0 0.0
        %1419 = vmatpush1.msra.mxu0 0.0
        %1420 = vmatprep.subr.mxu0 0.0
        %1421 = vmatpush1.msra.mxu0 0.0
        %1422 = vmatprep.subr.mxu0 0.0
        %1423 = vmatpush1.msra.mxu0 0.0
        %1424 = vmatprep.subr.mxu0 0.0
        %1425 = vmatpush1.msra.mxu0 0.0
        %1426 = vmatprep.subr.mxu0 0.0
        %1427 = vmatpush1.msra.mxu0 0.0
        %1428 = vmatprep.subr.mxu0 0.0
        %1429 = vmatpush1.msra.mxu0 0.0
        %1430 = vmatprep.subr.mxu0 0.0
        %1431 = vmatpush1.msra.mxu0 0.0
        %1432 = vmatprep.subr.mxu0 0.0
        %1433 = vmatpush1.msra.mxu0 %v1397
        %1434 = vmatprep.subr.mxu0 0.0
        %1435 = vmatpush2.msra.mxu0 0.0
        %1436 = vmatprep.subr.mxu0 0.0
        %1437 = vmatpush2.msra.mxu0 0.0
        %1438 = vmatprep.subr.mxu0 0.0
        %1439 = vmatpush2.msra.mxu0 0.0
        %1440 = vmatprep.subr.mxu0 0.0
        %1441 = vmatpush2.msra.mxu0 0.0
        %1442 = vmatprep.subr.mxu0 0.0
        %1443 = vmatpush2.msra.mxu0 0.0
        %1444 = vmatprep.subr.mxu0 0.0
        %1445 = vmatpush2.msra.mxu0 0.0
        %1446 = vmatprep.subr.mxu0 0.0
        %1447 = vmatpush2.msra.mxu0 0.0
        %1448 = vmatprep.subr.mxu0 0.0
        %1449 = vmatpush2.msra.mxu0 0.0
        %1450 = vmatprep.subr.mxu0 0.0
        %1451 = vmatpush2.msra.mxu0 0.0
        %1452 = vmatprep.subr.mxu0 0.0
        %1453 = vmatpush2.msra.mxu0 0.0
        %1454 = vmatprep.subr.mxu0 0.0
        %1455 = vmatpush2.msra.mxu0 0.0
        %1456 = vmatprep.subr.mxu0 0.0
        %1457 = vmatpush2.msra.mxu0 0.0
        %1458 = vmatprep.subr.mxu0 0.0
        %1459 = vmatpush2.msra.mxu0 0.0
        %1460 = vmatprep.subr.mxu0 0.0
        %1461 = vmatpush2.msra.mxu0 0.0
        %1462 = vmatprep.subr.mxu0 0.0
        %1463 = vmatpush2.msra.mxu0 0.0
        %1464 = vmatprep.subr.mxu0 0.0
        %1465 = vmatpush2.msra.mxu0 0.0
        %1466 = vmatprep.mubr.f32.mxu0 0.0
        %1467 = vmatmul.mubr.f32.gmra.mxu0 %v1400
        %v1468 = vpop.f32.mrf.mxu0
        %v1469 = vadd.f32 0.0, %v1468
        %v1470 = vpop.f32.mrf.mxu0
        %1471 = vdwg.mxu0
        %1472 = vrot.lane.b32.xlu0 %v358, 56
        %v1473 = vpop.permute.xlu0 %1472
        %v1476 = vsel %vm374, %v1391, 0
        %1478 = vmatprep.subr.mxu0 0.0
        %1479 = vmatpush1.msra.mxu0 0.0
        %1480 = vmatprep.subr.mxu0 0.0
        %1481 = vmatpush1.msra.mxu0 0.0
        %1482 = vmatprep.subr.mxu0 0.0
        %1483 = vmatpush1.msra.mxu0 0.0
        %1484 = vmatprep.subr.mxu0 0.0
        %1485 = vmatpush1.msra.mxu0 0.0
        %1486 = vmatprep.subr.mxu0 0.0
        %1487 = vmatpush1.msra.mxu0 0.0
        %1488 = vmatprep.subr.mxu0 0.0
        %1489 = vmatpush1.msra.mxu0 0.0
        %1490 = vmatprep.subr.mxu0 0.0
        %1491 = vmatpush1.msra.mxu0 0.0
        %1492 = vmatprep.subr.mxu0 0.0
        %1493 = vmatpush1.msra.mxu0 0.0
        %1494 = vmatprep.subr.mxu0 0.0
        %1495 = vmatpush1.msra.mxu0 0.0
        %1496 = vmatprep.subr.mxu0 0.0
        %1497 = vmatpush1.msra.mxu0 0.0
        %1498 = vmatprep.subr.mxu0 0.0
        %1499 = vmatpush1.msra.mxu0 0.0
        %1500 = vmatprep.subr.mxu0 0.0
        %1501 = vmatpush1.msra.mxu0 0.0
        %1502 = vmatprep.subr.mxu0 0.0
        %1503 = vmatpush1.msra.mxu0 0.0
        %1504 = vmatprep.subr.mxu0 0.0
        %1505 = vmatpush1.msra.mxu0 0.0
        %1506 = vmatprep.subr.mxu0 0.0
        %1507 = vmatpush1.msra.mxu0 0.0
        %1508 = vmatprep.subr.mxu0 0.0
        %1509 = vmatpush1.msra.mxu0 %v1473
        %1510 = vmatprep.subr.mxu0 0.0
        %1511 = vmatpush2.msra.mxu0 0.0
        %1512 = vmatprep.subr.mxu0 0.0
        %1513 = vmatpush2.msra.mxu0 0.0
        %1514 = vmatprep.subr.mxu0 0.0
        %1515 = vmatpush2.msra.mxu0 0.0
        %1516 = vmatprep.subr.mxu0 0.0
        %1517 = vmatpush2.msra.mxu0 0.0
        %1518 = vmatprep.subr.mxu0 0.0
        %1519 = vmatpush2.msra.mxu0 0.0
        %1520 = vmatprep.subr.mxu0 0.0
        %1521 = vmatpush2.msra.mxu0 0.0
        %1522 = vmatprep.subr.mxu0 0.0
        %1523 = vmatpush2.msra.mxu0 0.0
        %1524 = vmatprep.subr.mxu0 0.0
        %1525 = vmatpush2.msra.mxu0 0.0
        %1526 = vmatprep.subr.mxu0 0.0
        %1527 = vmatpush2.msra.mxu0 0.0
        %1528 = vmatprep.subr.mxu0 0.0
        %1529 = vmatpush2.msra.mxu0 0.0
        %1530 = vmatprep.subr.mxu0 0.0
        %1531 = vmatpush2.msra.mxu0 0.0
        %1532 = vmatprep.subr.mxu0 0.0
        %1533 = vmatpush2.msra.mxu0 0.0
        %1534 = vmatprep.subr.mxu0 0.0
        %1535 = vmatpush2.msra.mxu0 0.0
        %1536 = vmatprep.subr.mxu0 0.0
        %1537 = vmatpush2.msra.mxu0 0.0
        %1538 = vmatprep.subr.mxu0 0.0
        %1539 = vmatpush2.msra.mxu0 0.0
        %1540 = vmatprep.subr.mxu0 0.0
        %1541 = vmatpush2.msra.mxu0 0.0
        %1542 = vmatprep.mubr.f32.mxu0 0.0
        %1543 = vmatmul.mubr.f32.gmra.mxu0 %v1476
        %v1544 = vpop.f32.mrf.mxu0
        %v1545 = vadd.f32 0.0, %v1544
        %v1546 = vpop.f32.mrf.mxu0
        %1547 = vdwg.mxu0
        %1548 = vrot.lane.b32.xlu0 %v363, 56
        %v1549 = vpop.permute.xlu0 %1548
        %v1552 = vsel %vm374, %v1393, 0
        %1554 = vmatprep.subr.mxu0 0.0
        %1555 = vmatpush1.msra.mxu0 0.0
        %1556 = vmatprep.subr.mxu0 0.0
        %1557 = vmatpush1.msra.mxu0 0.0
        %1558 = vmatprep.subr.mxu0 0.0
        %1559 = vmatpush1.msra.mxu0 0.0
        %1560 = vmatprep.subr.mxu0 0.0
        %1561 = vmatpush1.msra.mxu0 0.0
        %1562 = vmatprep.subr.mxu0 0.0
        %1563 = vmatpush1.msra.mxu0 0.0
        %1564 = vmatprep.subr.mxu0 0.0
        %1565 = vmatpush1.msra.mxu0 0.0
        %1566 = vmatprep.subr.mxu0 0.0
        %1567 = vmatpush1.msra.mxu0 0.0
        %1568 = vmatprep.subr.mxu0 0.0
        %1569 = vmatpush1.msra.mxu0 0.0
        %1570 = vmatprep.subr.mxu0 0.0
        %1571 = vmatpush1.msra.mxu0 0.0
        %1572 = vmatprep.subr.mxu0 0.0
        %1573 = vmatpush1.msra.mxu0 0.0
        %1574 = vmatprep.subr.mxu0 0.0
        %1575 = vmatpush1.msra.mxu0 0.0
        %1576 = vmatprep.subr.mxu0 0.0
        %1577 = vmatpush1.msra.mxu0 0.0
        %1578 = vmatprep.subr.mxu0 0.0
        %1579 = vmatpush1.msra.mxu0 0.0
        %1580 = vmatprep.subr.mxu0 0.0
        %1581 = vmatpush1.msra.mxu0 0.0
        %1582 = vmatprep.subr.mxu0 0.0
        %1583 = vmatpush1.msra.mxu0 0.0
        %1584 = vmatprep.subr.mxu0 0.0
        %1585 = vmatpush1.msra.mxu0 %v1549
        %1586 = vmatprep.subr.mxu0 0.0
        %1587 = vmatpush2.msra.mxu0 0.0
        %1588 = vmatprep.subr.mxu0 0.0
        %1589 = vmatpush2.msra.mxu0 0.0
        %1590 = vmatprep.subr.mxu0 0.0
        %1591 = vmatpush2.msra.mxu0 0.0
        %1592 = vmatprep.subr.mxu0 0.0
        %1593 = vmatpush2.msra.mxu0 0.0
        %1594 = vmatprep.subr.mxu0 0.0
        %1595 = vmatpush2.msra.mxu0 0.0
        %1596 = vmatprep.subr.mxu0 0.0
        %1597 = vmatpush2.msra.mxu0 0.0
        %1598 = vmatprep.subr.mxu0 0.0
        %1599 = vmatpush2.msra.mxu0 0.0
        %1600 = vmatprep.subr.mxu0 0.0
        %1601 = vmatpush2.msra.mxu0 0.0
        %1602 = vmatprep.subr.mxu0 0.0
        %1603 = vmatpush2.msra.mxu0 0.0
        %1604 = vmatprep.subr.mxu0 0.0
        %1605 = vmatpush2.msra.mxu0 0.0
        %1606 = vmatprep.subr.mxu0 0.0
        %1607 = vmatpush2.msra.mxu0 0.0
        %1608 = vmatprep.subr.mxu0 0.0
        %1609 = vmatpush2.msra.mxu0 0.0
        %1610 = vmatprep.subr.mxu0 0.0
        %1611 = vmatpush2.msra.mxu0 0.0
        %1612 = vmatprep.subr.mxu0 0.0
        %1613 = vmatpush2.msra.mxu0 0.0
        %1614 = vmatprep.subr.mxu0 0.0
        %1615 = vmatpush2.msra.mxu0 0.0
        %1616 = vmatprep.subr.mxu0 0.0
        %1617 = vmatpush2.msra.mxu0 0.0
        %1618 = vmatprep.mubr.f32.mxu0 0.0
        %1619 = vmatmul.mubr.f32.gmra.mxu0 %v1552
        %v1620 = vpop.f32.mrf.mxu0
        %v1621 = vadd.f32 0.0, %v1620
        %v1622 = vpop.f32.mrf.mxu0
        %1623 = vdwg.mxu0
        %1624 = vrot.lane.b32.xlu0 %v368, 56
        %v1625 = vpop.permute.xlu0 %1624
        %v1628 = vsel %vm374, %v1395, 0
        %1630 = vmatprep.subr.mxu0 0.0
        %1631 = vmatpush1.msra.mxu0 0.0
        %1632 = vmatprep.subr.mxu0 0.0
        %1633 = vmatpush1.msra.mxu0 0.0
        %1634 = vmatprep.subr.mxu0 0.0
        %1635 = vmatpush1.msra.mxu0 0.0
        %1636 = vmatprep.subr.mxu0 0.0
        %1637 = vmatpush1.msra.mxu0 0.0
        %1638 = vmatprep.subr.mxu0 0.0
        %1639 = vmatpush1.msra.mxu0 0.0
        %1640 = vmatprep.subr.mxu0 0.0
        %1641 = vmatpush1.msra.mxu0 0.0
        %1642 = vmatprep.subr.mxu0 0.0
        %1643 = vmatpush1.msra.mxu0 0.0
        %1644 = vmatprep.subr.mxu0 0.0
        %1645 = vmatpush1.msra.mxu0 0.0
        %1646 = vmatprep.subr.mxu0 0.0
        %1647 = vmatpush1.msra.mxu0 0.0
        %1648 = vmatprep.subr.mxu0 0.0
        %1649 = vmatpush1.msra.mxu0 0.0
        %1650 = vmatprep.subr.mxu0 0.0
        %1651 = vmatpush1.msra.mxu0 0.0
        %1652 = vmatprep.subr.mxu0 0.0
        %1653 = vmatpush1.msra.mxu0 0.0
        %1654 = vmatprep.subr.mxu0 0.0
        %1655 = vmatpush1.msra.mxu0 0.0
        %1656 = vmatprep.subr.mxu0 0.0
        %1657 = vmatpush1.msra.mxu0 0.0
        %1658 = vmatprep.subr.mxu0 0.0
        %1659 = vmatpush1.msra.mxu0 0.0
        %1660 = vmatprep.subr.mxu0 0.0
        %1661 = vmatpush1.msra.mxu0 %v1625
        %1662 = vmatprep.subr.mxu0 0.0
        %1663 = vmatpush2.msra.mxu0 0.0
        %1664 = vmatprep.subr.mxu0 0.0
        %1665 = vmatpush2.msra.mxu0 0.0
        %1666 = vmatprep.subr.mxu0 0.0
        %1667 = vmatpush2.msra.mxu0 0.0
        %1668 = vmatprep.subr.mxu0 0.0
        %1669 = vmatpush2.msra.mxu0 0.0
        %1670 = vmatprep.subr.mxu0 0.0
        %1671 = vmatpush2.msra.mxu0 0.0
        %1672 = vmatprep.subr.mxu0 0.0
        %1673 = vmatpush2.msra.mxu0 0.0
        %1674 = vmatprep.subr.mxu0 0.0
        %1675 = vmatpush2.msra.mxu0 0.0
        %1676 = vmatprep.subr.mxu0 0.0
        %1677 = vmatpush2.msra.mxu0 0.0
        %1678 = vmatprep.subr.mxu0 0.0
        %1679 = vmatpush2.msra.mxu0 0.0
        %1680 = vmatprep.subr.mxu0 0.0
        %1681 = vmatpush2.msra.mxu0 0.0
        %1682 = vmatprep.subr.mxu0 0.0
        %1683 = vmatpush2.msra.mxu0 0.0
        %1684 = vmatprep.subr.mxu0 0.0
        %1685 = vmatpush2.msra.mxu0 0.0
        %1686 = vmatprep.subr.mxu0 0.0
        %1687 = vmatpush2.msra.mxu0 0.0
        %1688 = vmatprep.subr.mxu0 0.0
        %1689 = vmatpush2.msra.mxu0 0.0
        %1690 = vmatprep.subr.mxu0 0.0
        %1691 = vmatpush2.msra.mxu0 0.0
        %1692 = vmatprep.subr.mxu0 0.0
        %1693 = vmatpush2.msra.mxu0 0.0
        %1694 = vmatprep.mubr.f32.mxu0 0.0
        %1695 = vmatmul.mubr.f32.gmra.mxu0 %v1628
        %v1696 = vpop.f32.mrf.mxu0
        %v1697 = vadd.f32 0.0, %v1696
        %v1698 = vpop.f32.mrf.mxu0
        %1699 = vdwg.mxu0
        %1704 = vrot.lane.b32.xlu0 %v1469, 8
        %v1705 = vpop.permute.xlu0 %1704
        %1706 = vrot.lane.b32.xlu0 %v1545, 8
        %v1707 = vpop.permute.xlu0 %1706
        %1708 = vrot.lane.b32.xlu0 %v1621, 8
        %v1709 = vpop.permute.xlu0 %1708
        %1710 = vrot.lane.b32.xlu0 %v1697, 8
        %v1711 = vpop.permute.xlu0 %1710
        %vm1716 = vcmask 130112
        %1717 = vst.msk [vmem:[#allocation2] sm:$0xff] %vm1716, %v1705
        %1718 = vst.msk [vmem:[#allocation2 + $0x8] sm:$0xff] %vm1716, %v1707
        %1719 = vst.msk [vmem:[#allocation2 + $0x10] sm:$0xff] %vm1716, %v1709
        %1720 = vst.msk [vmem:[#allocation2 + $0x18] sm:$0xff] %vm1716, %v1711
        %1721 = vrot.lane.b32.xlu0 %v353, 112
        %v1722 = vpop.permute.xlu0 %1721
        %1723 = vrot.lane.b32.xlu0 %v353, 80
        %v1724 = vpop.permute.xlu0 %1723
        %v1725 = vsel %vm374, %v1722, 0
        %v1727 = vsel %vm374, %v1724, 0
        %1729 = vmatprep.subr.mxu0 0.0
        %1730 = vmatpush1.xpose.msra.mxu0 0.0
        %1731 = vmatprep.subr.mxu0 0.0
        %1732 = vmatpush1.xpose.msra.mxu0 0.0
        %1733 = vmatprep.subr.mxu0 0.0
        %1734 = vmatpush1.xpose.msra.mxu0 0.0
        %1735 = vmatprep.subr.mxu0 0.0
        %1736 = vmatpush1.xpose.msra.mxu0 0.0
        %1737 = vmatprep.subr.mxu0 0.0
        %1738 = vmatpush1.xpose.msra.mxu0 0.0
        %1739 = vmatprep.subr.mxu0 0.0
        %1740 = vmatpush1.xpose.msra.mxu0 0.0
        %1741 = vmatprep.subr.mxu0 0.0
        %1742 = vmatpush1.xpose.msra.mxu0 0.0
        %1743 = vmatprep.subr.mxu0 0.0
        %1744 = vmatpush1.xpose.msra.mxu0 0.0
        %1745 = vmatprep.subr.mxu0 0.0
        %1746 = vmatpush1.xpose.msra.mxu0 0.0
        %1747 = vmatprep.subr.mxu0 0.0
        %1748 = vmatpush1.xpose.msra.mxu0 0.0
        %1749 = vmatprep.subr.mxu0 0.0
        %1750 = vmatpush1.xpose.msra.mxu0 0.0
        %1751 = vmatprep.subr.mxu0 0.0
        %1752 = vmatpush1.xpose.msra.mxu0 0.0
        %1753 = vmatprep.subr.mxu0 0.0
        %1754 = vmatpush1.xpose.msra.mxu0 0.0
        %1755 = vmatprep.subr.mxu0 0.0
        %1756 = vmatpush1.xpose.msra.mxu0 0.0
        %1757 = vmatprep.subr.mxu0 0.0
        %1758 = vmatpush1.xpose.msra.mxu0 0.0
        %1759 = vmatprep.subr.mxu0 0.0
        %1760 = vmatpush1.xpose.msra.mxu0 %v1727
        %1761 = vmatprep.subr.mxu0 0.0
        %1762 = vmatpush2.xpose.msra.mxu0 0.0
        %1763 = vmatprep.subr.mxu0 0.0
        %1764 = vmatpush2.xpose.msra.mxu0 0.0
        %1765 = vmatprep.subr.mxu0 0.0
        %1766 = vmatpush2.xpose.msra.mxu0 0.0
        %1767 = vmatprep.subr.mxu0 0.0
        %1768 = vmatpush2.xpose.msra.mxu0 0.0
        %1769 = vmatprep.subr.mxu0 0.0
        %1770 = vmatpush2.xpose.msra.mxu0 0.0
        %1771 = vmatprep.subr.mxu0 0.0
        %1772 = vmatpush2.xpose.msra.mxu0 0.0
        %1773 = vmatprep.subr.mxu0 0.0
        %1774 = vmatpush2.xpose.msra.mxu0 0.0
        %1775 = vmatprep.subr.mxu0 0.0
        %1776 = vmatpush2.xpose.msra.mxu0 0.0
        %1777 = vmatprep.subr.mxu0 0.0
        %1778 = vmatpush2.xpose.msra.mxu0 0.0
        %1779 = vmatprep.subr.mxu0 0.0
        %1780 = vmatpush2.xpose.msra.mxu0 0.0
        %1781 = vmatprep.subr.mxu0 0.0
        %1782 = vmatpush2.xpose.msra.mxu0 0.0
        %1783 = vmatprep.subr.mxu0 0.0
        %1784 = vmatpush2.xpose.msra.mxu0 0.0
        %1785 = vmatprep.subr.mxu0 0.0
        %1786 = vmatpush2.xpose.msra.mxu0 0.0
        %1787 = vmatprep.subr.mxu0 0.0
        %1788 = vmatpush2.xpose.msra.mxu0 0.0
        %1789 = vmatprep.subr.mxu0 0.0
        %1790 = vmatpush2.xpose.msra.mxu0 0.0
        %1791 = vmatprep.subr.mxu0 0.0
        %1792 = vmatpush2.xpose.msra.mxu0 0.0
        %1793 = vmatprep.mubr.f32.mxu0 0.0
        %1794 = vmatmul.mubr.f32.gmra.mxu0 %v1725
        %v1795 = vpop.f32.mrf.mxu0
        %v1796 = vadd.f32 0.0, %v1795
        %v1797 = vpop.f32.mrf.mxu0
        %1798 = vdwg.mxu0
        %1799 = vrot.lane.b32.xlu0 %v358, 112
        %v1800 = vpop.permute.xlu0 %1799
        %1801 = vrot.lane.b32.xlu0 %v358, 80
        %v1802 = vpop.permute.xlu0 %1801
        %v1803 = vsel %vm374, %v1800, 0
        %v1805 = vsel %vm374, %v1802, 0
        %1807 = vmatprep.subr.mxu0 0.0
        %1808 = vmatpush1.xpose.msra.mxu0 0.0
        %1809 = vmatprep.subr.mxu0 0.0
        %1810 = vmatpush1.xpose.msra.mxu0 0.0
        %1811 = vmatprep.subr.mxu0 0.0
        %1812 = vmatpush1.xpose.msra.mxu0 0.0
        %1813 = vmatprep.subr.mxu0 0.0
        %1814 = vmatpush1.xpose.msra.mxu0 0.0
        %1815 = vmatprep.subr.mxu0 0.0
        %1816 = vmatpush1.xpose.msra.mxu0 0.0
        %1817 = vmatprep.subr.mxu0 0.0
        %1818 = vmatpush1.xpose.msra.mxu0 0.0
        %1819 = vmatprep.subr.mxu0 0.0
        %1820 = vmatpush1.xpose.msra.mxu0 0.0
        %1821 = vmatprep.subr.mxu0 0.0
        %1822 = vmatpush1.xpose.msra.mxu0 0.0
        %1823 = vmatprep.subr.mxu0 0.0
        %1824 = vmatpush1.xpose.msra.mxu0 0.0
        %1825 = vmatprep.subr.mxu0 0.0
        %1826 = vmatpush1.xpose.msra.mxu0 0.0
        %1827 = vmatprep.subr.mxu0 0.0
        %1828 = vmatpush1.xpose.msra.mxu0 0.0
        %1829 = vmatprep.subr.mxu0 0.0
        %1830 = vmatpush1.xpose.msra.mxu0 0.0
        %1831 = vmatprep.subr.mxu0 0.0
        %1832 = vmatpush1.xpose.msra.mxu0 0.0
        %1833 = vmatprep.subr.mxu0 0.0
        %1834 = vmatpush1.xpose.msra.mxu0 0.0
        %1835 = vmatprep.subr.mxu0 0.0
        %1836 = vmatpush1.xpose.msra.mxu0 0.0
        %1837 = vmatprep.subr.mxu0 0.0
        %1838 = vmatpush1.xpose.msra.mxu0 %v1805
        %1839 = vmatprep.subr.mxu0 0.0
        %1840 = vmatpush2.xpose.msra.mxu0 0.0
        %1841 = vmatprep.subr.mxu0 0.0
        %1842 = vmatpush2.xpose.msra.mxu0 0.0
        %1843 = vmatprep.subr.mxu0 0.0
        %1844 = vmatpush2.xpose.msra.mxu0 0.0
        %1845 = vmatprep.subr.mxu0 0.0
        %1846 = vmatpush2.xpose.msra.mxu0 0.0
        %1847 = vmatprep.subr.mxu0 0.0
        %1848 = vmatpush2.xpose.msra.mxu0 0.0
        %1849 = vmatprep.subr.mxu0 0.0
        %1850 = vmatpush2.xpose.msra.mxu0 0.0
        %1851 = vmatprep.subr.mxu0 0.0
        %1852 = vmatpush2.xpose.msra.mxu0 0.0
        %1853 = vmatprep.subr.mxu0 0.0
        %1854 = vmatpush2.xpose.msra.mxu0 0.0
        %1855 = vmatprep.subr.mxu0 0.0
        %1856 = vmatpush2.xpose.msra.mxu0 0.0
        %1857 = vmatprep.subr.mxu0 0.0
        %1858 = vmatpush2.xpose.msra.mxu0 0.0
        %1859 = vmatprep.subr.mxu0 0.0
        %1860 = vmatpush2.xpose.msra.mxu0 0.0
        %1861 = vmatprep.subr.mxu0 0.0
        %1862 = vmatpush2.xpose.msra.mxu0 0.0
        %1863 = vmatprep.subr.mxu0 0.0
        %1864 = vmatpush2.xpose.msra.mxu0 0.0
        %1865 = vmatprep.subr.mxu0 0.0
        %1866 = vmatpush2.xpose.msra.mxu0 0.0
        %1867 = vmatprep.subr.mxu0 0.0
        %1868 = vmatpush2.xpose.msra.mxu0 0.0
        %1869 = vmatprep.subr.mxu0 0.0
        %1870 = vmatpush2.xpose.msra.mxu0 0.0
        %1871 = vmatprep.mubr.f32.mxu0 0.0
        %1872 = vmatmul.mubr.f32.gmra.mxu0 %v1803
        %v1873 = vpop.f32.mrf.mxu0
        %v1874 = vadd.f32 0.0, %v1873
        %v1875 = vpop.f32.mrf.mxu0
        %1876 = vdwg.mxu0
        %1877 = vrot.lane.b32.xlu0 %v363, 112
        %v1878 = vpop.permute.xlu0 %1877
        %1879 = vrot.lane.b32.xlu0 %v363, 80
        %v1880 = vpop.permute.xlu0 %1879
        %v1881 = vsel %vm374, %v1878, 0
        %v1883 = vsel %vm374, %v1880, 0
        %1885 = vmatprep.subr.mxu0 0.0
        %1886 = vmatpush1.xpose.msra.mxu0 0.0
        %1887 = vmatprep.subr.mxu0 0.0
        %1888 = vmatpush1.xpose.msra.mxu0 0.0
        %1889 = vmatprep.subr.mxu0 0.0
        %1890 = vmatpush1.xpose.msra.mxu0 0.0
        %1891 = vmatprep.subr.mxu0 0.0
        %1892 = vmatpush1.xpose.msra.mxu0 0.0
        %1893 = vmatprep.subr.mxu0 0.0
        %1894 = vmatpush1.xpose.msra.mxu0 0.0
        %1895 = vmatprep.subr.mxu0 0.0
        %1896 = vmatpush1.xpose.msra.mxu0 0.0
        %1897 = vmatprep.subr.mxu0 0.0
        %1898 = vmatpush1.xpose.msra.mxu0 0.0
        %1899 = vmatprep.subr.mxu0 0.0
        %1900 = vmatpush1.xpose.msra.mxu0 0.0
        %1901 = vmatprep.subr.mxu0 0.0
        %1902 = vmatpush1.xpose.msra.mxu0 0.0
        %1903 = vmatprep.subr.mxu0 0.0
        %1904 = vmatpush1.xpose.msra.mxu0 0.0
        %1905 = vmatprep.subr.mxu0 0.0
        %1906 = vmatpush1.xpose.msra.mxu0 0.0
        %1907 = vmatprep.subr.mxu0 0.0
        %1908 = vmatpush1.xpose.msra.mxu0 0.0
        %1909 = vmatprep.subr.mxu0 0.0
        %1910 = vmatpush1.xpose.msra.mxu0 0.0
        %1911 = vmatprep.subr.mxu0 0.0
        %1912 = vmatpush1.xpose.msra.mxu0 0.0
        %1913 = vmatprep.subr.mxu0 0.0
        %1914 = vmatpush1.xpose.msra.mxu0 0.0
        %1915 = vmatprep.subr.mxu0 0.0
        %1916 = vmatpush1.xpose.msra.mxu0 %v1883
        %1917 = vmatprep.subr.mxu0 0.0
        %1918 = vmatpush2.xpose.msra.mxu0 0.0
        %1919 = vmatprep.subr.mxu0 0.0
        %1920 = vmatpush2.xpose.msra.mxu0 0.0
        %1921 = vmatprep.subr.mxu0 0.0
        %1922 = vmatpush2.xpose.msra.mxu0 0.0
        %1923 = vmatprep.subr.mxu0 0.0
        %1924 = vmatpush2.xpose.msra.mxu0 0.0
        %1925 = vmatprep.subr.mxu0 0.0
        %1926 = vmatpush2.xpose.msra.mxu0 0.0
        %1927 = vmatprep.subr.mxu0 0.0
        %1928 = vmatpush2.xpose.msra.mxu0 0.0
        %1929 = vmatprep.subr.mxu0 0.0
        %1930 = vmatpush2.xpose.msra.mxu0 0.0
        %1931 = vmatprep.subr.mxu0 0.0
        %1932 = vmatpush2.xpose.msra.mxu0 0.0
        %1933 = vmatprep.subr.mxu0 0.0
        %1934 = vmatpush2.xpose.msra.mxu0 0.0
        %1935 = vmatprep.subr.mxu0 0.0
        %1936 = vmatpush2.xpose.msra.mxu0 0.0
        %1937 = vmatprep.subr.mxu0 0.0
        %1938 = vmatpush2.xpose.msra.mxu0 0.0
        %1939 = vmatprep.subr.mxu0 0.0
        %1940 = vmatpush2.xpose.msra.mxu0 0.0
        %1941 = vmatprep.subr.mxu0 0.0
        %1942 = vmatpush2.xpose.msra.mxu0 0.0
        %1943 = vmatprep.subr.mxu0 0.0
        %1944 = vmatpush2.xpose.msra.mxu0 0.0
        %1945 = vmatprep.subr.mxu0 0.0
        %1946 = vmatpush2.xpose.msra.mxu0 0.0
        %1947 = vmatprep.subr.mxu0 0.0
        %1948 = vmatpush2.xpose.msra.mxu0 0.0
        %1949 = vmatprep.mubr.f32.mxu0 0.0
        %1950 = vmatmul.mubr.f32.gmra.mxu0 %v1881
        %v1951 = vpop.f32.mrf.mxu0
        %v1952 = vadd.f32 0.0, %v1951
        %v1953 = vpop.f32.mrf.mxu0
        %1954 = vdwg.mxu0
        %1955 = vrot.lane.b32.xlu0 %v368, 112
        %v1956 = vpop.permute.xlu0 %1955
        %1957 = vrot.lane.b32.xlu0 %v368, 80
        %v1958 = vpop.permute.xlu0 %1957
        %v1959 = vsel %vm374, %v1956, 0
        %v1961 = vsel %vm374, %v1958, 0
        %1963 = vmatprep.subr.mxu0 0.0
        %1964 = vmatpush1.xpose.msra.mxu0 0.0
        %1965 = vmatprep.subr.mxu0 0.0
        %1966 = vmatpush1.xpose.msra.mxu0 0.0
        %1967 = vmatprep.subr.mxu0 0.0
        %1968 = vmatpush1.xpose.msra.mxu0 0.0
        %1969 = vmatprep.subr.mxu0 0.0
        %1970 = vmatpush1.xpose.msra.mxu0 0.0
        %1971 = vmatprep.subr.mxu0 0.0
        %1972 = vmatpush1.xpose.msra.mxu0 0.0
        %1973 = vmatprep.subr.mxu0 0.0
        %1974 = vmatpush1.xpose.msra.mxu0 0.0
        %1975 = vmatprep.subr.mxu0 0.0
        %1976 = vmatpush1.xpose.msra.mxu0 0.0
        %1977 = vmatprep.subr.mxu0 0.0
        %1978 = vmatpush1.xpose.msra.mxu0 0.0
        %1979 = vmatprep.subr.mxu0 0.0
        %1980 = vmatpush1.xpose.msra.mxu0 0.0
        %1981 = vmatprep.subr.mxu0 0.0
        %1982 = vmatpush1.xpose.msra.mxu0 0.0
        %1983 = vmatprep.subr.mxu0 0.0
        %1984 = vmatpush1.xpose.msra.mxu0 0.0
        %1985 = vmatprep.subr.mxu0 0.0
        %1986 = vmatpush1.xpose.msra.mxu0 0.0
        %1987 = vmatprep.subr.mxu0 0.0
        %1988 = vmatpush1.xpose.msra.mxu0 0.0
        %1989 = vmatprep.subr.mxu0 0.0
        %1990 = vmatpush1.xpose.msra.mxu0 0.0
        %1991 = vmatprep.subr.mxu0 0.0
        %1992 = vmatpush1.xpose.msra.mxu0 0.0
        %1993 = vmatprep.subr.mxu0 0.0
        %1994 = vmatpush1.xpose.msra.mxu0 %v1961
        %1995 = vmatprep.subr.mxu0 0.0
        %1996 = vmatpush2.xpose.msra.mxu0 0.0
        %1997 = vmatprep.subr.mxu0 0.0
        %1998 = vmatpush2.xpose.msra.mxu0 0.0
        %1999 = vmatprep.subr.mxu0 0.0
        %2000 = vmatpush2.xpose.msra.mxu0 0.0
        %2001 = vmatprep.subr.mxu0 0.0
        %2002 = vmatpush2.xpose.msra.mxu0 0.0
        %2003 = vmatprep.subr.mxu0 0.0
        %2004 = vmatpush2.xpose.msra.mxu0 0.0
        %2005 = vmatprep.subr.mxu0 0.0
        %2006 = vmatpush2.xpose.msra.mxu0 0.0
        %2007 = vmatprep.subr.mxu0 0.0
        %2008 = vmatpush2.xpose.msra.mxu0 0.0
        %2009 = vmatprep.subr.mxu0 0.0
        %2010 = vmatpush2.xpose.msra.mxu0 0.0
        %2011 = vmatprep.subr.mxu0 0.0
        %2012 = vmatpush2.xpose.msra.mxu0 0.0
        %2013 = vmatprep.subr.mxu0 0.0
        %2014 = vmatpush2.xpose.msra.mxu0 0.0
        %2015 = vmatprep.subr.mxu0 0.0
        %2016 = vmatpush2.xpose.msra.mxu0 0.0
        %2017 = vmatprep.subr.mxu0 0.0
        %2018 = vmatpush2.xpose.msra.mxu0 0.0
        %2019 = vmatprep.subr.mxu0 0.0
        %2020 = vmatpush2.xpose.msra.mxu0 0.0
        %2021 = vmatprep.subr.mxu0 0.0
        %2022 = vmatpush2.xpose.msra.mxu0 0.0
        %2023 = vmatprep.subr.mxu0 0.0
        %2024 = vmatpush2.xpose.msra.mxu0 0.0
        %2025 = vmatprep.subr.mxu0 0.0
        %2026 = vmatpush2.xpose.msra.mxu0 0.0
        %2027 = vmatprep.mubr.f32.mxu0 0.0
        %2028 = vmatmul.mubr.f32.gmra.mxu0 %v1959
        %v2029 = vpop.f32.mrf.mxu0
        %v2030 = vadd.f32 0.0, %v2029
        %v2031 = vpop.f32.mrf.mxu0
        %2032 = vdwg.mxu0
        %v2033 = vmul.f32 %v1796, 0.35355338
        %v2034 = vmul.f32 %v1874, 0.35355338
        %v2035 = vmul.f32 %v1952, 0.35355338
        %v2036 = vmul.f32 %v2030, 0.35355338
        %v2037 = vsel %vm374, %v2033, -inf
        %2038 = vmax.xlane.f32.xlu0 %v2037
        %v2039 = vpop.xlane.xlu0 %2038
        %v2040 = vsel %vm374, %v2034, -inf
        %2041 = vmax.xlane.f32.xlu0 %v2040
        %v2042 = vpop.xlane.xlu0 %2041
        %v2043 = vsel %vm374, %v2035, -inf
        %2044 = vmax.xlane.f32.xlu0 %v2043
        %v2045 = vpop.xlane.xlu0 %2044
        %v2046 = vsel %vm374, %v2036, -inf
        %2047 = vmax.xlane.f32.xlu0 %v2046
        %v2048 = vpop.xlane.xlu0 %2047
        %v2049 = vsub.f32 %v2033, %v2039
        %v2050 = vsub.f32 %v2034, %v2042
        %v2051 = vsub.f32 %v2035, %v2045
        %v2052 = vsub.f32 %v2036, %v2048
        %v2053 = vmul.f32 %v2049, 1.442695
        %v2054 = vpow.pop %v2053
        %v2055 = vmul.f32 %v2050, 1.442695
        %v2056 = vpow.pop %v2055
        %v2057 = vmul.f32 %v2051, 1.442695
        %v2058 = vpow.pop %v2057
        %v2059 = vmul.f32 %v2052, 1.442695
        %v2060 = vpow.pop %v2059
        %v2061 = vsel %vm374, %v2054, 0.0
        %2062 = vadd.xlane.f32.xlu0 %v2061
        %v2063 = vpop.xlane.xlu0 %2062
        %v2064 = vsel %vm374, %v2056, 0.0
        %2065 = vadd.xlane.f32.xlu0 %v2064
        %v2066 = vpop.xlane.xlu0 %2065
        %v2067 = vsel %vm374, %v2058, 0.0
        %2068 = vadd.xlane.f32.xlu0 %v2067
        %v2069 = vpop.xlane.xlu0 %2068
        %v2070 = vsel %vm374, %v2060, 0.0
        %2071 = vadd.xlane.f32.xlu0 %v2070
        %v2072 = vpop.xlane.xlu0 %2071
        %v2073 = vrcp.pop %v2063
        %v2074 = vmul.f32 %v2054, %v2073
        %v2075 = vrcp.pop %v2066
        %v2076 = vmul.f32 %v2056, %v2075
        %v2077 = vrcp.pop %v2069
        %v2078 = vmul.f32 %v2058, %v2077
        %v2079 = vrcp.pop %v2072
        %v2080 = vmul.f32 %v2060, %v2079
        %2081 = vrot.lane.b32.xlu0 %v353, 48
        %v2082 = vpop.permute.xlu0 %2081
        %v2085 = vsel %vm374, %v2074, 0
        %2087 = vmatprep.subr.mxu0 0.0
        %2088 = vmatpush1.msra.mxu0 0.0
        %2089 = vmatprep.subr.mxu0 0.0
        %2090 = vmatpush1.msra.mxu0 0.0
        %2091 = vmatprep.subr.mxu0 0.0
        %2092 = vmatpush1.msra.mxu0 0.0
        %2093 = vmatprep.subr.mxu0 0.0
        %2094 = vmatpush1.msra.mxu0 0.0
        %2095 = vmatprep.subr.mxu0 0.0
        %2096 = vmatpush1.msra.mxu0 0.0
        %2097 = vmatprep.subr.mxu0 0.0
        %2098 = vmatpush1.msra.mxu0 0.0
        %2099 = vmatprep.subr.mxu0 0.0
        %2100 = vmatpush1.msra.mxu0 0.0
        %2101 = vmatprep.subr.mxu0 0.0
        %2102 = vmatpush1.msra.mxu0 0.0
        %2103 = vmatprep.subr.mxu0 0.0
        %2104 = vmatpush1.msra.mxu0 0.0
        %2105 = vmatprep.subr.mxu0 0.0
        %2106 = vmatpush1.msra.mxu0 0.0
        %2107 = vmatprep.subr.mxu0 0.0
        %2108 = vmatpush1.msra.mxu0 0.0
        %2109 = vmatprep.subr.mxu0 0.0
        %2110 = vmatpush1.msra.mxu0 0.0
        %2111 = vmatprep.subr.mxu0 0.0
        %2112 = vmatpush1.msra.mxu0 0.0
        %2113 = vmatprep.subr.mxu0 0.0
        %2114 = vmatpush1.msra.mxu0 0.0
        %2115 = vmatprep.subr.mxu0 0.0
        %2116 = vmatpush1.msra.mxu0 0.0
        %2117 = vmatprep.subr.mxu0 0.0
        %2118 = vmatpush1.msra.mxu0 %v2082
        %2119 = vmatprep.subr.mxu0 0.0
        %2120 = vmatpush2.msra.mxu0 0.0
        %2121 = vmatprep.subr.mxu0 0.0
        %2122 = vmatpush2.msra.mxu0 0.0
        %2123 = vmatprep.subr.mxu0 0.0
        %2124 = vmatpush2.msra.mxu0 0.0
        %2125 = vmatprep.subr.mxu0 0.0
        %2126 = vmatpush2.msra.mxu0 0.0
        %2127 = vmatprep.subr.mxu0 0.0
        %2128 = vmatpush2.msra.mxu0 0.0
        %2129 = vmatprep.subr.mxu0 0.0
        %2130 = vmatpush2.msra.mxu0 0.0
        %2131 = vmatprep.subr.mxu0 0.0
        %2132 = vmatpush2.msra.mxu0 0.0
        %2133 = vmatprep.subr.mxu0 0.0
        %2134 = vmatpush2.msra.mxu0 0.0
        %2135 = vmatprep.subr.mxu0 0.0
        %2136 = vmatpush2.msra.mxu0 0.0
        %2137 = vmatprep.subr.mxu0 0.0
        %2138 = vmatpush2.msra.mxu0 0.0
        %2139 = vmatprep.subr.mxu0 0.0
        %2140 = vmatpush2.msra.mxu0 0.0
        %2141 = vmatprep.subr.mxu0 0.0
        %2142 = vmatpush2.msra.mxu0 0.0
        %2143 = vmatprep.subr.mxu0 0.0
        %2144 = vmatpush2.msra.mxu0 0.0
        %2145 = vmatprep.subr.mxu0 0.0
        %2146 = vmatpush2.msra.mxu0 0.0
        %2147 = vmatprep.subr.mxu0 0.0
        %2148 = vmatpush2.msra.mxu0 0.0
        %2149 = vmatprep.subr.mxu0 0.0
        %2150 = vmatpush2.msra.mxu0 0.0
        %2151 = vmatprep.mubr.f32.mxu0 0.0
        %2152 = vmatmul.mubr.f32.gmra.mxu0 %v2085
        %v2153 = vpop.f32.mrf.mxu0
        %v2154 = vadd.f32 0.0, %v2153
        %v2155 = vpop.f32.mrf.mxu0
        %2156 = vdwg.mxu0
        %2157 = vrot.lane.b32.xlu0 %v358, 48
        %v2158 = vpop.permute.xlu0 %2157
        %v2161 = vsel %vm374, %v2076, 0
        %2163 = vmatprep.subr.mxu0 0.0
        %2164 = vmatpush1.msra.mxu0 0.0
        %2165 = vmatprep.subr.mxu0 0.0
        %2166 = vmatpush1.msra.mxu0 0.0
        %2167 = vmatprep.subr.mxu0 0.0
        %2168 = vmatpush1.msra.mxu0 0.0
        %2169 = vmatprep.subr.mxu0 0.0
        %2170 = vmatpush1.msra.mxu0 0.0
        %2171 = vmatprep.subr.mxu0 0.0
        %2172 = vmatpush1.msra.mxu0 0.0
        %2173 = vmatprep.subr.mxu0 0.0
        %2174 = vmatpush1.msra.mxu0 0.0
        %2175 = vmatprep.subr.mxu0 0.0
        %2176 = vmatpush1.msra.mxu0 0.0
        %2177 = vmatprep.subr.mxu0 0.0
        %2178 = vmatpush1.msra.mxu0 0.0
        %2179 = vmatprep.subr.mxu0 0.0
        %2180 = vmatpush1.msra.mxu0 0.0
        %2181 = vmatprep.subr.mxu0 0.0
        %2182 = vmatpush1.msra.mxu0 0.0
        %2183 = vmatprep.subr.mxu0 0.0
        %2184 = vmatpush1.msra.mxu0 0.0
        %2185 = vmatprep.subr.mxu0 0.0
        %2186 = vmatpush1.msra.mxu0 0.0
        %2187 = vmatprep.subr.mxu0 0.0
        %2188 = vmatpush1.msra.mxu0 0.0
        %2189 = vmatprep.subr.mxu0 0.0
        %2190 = vmatpush1.msra.mxu0 0.0
        %2191 = vmatprep.subr.mxu0 0.0
        %2192 = vmatpush1.msra.mxu0 0.0
        %2193 = vmatprep.subr.mxu0 0.0
        %2194 = vmatpush1.msra.mxu0 %v2158
        %2195 = vmatprep.subr.mxu0 0.0
        %2196 = vmatpush2.msra.mxu0 0.0
        %2197 = vmatprep.subr.mxu0 0.0
        %2198 = vmatpush2.msra.mxu0 0.0
        %2199 = vmatprep.subr.mxu0 0.0
        %2200 = vmatpush2.msra.mxu0 0.0
        %2201 = vmatprep.subr.mxu0 0.0
        %2202 = vmatpush2.msra.mxu0 0.0
        %2203 = vmatprep.subr.mxu0 0.0
        %2204 = vmatpush2.msra.mxu0 0.0
        %2205 = vmatprep.subr.mxu0 0.0
        %2206 = vmatpush2.msra.mxu0 0.0
        %2207 = vmatprep.subr.mxu0 0.0
        %2208 = vmatpush2.msra.mxu0 0.0
        %2209 = vmatprep.subr.mxu0 0.0
        %2210 = vmatpush2.msra.mxu0 0.0
        %2211 = vmatprep.subr.mxu0 0.0
        %2212 = vmatpush2.msra.mxu0 0.0
        %2213 = vmatprep.subr.mxu0 0.0
        %2214 = vmatpush2.msra.mxu0 0.0
        %2215 = vmatprep.subr.mxu0 0.0
        %2216 = vmatpush2.msra.mxu0 0.0
        %2217 = vmatprep.subr.mxu0 0.0
        %2218 = vmatpush2.msra.mxu0 0.0
        %2219 = vmatprep.subr.mxu0 0.0
        %2220 = vmatpush2.msra.mxu0 0.0
        %2221 = vmatprep.subr.mxu0 0.0
        %2222 = vmatpush2.msra.mxu0 0.0
        %2223 = vmatprep.subr.mxu0 0.0
        %2224 = vmatpush2.msra.mxu0 0.0
        %2225 = vmatprep.subr.mxu0 0.0
        %2226 = vmatpush2.msra.mxu0 0.0
        %2227 = vmatprep.mubr.f32.mxu0 0.0
        %2228 = vmatmul.mubr.f32.gmra.mxu0 %v2161
        %v2229 = vpop.f32.mrf.mxu0
        %v2230 = vadd.f32 0.0, %v2229
        %v2231 = vpop.f32.mrf.mxu0
        %2232 = vdwg.mxu0
        %2233 = vrot.lane.b32.xlu0 %v363, 48
        %v2234 = vpop.permute.xlu0 %2233
        %v2237 = vsel %vm374, %v2078, 0
        %2239 = vmatprep.subr.mxu0 0.0
        %2240 = vmatpush1.msra.mxu0 0.0
        %2241 = vmatprep.subr.mxu0 0.0
        %2242 = vmatpush1.msra.mxu0 0.0
        %2243 = vmatprep.subr.mxu0 0.0
        %2244 = vmatpush1.msra.mxu0 0.0
        %2245 = vmatprep.subr.mxu0 0.0
        %2246 = vmatpush1.msra.mxu0 0.0
        %2247 = vmatprep.subr.mxu0 0.0
        %2248 = vmatpush1.msra.mxu0 0.0
        %2249 = vmatprep.subr.mxu0 0.0
        %2250 = vmatpush1.msra.mxu0 0.0
        %2251 = vmatprep.subr.mxu0 0.0
        %2252 = vmatpush1.msra.mxu0 0.0
        %2253 = vmatprep.subr.mxu0 0.0
        %2254 = vmatpush1.msra.mxu0 0.0
        %2255 = vmatprep.subr.mxu0 0.0
        %2256 = vmatpush1.msra.mxu0 0.0
        %2257 = vmatprep.subr.mxu0 0.0
        %2258 = vmatpush1.msra.mxu0 0.0
        %2259 = vmatprep.subr.mxu0 0.0
        %2260 = vmatpush1.msra.mxu0 0.0
        %2261 = vmatprep.subr.mxu0 0.0
        %2262 = vmatpush1.msra.mxu0 0.0
        %2263 = vmatprep.subr.mxu0 0.0
        %2264 = vmatpush1.msra.mxu0 0.0
        %2265 = vmatprep.subr.mxu0 0.0
        %2266 = vmatpush1.msra.mxu0 0.0
        %2267 = vmatprep.subr.mxu0 0.0
        %2268 = vmatpush1.msra.mxu0 0.0
        %2269 = vmatprep.subr.mxu0 0.0
        %2270 = vmatpush1.msra.mxu0 %v2234
        %2271 = vmatprep.subr.mxu0 0.0
        %2272 = vmatpush2.msra.mxu0 0.0
        %2273 = vmatprep.subr.mxu0 0.0
        %2274 = vmatpush2.msra.mxu0 0.0
        %2275 = vmatprep.subr.mxu0 0.0
        %2276 = vmatpush2.msra.mxu0 0.0
        %2277 = vmatprep.subr.mxu0 0.0
        %2278 = vmatpush2.msra.mxu0 0.0
        %2279 = vmatprep.subr.mxu0 0.0
        %2280 = vmatpush2.msra.mxu0 0.0
        %2281 = vmatprep.subr.mxu0 0.0
        %2282 = vmatpush2.msra.mxu0 0.0
        %2283 = vmatprep.subr.mxu0 0.0
        %2284 = vmatpush2.msra.mxu0 0.0
        %2285 = vmatprep.subr.mxu0 0.0
        %2286 = vmatpush2.msra.mxu0 0.0
        %2287 = vmatprep.subr.mxu0 0.0
        %2288 = vmatpush2.msra.mxu0 0.0
        %2289 = vmatprep.subr.mxu0 0.0
        %2290 = vmatpush2.msra.mxu0 0.0
        %2291 = vmatprep.subr.mxu0 0.0
        %2292 = vmatpush2.msra.mxu0 0.0
        %2293 = vmatprep.subr.mxu0 0.0
        %2294 = vmatpush2.msra.mxu0 0.0
        %2295 = vmatprep.subr.mxu0 0.0
        %2296 = vmatpush2.msra.mxu0 0.0
        %2297 = vmatprep.subr.mxu0 0.0
        %2298 = vmatpush2.msra.mxu0 0.0
        %2299 = vmatprep.subr.mxu0 0.0
        %2300 = vmatpush2.msra.mxu0 0.0
        %2301 = vmatprep.subr.mxu0 0.0
        %2302 = vmatpush2.msra.mxu0 0.0
        %2303 = vmatprep.mubr.f32.mxu0 0.0
        %2304 = vmatmul.mubr.f32.gmra.mxu0 %v2237
        %v2305 = vpop.f32.mrf.mxu0
        %v2306 = vadd.f32 0.0, %v2305
        %v2307 = vpop.f32.mrf.mxu0
        %2308 = vdwg.mxu0
        %2309 = vrot.lane.b32.xlu0 %v368, 48
        %v2310 = vpop.permute.xlu0 %2309
        %v2313 = vsel %vm374, %v2080, 0
        %2315 = vmatprep.subr.mxu0 0.0
        %2316 = vmatpush1.msra.mxu0 0.0
        %2317 = vmatprep.subr.mxu0 0.0
        %2318 = vmatpush1.msra.mxu0 0.0
        %2319 = vmatprep.subr.mxu0 0.0
        %2320 = vmatpush1.msra.mxu0 0.0
        %2321 = vmatprep.subr.mxu0 0.0
        %2322 = vmatpush1.msra.mxu0 0.0
        %2323 = vmatprep.subr.mxu0 0.0
        %2324 = vmatpush1.msra.mxu0 0.0
        %2325 = vmatprep.subr.mxu0 0.0
        %2326 = vmatpush1.msra.mxu0 0.0
        %2327 = vmatprep.subr.mxu0 0.0
        %2328 = vmatpush1.msra.mxu0 0.0
        %2329 = vmatprep.subr.mxu0 0.0
        %2330 = vmatpush1.msra.mxu0 0.0
        %2331 = vmatprep.subr.mxu0 0.0
        %2332 = vmatpush1.msra.mxu0 0.0
        %2333 = vmatprep.subr.mxu0 0.0
        %2334 = vmatpush1.msra.mxu0 0.0
        %2335 = vmatprep.subr.mxu0 0.0
        %2336 = vmatpush1.msra.mxu0 0.0
        %2337 = vmatprep.subr.mxu0 0.0
        %2338 = vmatpush1.msra.mxu0 0.0
        %2339 = vmatprep.subr.mxu0 0.0
        %2340 = vmatpush1.msra.mxu0 0.0
        %2341 = vmatprep.subr.mxu0 0.0
        %2342 = vmatpush1.msra.mxu0 0.0
        %2343 = vmatprep.subr.mxu0 0.0
        %2344 = vmatpush1.msra.mxu0 0.0
        %2345 = vmatprep.subr.mxu0 0.0
        %2346 = vmatpush1.msra.mxu0 %v2310
        %2347 = vmatprep.subr.mxu0 0.0
        %2348 = vmatpush2.msra.mxu0 0.0
        %2349 = vmatprep.subr.mxu0 0.0
        %2350 = vmatpush2.msra.mxu0 0.0
        %2351 = vmatprep.subr.mxu0 0.0
        %2352 = vmatpush2.msra.mxu0 0.0
        %2353 = vmatprep.subr.mxu0 0.0
        %2354 = vmatpush2.msra.mxu0 0.0
        %2355 = vmatprep.subr.mxu0 0.0
        %2356 = vmatpush2.msra.mxu0 0.0
        %2357 = vmatprep.subr.mxu0 0.0
        %2358 = vmatpush2.msra.mxu0 0.0
        %2359 = vmatprep.subr.mxu0 0.0
        %2360 = vmatpush2.msra.mxu0 0.0
        %2361 = vmatprep.subr.mxu0 0.0
        %2362 = vmatpush2.msra.mxu0 0.0
        %2363 = vmatprep.subr.mxu0 0.0
        %2364 = vmatpush2.msra.mxu0 0.0
        %2365 = vmatprep.subr.mxu0 0.0
        %2366 = vmatpush2.msra.mxu0 0.0
        %2367 = vmatprep.subr.mxu0 0.0
        %2368 = vmatpush2.msra.mxu0 0.0
        %2369 = vmatprep.subr.mxu0 0.0
        %2370 = vmatpush2.msra.mxu0 0.0
        %2371 = vmatprep.subr.mxu0 0.0
        %2372 = vmatpush2.msra.mxu0 0.0
        %2373 = vmatprep.subr.mxu0 0.0
        %2374 = vmatpush2.msra.mxu0 0.0
        %2375 = vmatprep.subr.mxu0 0.0
        %2376 = vmatpush2.msra.mxu0 0.0
        %2377 = vmatprep.subr.mxu0 0.0
        %2378 = vmatpush2.msra.mxu0 0.0
        %2379 = vmatprep.mubr.f32.mxu0 0.0
        %2380 = vmatmul.mubr.f32.gmra.mxu0 %v2313
        %v2381 = vpop.f32.mrf.mxu0
        %v2382 = vadd.f32 0.0, %v2381
        %v2383 = vpop.f32.mrf.mxu0
        %2384 = vdwg.mxu0
        %2389 = vrot.lane.b32.xlu0 %v2154, 16
        %v2390 = vpop.permute.xlu0 %2389
        %2391 = vrot.lane.b32.xlu0 %v2230, 16
        %v2392 = vpop.permute.xlu0 %2391
        %2393 = vrot.lane.b32.xlu0 %v2306, 16
        %v2394 = vpop.permute.xlu0 %2393
        %2395 = vrot.lane.b32.xlu0 %v2382, 16
        %v2396 = vpop.permute.xlu0 %2395
        %vm2401 = vcmask 195712
        %2402 = vst.msk [vmem:[#allocation2] sm:$0xff] %vm2401, %v2390
        %2403 = vst.msk [vmem:[#allocation2 + $0x8] sm:$0xff] %vm2401, %v2392
        %2404 = vst.msk [vmem:[#allocation2 + $0x10] sm:$0xff] %vm2401, %v2394
        %2405 = vst.msk [vmem:[#allocation2 + $0x18] sm:$0xff] %vm2401, %v2396
        %2406 = vrot.lane.b32.xlu0 %v353, 104
        %v2407 = vpop.permute.xlu0 %2406
        %2408 = vrot.lane.b32.xlu0 %v353, 72
        %v2409 = vpop.permute.xlu0 %2408
        %v2410 = vsel %vm374, %v2407, 0
        %v2412 = vsel %vm374, %v2409, 0
        %2414 = vmatprep.subr.mxu0 0.0
        %2415 = vmatpush1.xpose.msra.mxu0 0.0
        %2416 = vmatprep.subr.mxu0 0.0
        %2417 = vmatpush1.xpose.msra.mxu0 0.0
        %2418 = vmatprep.subr.mxu0 0.0
        %2419 = vmatpush1.xpose.msra.mxu0 0.0
        %2420 = vmatprep.subr.mxu0 0.0
        %2421 = vmatpush1.xpose.msra.mxu0 0.0
        %2422 = vmatprep.subr.mxu0 0.0
        %2423 = vmatpush1.xpose.msra.mxu0 0.0
        %2424 = vmatprep.subr.mxu0 0.0
        %2425 = vmatpush1.xpose.msra.mxu0 0.0
        %2426 = vmatprep.subr.mxu0 0.0
        %2427 = vmatpush1.xpose.msra.mxu0 0.0
        %2428 = vmatprep.subr.mxu0 0.0
        %2429 = vmatpush1.xpose.msra.mxu0 0.0
        %2430 = vmatprep.subr.mxu0 0.0
        %2431 = vmatpush1.xpose.msra.mxu0 0.0
        %2432 = vmatprep.subr.mxu0 0.0
        %2433 = vmatpush1.xpose.msra.mxu0 0.0
        %2434 = vmatprep.subr.mxu0 0.0
        %2435 = vmatpush1.xpose.msra.mxu0 0.0
        %2436 = vmatprep.subr.mxu0 0.0
        %2437 = vmatpush1.xpose.msra.mxu0 0.0
        %2438 = vmatprep.subr.mxu0 0.0
        %2439 = vmatpush1.xpose.msra.mxu0 0.0
        %2440 = vmatprep.subr.mxu0 0.0
        %2441 = vmatpush1.xpose.msra.mxu0 0.0
        %2442 = vmatprep.subr.mxu0 0.0
        %2443 = vmatpush1.xpose.msra.mxu0 0.0
        %2444 = vmatprep.subr.mxu0 0.0
        %2445 = vmatpush1.xpose.msra.mxu0 %v2412
        %2446 = vmatprep.subr.mxu0 0.0
        %2447 = vmatpush2.xpose.msra.mxu0 0.0
        %2448 = vmatprep.subr.mxu0 0.0
        %2449 = vmatpush2.xpose.msra.mxu0 0.0
        %2450 = vmatprep.subr.mxu0 0.0
        %2451 = vmatpush2.xpose.msra.mxu0 0.0
        %2452 = vmatprep.subr.mxu0 0.0
        %2453 = vmatpush2.xpose.msra.mxu0 0.0
        %2454 = vmatprep.subr.mxu0 0.0
        %2455 = vmatpush2.xpose.msra.mxu0 0.0
        %2456 = vmatprep.subr.mxu0 0.0
        %2457 = vmatpush2.xpose.msra.mxu0 0.0
        %2458 = vmatprep.subr.mxu0 0.0
        %2459 = vmatpush2.xpose.msra.mxu0 0.0
        %2460 = vmatprep.subr.mxu0 0.0
        %2461 = vmatpush2.xpose.msra.mxu0 0.0
        %2462 = vmatprep.subr.mxu0 0.0
        %2463 = vmatpush2.xpose.msra.mxu0 0.0
        %2464 = vmatprep.subr.mxu0 0.0
        %2465 = vmatpush2.xpose.msra.mxu0 0.0
        %2466 = vmatprep.subr.mxu0 0.0
        %2467 = vmatpush2.xpose.msra.mxu0 0.0
        %2468 = vmatprep.subr.mxu0 0.0
        %2469 = vmatpush2.xpose.msra.mxu0 0.0
        %2470 = vmatprep.subr.mxu0 0.0
        %2471 = vmatpush2.xpose.msra.mxu0 0.0
        %2472 = vmatprep.subr.mxu0 0.0
        %2473 = vmatpush2.xpose.msra.mxu0 0.0
        %2474 = vmatprep.subr.mxu0 0.0
        %2475 = vmatpush2.xpose.msra.mxu0 0.0
        %2476 = vmatprep.subr.mxu0 0.0
        %2477 = vmatpush2.xpose.msra.mxu0 0.0
        %2478 = vmatprep.mubr.f32.mxu0 0.0
        %2479 = vmatmul.mubr.f32.gmra.mxu0 %v2410
        %v2480 = vpop.f32.mrf.mxu0
        %v2481 = vadd.f32 0.0, %v2480
        %v2482 = vpop.f32.mrf.mxu0
        %2483 = vdwg.mxu0
        %2484 = vrot.lane.b32.xlu0 %v358, 104
        %v2485 = vpop.permute.xlu0 %2484
        %2486 = vrot.lane.b32.xlu0 %v358, 72
        %v2487 = vpop.permute.xlu0 %2486
        %v2488 = vsel %vm374, %v2485, 0
        %v2490 = vsel %vm374, %v2487, 0
        %2492 = vmatprep.subr.mxu0 0.0
        %2493 = vmatpush1.xpose.msra.mxu0 0.0
        %2494 = vmatprep.subr.mxu0 0.0
        %2495 = vmatpush1.xpose.msra.mxu0 0.0
        %2496 = vmatprep.subr.mxu0 0.0
        %2497 = vmatpush1.xpose.msra.mxu0 0.0
        %2498 = vmatprep.subr.mxu0 0.0
        %2499 = vmatpush1.xpose.msra.mxu0 0.0
        %2500 = vmatprep.subr.mxu0 0.0
        %2501 = vmatpush1.xpose.msra.mxu0 0.0
        %2502 = vmatprep.subr.mxu0 0.0
        %2503 = vmatpush1.xpose.msra.mxu0 0.0
        %2504 = vmatprep.subr.mxu0 0.0
        %2505 = vmatpush1.xpose.msra.mxu0 0.0
        %2506 = vmatprep.subr.mxu0 0.0
        %2507 = vmatpush1.xpose.msra.mxu0 0.0
        %2508 = vmatprep.subr.mxu0 0.0
        %2509 = vmatpush1.xpose.msra.mxu0 0.0
        %2510 = vmatprep.subr.mxu0 0.0
        %2511 = vmatpush1.xpose.msra.mxu0 0.0
        %2512 = vmatprep.subr.mxu0 0.0
        %2513 = vmatpush1.xpose.msra.mxu0 0.0
        %2514 = vmatprep.subr.mxu0 0.0
        %2515 = vmatpush1.xpose.msra.mxu0 0.0
        %2516 = vmatprep.subr.mxu0 0.0
        %2517 = vmatpush1.xpose.msra.mxu0 0.0
        %2518 = vmatprep.subr.mxu0 0.0
        %2519 = vmatpush1.xpose.msra.mxu0 0.0
        %2520 = vmatprep.subr.mxu0 0.0
        %2521 = vmatpush1.xpose.msra.mxu0 0.0
        %2522 = vmatprep.subr.mxu0 0.0
        %2523 = vmatpush1.xpose.msra.mxu0 %v2490
        %2524 = vmatprep.subr.mxu0 0.0
        %2525 = vmatpush2.xpose.msra.mxu0 0.0
        %2526 = vmatprep.subr.mxu0 0.0
        %2527 = vmatpush2.xpose.msra.mxu0 0.0
        %2528 = vmatprep.subr.mxu0 0.0
        %2529 = vmatpush2.xpose.msra.mxu0 0.0
        %2530 = vmatprep.subr.mxu0 0.0
        %2531 = vmatpush2.xpose.msra.mxu0 0.0
        %2532 = vmatprep.subr.mxu0 0.0
        %2533 = vmatpush2.xpose.msra.mxu0 0.0
        %2534 = vmatprep.subr.mxu0 0.0
        %2535 = vmatpush2.xpose.msra.mxu0 0.0
        %2536 = vmatprep.subr.mxu0 0.0
        %2537 = vmatpush2.xpose.msra.mxu0 0.0
        %2538 = vmatprep.subr.mxu0 0.0
        %2539 = vmatpush2.xpose.msra.mxu0 0.0
        %2540 = vmatprep.subr.mxu0 0.0
        %2541 = vmatpush2.xpose.msra.mxu0 0.0
        %2542 = vmatprep.subr.mxu0 0.0
        %2543 = vmatpush2.xpose.msra.mxu0 0.0
        %2544 = vmatprep.subr.mxu0 0.0
        %2545 = vmatpush2.xpose.msra.mxu0 0.0
        %2546 = vmatprep.subr.mxu0 0.0
        %2547 = vmatpush2.xpose.msra.mxu0 0.0
        %2548 = vmatprep.subr.mxu0 0.0
        %2549 = vmatpush2.xpose.msra.mxu0 0.0
        %2550 = vmatprep.subr.mxu0 0.0
        %2551 = vmatpush2.xpose.msra.mxu0 0.0
        %2552 = vmatprep.subr.mxu0 0.0
        %2553 = vmatpush2.xpose.msra.mxu0 0.0
        %2554 = vmatprep.subr.mxu0 0.0
        %2555 = vmatpush2.xpose.msra.mxu0 0.0
        %2556 = vmatprep.mubr.f32.mxu0 0.0
        %2557 = vmatmul.mubr.f32.gmra.mxu0 %v2488
        %v2558 = vpop.f32.mrf.mxu0
        %v2559 = vadd.f32 0.0, %v2558
        %v2560 = vpop.f32.mrf.mxu0
        %2561 = vdwg.mxu0
        %2562 = vrot.lane.b32.xlu0 %v363, 104
        %v2563 = vpop.permute.xlu0 %2562
        %2564 = vrot.lane.b32.xlu0 %v363, 72
        %v2565 = vpop.permute.xlu0 %2564
        %v2566 = vsel %vm374, %v2563, 0
        %v2568 = vsel %vm374, %v2565, 0
        %2570 = vmatprep.subr.mxu0 0.0
        %2571 = vmatpush1.xpose.msra.mxu0 0.0
        %2572 = vmatprep.subr.mxu0 0.0
        %2573 = vmatpush1.xpose.msra.mxu0 0.0
        %2574 = vmatprep.subr.mxu0 0.0
        %2575 = vmatpush1.xpose.msra.mxu0 0.0
        %2576 = vmatprep.subr.mxu0 0.0
        %2577 = vmatpush1.xpose.msra.mxu0 0.0
        %2578 = vmatprep.subr.mxu0 0.0
        %2579 = vmatpush1.xpose.msra.mxu0 0.0
        %2580 = vmatprep.subr.mxu0 0.0
        %2581 = vmatpush1.xpose.msra.mxu0 0.0
        %2582 = vmatprep.subr.mxu0 0.0
        %2583 = vmatpush1.xpose.msra.mxu0 0.0
        %2584 = vmatprep.subr.mxu0 0.0
        %2585 = vmatpush1.xpose.msra.mxu0 0.0
        %2586 = vmatprep.subr.mxu0 0.0
        %2587 = vmatpush1.xpose.msra.mxu0 0.0
        %2588 = vmatprep.subr.mxu0 0.0
        %2589 = vmatpush1.xpose.msra.mxu0 0.0
        %2590 = vmatprep.subr.mxu0 0.0
        %2591 = vmatpush1.xpose.msra.mxu0 0.0
        %2592 = vmatprep.subr.mxu0 0.0
        %2593 = vmatpush1.xpose.msra.mxu0 0.0
        %2594 = vmatprep.subr.mxu0 0.0
        %2595 = vmatpush1.xpose.msra.mxu0 0.0
        %2596 = vmatprep.subr.mxu0 0.0
        %2597 = vmatpush1.xpose.msra.mxu0 0.0
        %2598 = vmatprep.subr.mxu0 0.0
        %2599 = vmatpush1.xpose.msra.mxu0 0.0
        %2600 = vmatprep.subr.mxu0 0.0
        %2601 = vmatpush1.xpose.msra.mxu0 %v2568
        %2602 = vmatprep.subr.mxu0 0.0
        %2603 = vmatpush2.xpose.msra.mxu0 0.0
        %2604 = vmatprep.subr.mxu0 0.0
        %2605 = vmatpush2.xpose.msra.mxu0 0.0
        %2606 = vmatprep.subr.mxu0 0.0
        %2607 = vmatpush2.xpose.msra.mxu0 0.0
        %2608 = vmatprep.subr.mxu0 0.0
        %2609 = vmatpush2.xpose.msra.mxu0 0.0
        %2610 = vmatprep.subr.mxu0 0.0
        %2611 = vmatpush2.xpose.msra.mxu0 0.0
        %2612 = vmatprep.subr.mxu0 0.0
        %2613 = vmatpush2.xpose.msra.mxu0 0.0
        %2614 = vmatprep.subr.mxu0 0.0
        %2615 = vmatpush2.xpose.msra.mxu0 0.0
        %2616 = vmatprep.subr.mxu0 0.0
        %2617 = vmatpush2.xpose.msra.mxu0 0.0
        %2618 = vmatprep.subr.mxu0 0.0
        %2619 = vmatpush2.xpose.msra.mxu0 0.0
        %2620 = vmatprep.subr.mxu0 0.0
        %2621 = vmatpush2.xpose.msra.mxu0 0.0
        %2622 = vmatprep.subr.mxu0 0.0
        %2623 = vmatpush2.xpose.msra.mxu0 0.0
        %2624 = vmatprep.subr.mxu0 0.0
        %2625 = vmatpush2.xpose.msra.mxu0 0.0
        %2626 = vmatprep.subr.mxu0 0.0
        %2627 = vmatpush2.xpose.msra.mxu0 0.0
        %2628 = vmatprep.subr.mxu0 0.0
        %2629 = vmatpush2.xpose.msra.mxu0 0.0
        %2630 = vmatprep.subr.mxu0 0.0
        %2631 = vmatpush2.xpose.msra.mxu0 0.0
        %2632 = vmatprep.subr.mxu0 0.0
        %2633 = vmatpush2.xpose.msra.mxu0 0.0
        %2634 = vmatprep.mubr.f32.mxu0 0.0
        %2635 = vmatmul.mubr.f32.gmra.mxu0 %v2566
        %v2636 = vpop.f32.mrf.mxu0
        %v2637 = vadd.f32 0.0, %v2636
        %v2638 = vpop.f32.mrf.mxu0
        %2639 = vdwg.mxu0
        %2640 = vrot.lane.b32.xlu0 %v368, 104
        %v2641 = vpop.permute.xlu0 %2640
        %2642 = vrot.lane.b32.xlu0 %v368, 72
        %v2643 = vpop.permute.xlu0 %2642
        %v2644 = vsel %vm374, %v2641, 0
        %v2646 = vsel %vm374, %v2643, 0
        %2648 = vmatprep.subr.mxu0 0.0
        %2649 = vmatpush1.xpose.msra.mxu0 0.0
        %2650 = vmatprep.subr.mxu0 0.0
        %2651 = vmatpush1.xpose.msra.mxu0 0.0
        %2652 = vmatprep.subr.mxu0 0.0
        %2653 = vmatpush1.xpose.msra.mxu0 0.0
        %2654 = vmatprep.subr.mxu0 0.0
        %2655 = vmatpush1.xpose.msra.mxu0 0.0
        %2656 = vmatprep.subr.mxu0 0.0
        %2657 = vmatpush1.xpose.msra.mxu0 0.0
        %2658 = vmatprep.subr.mxu0 0.0
        %2659 = vmatpush1.xpose.msra.mxu0 0.0
        %2660 = vmatprep.subr.mxu0 0.0
        %2661 = vmatpush1.xpose.msra.mxu0 0.0
        %2662 = vmatprep.subr.mxu0 0.0
        %2663 = vmatpush1.xpose.msra.mxu0 0.0
        %2664 = vmatprep.subr.mxu0 0.0
        %2665 = vmatpush1.xpose.msra.mxu0 0.0
        %2666 = vmatprep.subr.mxu0 0.0
        %2667 = vmatpush1.xpose.msra.mxu0 0.0
        %2668 = vmatprep.subr.mxu0 0.0
        %2669 = vmatpush1.xpose.msra.mxu0 0.0
        %2670 = vmatprep.subr.mxu0 0.0
        %2671 = vmatpush1.xpose.msra.mxu0 0.0
        %2672 = vmatprep.subr.mxu0 0.0
        %2673 = vmatpush1.xpose.msra.mxu0 0.0
        %2674 = vmatprep.subr.mxu0 0.0
        %2675 = vmatpush1.xpose.msra.mxu0 0.0
        %2676 = vmatprep.subr.mxu0 0.0
        %2677 = vmatpush1.xpose.msra.mxu0 0.0
        %2678 = vmatprep.subr.mxu0 0.0
        %2679 = vmatpush1.xpose.msra.mxu0 %v2646
        %2680 = vmatprep.subr.mxu0 0.0
        %2681 = vmatpush2.xpose.msra.mxu0 0.0
        %2682 = vmatprep.subr.mxu0 0.0
        %2683 = vmatpush2.xpose.msra.mxu0 0.0
        %2684 = vmatprep.subr.mxu0 0.0
        %2685 = vmatpush2.xpose.msra.mxu0 0.0
        %2686 = vmatprep.subr.mxu0 0.0
        %2687 = vmatpush2.xpose.msra.mxu0 0.0
        %2688 = vmatprep.subr.mxu0 0.0
        %2689 = vmatpush2.xpose.msra.mxu0 0.0
        %2690 = vmatprep.subr.mxu0 0.0
        %2691 = vmatpush2.xpose.msra.mxu0 0.0
        %2692 = vmatprep.subr.mxu0 0.0
        %2693 = vmatpush2.xpose.msra.mxu0 0.0
        %2694 = vmatprep.subr.mxu0 0.0
        %2695 = vmatpush2.xpose.msra.mxu0 0.0
        %2696 = vmatprep.subr.mxu0 0.0
        %2697 = vmatpush2.xpose.msra.mxu0 0.0
        %2698 = vmatprep.subr.mxu0 0.0
        %2699 = vmatpush2.xpose.msra.mxu0 0.0
        %2700 = vmatprep.subr.mxu0 0.0
        %2701 = vmatpush2.xpose.msra.mxu0 0.0
        %2702 = vmatprep.subr.mxu0 0.0
        %2703 = vmatpush2.xpose.msra.mxu0 0.0
        %2704 = vmatprep.subr.mxu0 0.0
        %2705 = vmatpush2.xpose.msra.mxu0 0.0
        %2706 = vmatprep.subr.mxu0 0.0
        %2707 = vmatpush2.xpose.msra.mxu0 0.0
        %2708 = vmatprep.subr.mxu0 0.0
        %2709 = vmatpush2.xpose.msra.mxu0 0.0
        %2710 = vmatprep.subr.mxu0 0.0
        %2711 = vmatpush2.xpose.msra.mxu0 0.0
        %2712 = vmatprep.mubr.f32.mxu0 0.0
        %2713 = vmatmul.mubr.f32.gmra.mxu0 %v2644
        %v2714 = vpop.f32.mrf.mxu0
        %v2715 = vadd.f32 0.0, %v2714
        %v2716 = vpop.f32.mrf.mxu0
        %2717 = vdwg.mxu0
        %v2718 = vmul.f32 %v2481, 0.35355338
        %v2719 = vmul.f32 %v2559, 0.35355338
        %v2720 = vmul.f32 %v2637, 0.35355338
        %v2721 = vmul.f32 %v2715, 0.35355338
        %v2722 = vsel %vm374, %v2718, -inf
        %2723 = vmax.xlane.f32.xlu0 %v2722
        %v2724 = vpop.xlane.xlu0 %2723
        %v2725 = vsel %vm374, %v2719, -inf
        %2726 = vmax.xlane.f32.xlu0 %v2725
        %v2727 = vpop.xlane.xlu0 %2726
        %v2728 = vsel %vm374, %v2720, -inf
        %2729 = vmax.xlane.f32.xlu0 %v2728
        %v2730 = vpop.xlane.xlu0 %2729
        %v2731 = vsel %vm374, %v2721, -inf
        %2732 = vmax.xlane.f32.xlu0 %v2731
        %v2733 = vpop.xlane.xlu0 %2732
        %v2734 = vsub.f32 %v2718, %v2724
        %v2735 = vsub.f32 %v2719, %v2727
        %v2736 = vsub.f32 %v2720, %v2730
        %v2737 = vsub.f32 %v2721, %v2733
        %v2738 = vmul.f32 %v2734, 1.442695
        %v2739 = vpow.pop %v2738
        %v2740 = vmul.f32 %v2735, 1.442695
        %v2741 = vpow.pop %v2740
        %v2742 = vmul.f32 %v2736, 1.442695
        %v2743 = vpow.pop %v2742
        %v2744 = vmul.f32 %v2737, 1.442695
        %v2745 = vpow.pop %v2744
        %v2746 = vsel %vm374, %v2739, 0.0
        %2747 = vadd.xlane.f32.xlu0 %v2746
        %v2748 = vpop.xlane.xlu0 %2747
        %v2749 = vsel %vm374, %v2741, 0.0
        %2750 = vadd.xlane.f32.xlu0 %v2749
        %v2751 = vpop.xlane.xlu0 %2750
        %v2752 = vsel %vm374, %v2743, 0.0
        %2753 = vadd.xlane.f32.xlu0 %v2752
        %v2754 = vpop.xlane.xlu0 %2753
        %v2755 = vsel %vm374, %v2745, 0.0
        %2756 = vadd.xlane.f32.xlu0 %v2755
        %v2757 = vpop.xlane.xlu0 %2756
        %v2758 = vrcp.pop %v2748
        %v2759 = vmul.f32 %v2739, %v2758
        %v2760 = vrcp.pop %v2751
        %v2761 = vmul.f32 %v2741, %v2760
        %v2762 = vrcp.pop %v2754
        %v2763 = vmul.f32 %v2743, %v2762
        %v2764 = vrcp.pop %v2757
        %v2765 = vmul.f32 %v2745, %v2764
        %2766 = vrot.lane.b32.xlu0 %v353, 40
        %v2767 = vpop.permute.xlu0 %2766
        %v2770 = vsel %vm374, %v2759, 0
        %2772 = vmatprep.subr.mxu0 0.0
        %2773 = vmatpush1.msra.mxu0 0.0
        %2774 = vmatprep.subr.mxu0 0.0
        %2775 = vmatpush1.msra.mxu0 0.0
        %2776 = vmatprep.subr.mxu0 0.0
        %2777 = vmatpush1.msra.mxu0 0.0
        %2778 = vmatprep.subr.mxu0 0.0
        %2779 = vmatpush1.msra.mxu0 0.0
        %2780 = vmatprep.subr.mxu0 0.0
        %2781 = vmatpush1.msra.mxu0 0.0
        %2782 = vmatprep.subr.mxu0 0.0
        %2783 = vmatpush1.msra.mxu0 0.0
        %2784 = vmatprep.subr.mxu0 0.0
        %2785 = vmatpush1.msra.mxu0 0.0
        %2786 = vmatprep.subr.mxu0 0.0
        %2787 = vmatpush1.msra.mxu0 0.0
        %2788 = vmatprep.subr.mxu0 0.0
        %2789 = vmatpush1.msra.mxu0 0.0
        %2790 = vmatprep.subr.mxu0 0.0
        %2791 = vmatpush1.msra.mxu0 0.0
        %2792 = vmatprep.subr.mxu0 0.0
        %2793 = vmatpush1.msra.mxu0 0.0
        %2794 = vmatprep.subr.mxu0 0.0
        %2795 = vmatpush1.msra.mxu0 0.0
        %2796 = vmatprep.subr.mxu0 0.0
        %2797 = vmatpush1.msra.mxu0 0.0
        %2798 = vmatprep.subr.mxu0 0.0
        %2799 = vmatpush1.msra.mxu0 0.0
        %2800 = vmatprep.subr.mxu0 0.0
        %2801 = vmatpush1.msra.mxu0 0.0
        %2802 = vmatprep.subr.mxu0 0.0
        %2803 = vmatpush1.msra.mxu0 %v2767
        %2804 = vmatprep.subr.mxu0 0.0
        %2805 = vmatpush2.msra.mxu0 0.0
        %2806 = vmatprep.subr.mxu0 0.0
        %2807 = vmatpush2.msra.mxu0 0.0
        %2808 = vmatprep.subr.mxu0 0.0
        %2809 = vmatpush2.msra.mxu0 0.0
        %2810 = vmatprep.subr.mxu0 0.0
        %2811 = vmatpush2.msra.mxu0 0.0
        %2812 = vmatprep.subr.mxu0 0.0
        %2813 = vmatpush2.msra.mxu0 0.0
        %2814 = vmatprep.subr.mxu0 0.0
        %2815 = vmatpush2.msra.mxu0 0.0
        %2816 = vmatprep.subr.mxu0 0.0
        %2817 = vmatpush2.msra.mxu0 0.0
        %2818 = vmatprep.subr.mxu0 0.0
        %2819 = vmatpush2.msra.mxu0 0.0
        %2820 = vmatprep.subr.mxu0 0.0
        %2821 = vmatpush2.msra.mxu0 0.0
        %2822 = vmatprep.subr.mxu0 0.0
        %2823 = vmatpush2.msra.mxu0 0.0
        %2824 = vmatprep.subr.mxu0 0.0
        %2825 = vmatpush2.msra.mxu0 0.0
        %2826 = vmatprep.subr.mxu0 0.0
        %2827 = vmatpush2.msra.mxu0 0.0
        %2828 = vmatprep.subr.mxu0 0.0
        %2829 = vmatpush2.msra.mxu0 0.0
        %2830 = vmatprep.subr.mxu0 0.0
        %2831 = vmatpush2.msra.mxu0 0.0
        %2832 = vmatprep.subr.mxu0 0.0
        %2833 = vmatpush2.msra.mxu0 0.0
        %2834 = vmatprep.subr.mxu0 0.0
        %2835 = vmatpush2.msra.mxu0 0.0
        %2836 = vmatprep.mubr.f32.mxu0 0.0
        %2837 = vmatmul.mubr.f32.gmra.mxu0 %v2770
        %v2838 = vpop.f32.mrf.mxu0
        %v2839 = vadd.f32 0.0, %v2838
        %v2840 = vpop.f32.mrf.mxu0
        %2841 = vdwg.mxu0
        %2842 = vrot.lane.b32.xlu0 %v358, 40
        %v2843 = vpop.permute.xlu0 %2842
        %v2846 = vsel %vm374, %v2761, 0
        %2848 = vmatprep.subr.mxu0 0.0
        %2849 = vmatpush1.msra.mxu0 0.0
        %2850 = vmatprep.subr.mxu0 0.0
        %2851 = vmatpush1.msra.mxu0 0.0
        %2852 = vmatprep.subr.mxu0 0.0
        %2853 = vmatpush1.msra.mxu0 0.0
        %2854 = vmatprep.subr.mxu0 0.0
        %2855 = vmatpush1.msra.mxu0 0.0
        %2856 = vmatprep.subr.mxu0 0.0
        %2857 = vmatpush1.msra.mxu0 0.0
        %2858 = vmatprep.subr.mxu0 0.0
        %2859 = vmatpush1.msra.mxu0 0.0
        %2860 = vmatprep.subr.mxu0 0.0
        %2861 = vmatpush1.msra.mxu0 0.0
        %2862 = vmatprep.subr.mxu0 0.0
        %2863 = vmatpush1.msra.mxu0 0.0
        %2864 = vmatprep.subr.mxu0 0.0
        %2865 = vmatpush1.msra.mxu0 0.0
        %2866 = vmatprep.subr.mxu0 0.0
        %2867 = vmatpush1.msra.mxu0 0.0
        %2868 = vmatprep.subr.mxu0 0.0
        %2869 = vmatpush1.msra.mxu0 0.0
        %2870 = vmatprep.subr.mxu0 0.0
        %2871 = vmatpush1.msra.mxu0 0.0
        %2872 = vmatprep.subr.mxu0 0.0
        %2873 = vmatpush1.msra.mxu0 0.0
        %2874 = vmatprep.subr.mxu0 0.0
        %2875 = vmatpush1.msra.mxu0 0.0
        %2876 = vmatprep.subr.mxu0 0.0
        %2877 = vmatpush1.msra.mxu0 0.0
        %2878 = vmatprep.subr.mxu0 0.0
        %2879 = vmatpush1.msra.mxu0 %v2843
        %2880 = vmatprep.subr.mxu0 0.0
        %2881 = vmatpush2.msra.mxu0 0.0
        %2882 = vmatprep.subr.mxu0 0.0
        %2883 = vmatpush2.msra.mxu0 0.0
        %2884 = vmatprep.subr.mxu0 0.0
        %2885 = vmatpush2.msra.mxu0 0.0
        %2886 = vmatprep.subr.mxu0 0.0
        %2887 = vmatpush2.msra.mxu0 0.0
        %2888 = vmatprep.subr.mxu0 0.0
        %2889 = vmatpush2.msra.mxu0 0.0
        %2890 = vmatprep.subr.mxu0 0.0
        %2891 = vmatpush2.msra.mxu0 0.0
        %2892 = vmatprep.subr.mxu0 0.0
        %2893 = vmatpush2.msra.mxu0 0.0
        %2894 = vmatprep.subr.mxu0 0.0
        %2895 = vmatpush2.msra.mxu0 0.0
        %2896 = vmatprep.subr.mxu0 0.0
        %2897 = vmatpush2.msra.mxu0 0.0
        %2898 = vmatprep.subr.mxu0 0.0
        %2899 = vmatpush2.msra.mxu0 0.0
        %2900 = vmatprep.subr.mxu0 0.0
        %2901 = vmatpush2.msra.mxu0 0.0
        %2902 = vmatprep.subr.mxu0 0.0
        %2903 = vmatpush2.msra.mxu0 0.0
        %2904 = vmatprep.subr.mxu0 0.0
        %2905 = vmatpush2.msra.mxu0 0.0
        %2906 = vmatprep.subr.mxu0 0.0
        %2907 = vmatpush2.msra.mxu0 0.0
        %2908 = vmatprep.subr.mxu0 0.0
        %2909 = vmatpush2.msra.mxu0 0.0
        %2910 = vmatprep.subr.mxu0 0.0
        %2911 = vmatpush2.msra.mxu0 0.0
        %2912 = vmatprep.mubr.f32.mxu0 0.0
        %2913 = vmatmul.mubr.f32.gmra.mxu0 %v2846
        %v2914 = vpop.f32.mrf.mxu0
        %v2915 = vadd.f32 0.0, %v2914
        %v2916 = vpop.f32.mrf.mxu0
        %2917 = vdwg.mxu0
        %2918 = vrot.lane.b32.xlu0 %v363, 40
        %v2919 = vpop.permute.xlu0 %2918
        %v2922 = vsel %vm374, %v2763, 0
        %2924 = vmatprep.subr.mxu0 0.0
        %2925 = vmatpush1.msra.mxu0 0.0
        %2926 = vmatprep.subr.mxu0 0.0
        %2927 = vmatpush1.msra.mxu0 0.0
        %2928 = vmatprep.subr.mxu0 0.0
        %2929 = vmatpush1.msra.mxu0 0.0
        %2930 = vmatprep.subr.mxu0 0.0
        %2931 = vmatpush1.msra.mxu0 0.0
        %2932 = vmatprep.subr.mxu0 0.0
        %2933 = vmatpush1.msra.mxu0 0.0
        %2934 = vmatprep.subr.mxu0 0.0
        %2935 = vmatpush1.msra.mxu0 0.0
        %2936 = vmatprep.subr.mxu0 0.0
        %2937 = vmatpush1.msra.mxu0 0.0
        %2938 = vmatprep.subr.mxu0 0.0
        %2939 = vmatpush1.msra.mxu0 0.0
        %2940 = vmatprep.subr.mxu0 0.0
        %2941 = vmatpush1.msra.mxu0 0.0
        %2942 = vmatprep.subr.mxu0 0.0
        %2943 = vmatpush1.msra.mxu0 0.0
        %2944 = vmatprep.subr.mxu0 0.0
        %2945 = vmatpush1.msra.mxu0 0.0
        %2946 = vmatprep.subr.mxu0 0.0
        %2947 = vmatpush1.msra.mxu0 0.0
        %2948 = vmatprep.subr.mxu0 0.0
        %2949 = vmatpush1.msra.mxu0 0.0
        %2950 = vmatprep.subr.mxu0 0.0
        %2951 = vmatpush1.msra.mxu0 0.0
        %2952 = vmatprep.subr.mxu0 0.0
        %2953 = vmatpush1.msra.mxu0 0.0
        %2954 = vmatprep.subr.mxu0 0.0
        %2955 = vmatpush1.msra.mxu0 %v2919
        %2956 = vmatprep.subr.mxu0 0.0
        %2957 = vmatpush2.msra.mxu0 0.0
        %2958 = vmatprep.subr.mxu0 0.0
        %2959 = vmatpush2.msra.mxu0 0.0
        %2960 = vmatprep.subr.mxu0 0.0
        %2961 = vmatpush2.msra.mxu0 0.0
        %2962 = vmatprep.subr.mxu0 0.0
        %2963 = vmatpush2.msra.mxu0 0.0
        %2964 = vmatprep.subr.mxu0 0.0
        %2965 = vmatpush2.msra.mxu0 0.0
        %2966 = vmatprep.subr.mxu0 0.0
        %2967 = vmatpush2.msra.mxu0 0.0
        %2968 = vmatprep.subr.mxu0 0.0
        %2969 = vmatpush2.msra.mxu0 0.0
        %2970 = vmatprep.subr.mxu0 0.0
        %2971 = vmatpush2.msra.mxu0 0.0
        %2972 = vmatprep.subr.mxu0 0.0
        %2973 = vmatpush2.msra.mxu0 0.0
        %2974 = vmatprep.subr.mxu0 0.0
        %2975 = vmatpush2.msra.mxu0 0.0
        %2976 = vmatprep.subr.mxu0 0.0
        %2977 = vmatpush2.msra.mxu0 0.0
        %2978 = vmatprep.subr.mxu0 0.0
        %2979 = vmatpush2.msra.mxu0 0.0
        %2980 = vmatprep.subr.mxu0 0.0
        %2981 = vmatpush2.msra.mxu0 0.0
        %2982 = vmatprep.subr.mxu0 0.0
        %2983 = vmatpush2.msra.mxu0 0.0
        %2984 = vmatprep.subr.mxu0 0.0
        %2985 = vmatpush2.msra.mxu0 0.0
        %2986 = vmatprep.subr.mxu0 0.0
        %2987 = vmatpush2.msra.mxu0 0.0
        %2988 = vmatprep.mubr.f32.mxu0 0.0
        %2989 = vmatmul.mubr.f32.gmra.mxu0 %v2922
        %v2990 = vpop.f32.mrf.mxu0
        %v2991 = vadd.f32 0.0, %v2990
        %v2992 = vpop.f32.mrf.mxu0
        %2993 = vdwg.mxu0
        %2994 = vrot.lane.b32.xlu0 %v368, 40
        %v2995 = vpop.permute.xlu0 %2994
        %v2998 = vsel %vm374, %v2765, 0
        %3000 = vmatprep.subr.mxu0 0.0
        %3001 = vmatpush1.msra.mxu0 0.0
        %3002 = vmatprep.subr.mxu0 0.0
        %3003 = vmatpush1.msra.mxu0 0.0
        %3004 = vmatprep.subr.mxu0 0.0
        %3005 = vmatpush1.msra.mxu0 0.0
        %3006 = vmatprep.subr.mxu0 0.0
        %3007 = vmatpush1.msra.mxu0 0.0
        %3008 = vmatprep.subr.mxu0 0.0
        %3009 = vmatpush1.msra.mxu0 0.0
        %3010 = vmatprep.subr.mxu0 0.0
        %3011 = vmatpush1.msra.mxu0 0.0
        %3012 = vmatprep.subr.mxu0 0.0
        %3013 = vmatpush1.msra.mxu0 0.0
        %3014 = vmatprep.subr.mxu0 0.0
        %3015 = vmatpush1.msra.mxu0 0.0
        %3016 = vmatprep.subr.mxu0 0.0
        %3017 = vmatpush1.msra.mxu0 0.0
        %3018 = vmatprep.subr.mxu0 0.0
        %3019 = vmatpush1.msra.mxu0 0.0
        %3020 = vmatprep.subr.mxu0 0.0
        %3021 = vmatpush1.msra.mxu0 0.0
        %3022 = vmatprep.subr.mxu0 0.0
        %3023 = vmatpush1.msra.mxu0 0.0
        %3024 = vmatprep.subr.mxu0 0.0
        %3025 = vmatpush1.msra.mxu0 0.0
        %3026 = vmatprep.subr.mxu0 0.0
        %3027 = vmatpush1.msra.mxu0 0.0
        %3028 = vmatprep.subr.mxu0 0.0
        %3029 = vmatpush1.msra.mxu0 0.0
        %3030 = vmatprep.subr.mxu0 0.0
        %3031 = vmatpush1.msra.mxu0 %v2995
        %3032 = vmatprep.subr.mxu0 0.0
        %3033 = vmatpush2.msra.mxu0 0.0
        %3034 = vmatprep.subr.mxu0 0.0
        %3035 = vmatpush2.msra.mxu0 0.0
        %3036 = vmatprep.subr.mxu0 0.0
        %3037 = vmatpush2.msra.mxu0 0.0
        %3038 = vmatprep.subr.mxu0 0.0
        %3039 = vmatpush2.msra.mxu0 0.0
        %3040 = vmatprep.subr.mxu0 0.0
        %3041 = vmatpush2.msra.mxu0 0.0
        %3042 = vmatprep.subr.mxu0 0.0
        %3043 = vmatpush2.msra.mxu0 0.0
        %3044 = vmatprep.subr.mxu0 0.0
        %3045 = vmatpush2.msra.mxu0 0.0
        %3046 = vmatprep.subr.mxu0 0.0
        %3047 = vmatpush2.msra.mxu0 0.0
        %3048 = vmatprep.subr.mxu0 0.0
        %3049 = vmatpush2.msra.mxu0 0.0
        %3050 = vmatprep.subr.mxu0 0.0
        %3051 = vmatpush2.msra.mxu0 0.0
        %3052 = vmatprep.subr.mxu0 0.0
        %3053 = vmatpush2.msra.mxu0 0.0
        %3054 = vmatprep.subr.mxu0 0.0
        %3055 = vmatpush2.msra.mxu0 0.0
        %3056 = vmatprep.subr.mxu0 0.0
        %3057 = vmatpush2.msra.mxu0 0.0
        %3058 = vmatprep.subr.mxu0 0.0
        %3059 = vmatpush2.msra.mxu0 0.0
        %3060 = vmatprep.subr.mxu0 0.0
        %3061 = vmatpush2.msra.mxu0 0.0
        %3062 = vmatprep.subr.mxu0 0.0
        %3063 = vmatpush2.msra.mxu0 0.0
        %3064 = vmatprep.mubr.f32.mxu0 0.0
        %3065 = vmatmul.mubr.f32.gmra.mxu0 %v2998
        %v3066 = vpop.f32.mrf.mxu0
        %v3067 = vadd.f32 0.0, %v3066
        %v3068 = vpop.f32.mrf.mxu0
        %3069 = vdwg.mxu0
        %3074 = vrot.lane.b32.xlu0 %v2839, 24
        %v3075 = vpop.permute.xlu0 %3074
        %3076 = vrot.lane.b32.xlu0 %v2915, 24
        %v3077 = vpop.permute.xlu0 %3076
        %3078 = vrot.lane.b32.xlu0 %v2991, 24
        %v3079 = vpop.permute.xlu0 %3078
        %3080 = vrot.lane.b32.xlu0 %v3067, 24
        %v3081 = vpop.permute.xlu0 %3080
        %vm3086 = vcmask 261312
        %3087 = vst.msk [vmem:[#allocation2] sm:$0xff] %vm3086, %v3075
        %3088 = vst.msk [vmem:[#allocation2 + $0x8] sm:$0xff] %vm3086, %v3077
        %3089 = vst.msk [vmem:[#allocation2 + $0x10] sm:$0xff] %vm3086, %v3079
        %3090 = vst.msk [vmem:[#allocation2 + $0x18] sm:$0xff] %vm3086, %v3081
        %v3091 = vld [vmem:[#allocation2] sm:$0xff]
        %v3092 = vld [vmem:[#allocation2 + $0x8] sm:$0xff]
        %v3093 = vld [vmem:[#allocation2 + $0x10] sm:$0xff]
        %v3094 = vld [vmem:[#allocation2 + $0x18] sm:$0xff]
        %v3095 = vadd.f32 %v3091, %v258
        %v3096 = vadd.f32 %v3092, %v259
        %v3097 = vadd.f32 %v3093, %v260
        %v3098 = vadd.f32 %v3094, %v261
        %v3099 = vsel %vm273, %v3095, 0.0
        %3100 = vadd.xlane.f32.xlu0 %v3099
        %v3101 = vpop.xlane.xlu0 %3100
        %v3102 = vsel %vm273, %v3096, 0.0
        %3103 = vadd.xlane.f32.xlu0 %v3102
        %v3104 = vpop.xlane.xlu0 %3103
        %v3105 = vsel %vm273, %v3097, 0.0
        %3106 = vadd.xlane.f32.xlu0 %v3105
        %v3107 = vpop.xlane.xlu0 %3106
        %v3108 = vsel %vm273, %v3098, 0.0
        %3109 = vadd.xlane.f32.xlu0 %v3108
        %v3110 = vpop.xlane.xlu0 %3109
        %v3111 = vrcp.pop 32.0
        %v3112 = vmul.f32 %v3101, %v3111
        %v3113 = vmul.f32 %v3104, %v3111
        %v3114 = vmul.f32 %v3107, %v3111
        %v3115 = vmul.f32 %v3110, %v3111
        %v3116 = vsub.f32 %v3095, %v3112
        %v3117 = vsub.f32 %v3096, %v3113
        %v3118 = vsub.f32 %v3097, %v3114
        %v3119 = vsub.f32 %v3098, %v3115
        %v3120 = vmul.f32 %v3116, %v3116
        %v3121 = vmul.f32 %v3117, %v3117
        %v3122 = vmul.f32 %v3118, %v3118
        %v3123 = vmul.f32 %v3119, %v3119
        %v3124 = vsel %vm273, %v3120, 0.0
        %3125 = vadd.xlane.f32.xlu0 %v3124
        %v3126 = vpop.xlane.xlu0 %3125
        %v3127 = vsel %vm273, %v3121, 0.0
        %3128 = vadd.xlane.f32.xlu0 %v3127
        %v3129 = vpop.xlane.xlu0 %3128
        %v3130 = vsel %vm273, %v3122, 0.0
        %3131 = vadd.xlane.f32.xlu0 %v3130
        %v3132 = vpop.xlane.xlu0 %3131
        %v3133 = vsel %vm273, %v3123, 0.0
        %3134 = vadd.xlane.f32.xlu0 %v3133
        %v3135 = vpop.xlane.xlu0 %3134
        %v3136 = vmul.f32 %v3126, %v3111
        %v3137 = vmul.f32 %v3129, %v3111
        %v3138 = vmul.f32 %v3132, %v3111
        %v3139 = vmul.f32 %v3135, %v3111
        %v3140 = vadd.f32 %v3136, 1e-05
        %v3141 = vadd.f32 %v3137, 1e-05
        %v3142 = vadd.f32 %v3138, 1e-05
        %v3143 = vadd.f32 %v3139, 1e-05
        %v3144 = vrsqrt.pop %v3140
        %v3145 = vrsqrt.pop %v3141
        %v3146 = vrsqrt.pop %v3142
        %v3147 = vrsqrt.pop %v3143
        %v3148 = vmul.f32 %v3116, %v3144
        %v3149 = vmul.f32 %v3117, %v3145
        %v3150 = vmul.f32 %v3118, %v3146
        %v3151 = vmul.f32 %v3119, %v3147
        %v3152 = vld [vmem:[%s3] sm:$0x1]
        %v3154 = vlaneseq
        %v3155 = vshrl.u32 %v3154, 7
        %v3156 = vsub.s32 0, %v3155
        %v3157 = vrot.slane %v3152, %v3156
        %v3159 = vmul.f32 %v3148, %v3157
        %v3160 = vmul.f32 %v3149, %v3157
        %v3161 = vmul.f32 %v3150, %v3157
        %v3162 = vmul.f32 %v3151, %v3157
        %v3163 = vld [vmem:[%s4] sm:$0x1]
        %v3165 = vlaneseq
        %v3166 = vshrl.u32 %v3165, 7
        %v3167 = vsub.s32 0, %v3166
        %v3168 = vrot.slane %v3163, %v3167
        %v3170 = vadd.f32 %v3159, %v3168
        %v3171 = vadd.f32 %v3160, %v3168
        %v3172 = vadd.f32 %v3161, %v3168
        %v3173 = vadd.f32 %v3162, %v3168
        %3174 = vst.msk [vmem:[%s257] sm:$0xff] %vm273, %v3170
        %3175 = vst.msk [vmem:[%s257 + $0x8] sm:$0xff] %vm273, %v3171
        %3176 = vst.msk [vmem:[%s257 + $0x10] sm:$0xff] %vm273, %v3172
        %3177 = vst.msk [vmem:[%s257 + $0x18] sm:$0xff] %vm273, %v3173
        %s3178 = sand.u32 %s141, 1
        %s3179 = scalar_lea.sflag [#allocation5], %s3178
        %s3180 = sand.u32 %s141, 1
        %s3181 = smul.addr %s3180, 32
        %s3182 = scalar_lea.vmem [#allocation8], %s3181
        // Predicated region
        $region49: #{tpu_custom_call.1} parent=39 // pred_check
          %p3183 = pneg %p151
        $region50: #{tpu_custom_call.1} parent=39 // pred_check_branch
          %3185 = sbr.rel (%p3183) target = $region52
        $region51: #{tpu_custom_call.1} parent=39 // pred_region
          %s3187 = ssub.s32 512, 512
          %3188 = vsyncadd %s3179, %s3187
          %s3189 = smul.addr %s23, 4
          %s3190 = smul.addr %s3189, 128
          %s3191 = scalar_lea.hbm %s5, %s3190
          %s3192 = sshll.u32 %s3182, 4
          %s3193 = int_to_ptr.vmem [resolvable:$true] %s3192
          %3198 = dma.vmem_to_hbm [thread:$0]  %s3193, 512, %s3191, %s3179, 128, 128, 8
        $region52: #{tpu_custom_call.1} parent=39 // pred_fallthru
          _
      $region40: #{tpu_custom_call.1} parent=5 // pred_fallthru
        _
      %p3199 = scmp.le.s32.totalorder 2, %s18
      // Predicated region
      $region53: #{tpu_custom_call.1} parent=5 // pred_check
        %p3200 = pneg %p3199
      $region54: #{tpu_custom_call.1} parent=5 // pred_check_branch
        %3202 = sbr.rel (%p3200) target = $region56
      $region55: #{tpu_custom_call.1} parent=5 // pred_region
        %s3203 = ssub.s32 %s18, 2
        // Predicated region
        $region57: #{tpu_custom_call.1} parent=55 // pred_check
          %p3204 = pneg %p157
        $region58: #{tpu_custom_call.1} parent=55 // pred_check_branch
          %3206 = sbr.rel (%p3204) target = $region60
        $region59: #{tpu_custom_call.1} parent=55 // pred_region
          %s3207 = sand.u32 %s142, 1
          %s3208 = scalar_lea.sflag [#allocation5], %s3207
          %s3209 = sand.u32 %s142, 1
          %s3210 = smul.addr %s3209, 32
          %s3211 = scalar_lea.vmem [#allocation8], %s3210
          %3212 = dma.done %s3208, 512
        $region60: #{tpu_custom_call.1} parent=55 // pred_fallthru
          _
      $region56: #{tpu_custom_call.1} parent=5 // pred_fallthru
        _
    $region6: #{tpu_custom_call.1} parent=1 // loop_footer
      %s22 = sadd.s32 1, %s18
    $region7: #{tpu_custom_call.1} parent=1 // loop_footer_branch
      %17 = sbr.rel target = $region3
    $region8: #{tpu_custom_call.1} parent=1 // loop_exit
      _
    %3213 = vsyncpa [#allocation4], 1
    %s3214 = scalar_lea.sflag [#allocation4], 1
    %3215 = vsyncpa %s3214, 1
    %3216 = vsyncpa [#allocation7], 1
    %3217 = vsyncpa [#allocation5], 1
    %s3218 = scalar_lea.sflag [#allocation5], 1
    %3219 = vsyncpa %s3218, 1

</llo_original>
